<compile_context>
chip_gen: v7x
topology: tpu7x:2x2x1
jax: 0.10.0
libtpu: 0.0.40
codegen_flags: <defaults>
</compile_context>

<pallas_src>
import functools

import jax
import jax.numpy as jnp
from jax.experimental import pallas as pl
from jax.experimental.pallas import tpu as pltpu

P = 128            # lane tile: every feature dim is zero-padded to one 128-lane tile
G = 3 * P          # GRU gates r|z|n, one 128-lane tile per gate
GOFF = 8           # first weight row in the GRU slab (rows 0..7 hold the gate biases)


# ----------------------------- fused Pallas kernel -----------------------------

def _fused_encoder_kernel(xt_ref, wslab_ref, gslab_ref, bslab_ref,
                          out_ref, heads_ref, gi_scr, gru_scr,
                          *, L, B, n_before, n_after):
    """Whole RNNEncoder forward (minus the reparameterisation noise) in one kernel.

    xt_ref   : [L*B, 1]        seq-major scalar input (row = t*B + b)
    wslab_ref: [nd*128, 128]   non-GRU weights, one zero-padded [128,128] block each
                               (order: pte, se, before..., after..., mu, lv)
    gslab_ref: [8+2*128, 384]  rows 0/1 = b_ih/b_hh, rows 8.. = w_ih, w_hh
                               (gate g lives in lanes [g*128, g*128+H))
    bslab_ref: [nb, 128]       rows: w_ve, b_ve, b_pte, b_se, b_before..., b_after...,
                               b_mu, b_lv (each zero-padded to 128 lanes)
    out_ref  : [(L+1)*B, 128]  rows [0,L*B) = gru outputs, rows [L*B, (L+1)*B) = prior h
    heads_ref: [4B, 128]       rows: prior_mu | latent_mu | prior_lv | latent_lv
    """
    LB = L * B

    # ---- static slab offsets -------------------------------------------------
    i_pte, i_se = 0, 1
    i_before = [2 + j for j in range(n_before)]
    i_after = [2 + n_before + j for j in range(n_after)]
    i_mu = 2 + n_before + n_after
    i_lv = i_mu + 1

    r_wve, r_bve, r_bpte, r_bse = 0, 1, 2, 3
    r_before = [4 + j for j in range(n_before)]
    r_after = [4 + n_before + j for j in range(n_after)]
    r_bmu = 4 + n_before + n_after
    r_blv = r_bmu + 1

    def w_block(i):                       # [128, 128] weight view, 128-row aligned
        return wslab_ref[pl.ds(i * P, P), :]

    def b_row(r):                         # [1, 128] bias/weight row
        return bslab_ref[pl.ds(r, 1), :]

    def dense(x, wi, bi, relu=True):
        y = jnp.dot(x, w_block(wi), preferred_element_type=jnp.float32) + b_row(bi)
        return jnp.maximum(y, 0.0) if relu else y

    # ---- value_expand: Linear(1, He) + relu over the whole [2S*B, 1] sequence ----
    # (K == 1 contraction is a broadcasted outer product -> pure VPU)
    states = jnp.maximum(xt_ref[...] * b_row(r_wve) + b_row(r_bve), 0.0)   # [LB, P]

    # ---- prior path: last-timestep state sliced straight out of `states` ----
    last_state = states[(L - 1) * B:, :]                                   # [B, P]
    prior_hidden = dense(last_state, i_pte, r_bpte)                        # [B, P]

    # ---- pre-GRU encoder over the whole sequence as one block ----
    h = dense(states, i_se, r_bse)
    for j in range(n_before):
        h = dense(h, i_before[j], r_before[j])

    # ---- hoisted input->hidden gate projection (one matmul; gates lane-tiled) ----
    b_ih = gslab_ref[pl.ds(0, 1), :]                                       # [1, 3P]
    b_hh = gslab_ref[pl.ds(1, 1), :]                                       # [1, 3P]
    w_ih = gslab_ref[pl.ds(GOFF, P), :]                                    # [P, 3P]
    gi_scr[...] = jnp.dot(h, w_ih, preferred_element_type=jnp.float32) + b_ih

    w_hh = gslab_ref[pl.ds(GOFF + P, P), :]                                # [P, 3P]

    # combined slab layout: rows [0, LB) = gru outputs, rows [LB, LB+B) = prior hidden
    gru_scr[pl.ds(LB, B), :] = prior_hidden

    # ---- GRU recurrence (fully unrolled; every gate slice is a full lane tile) ----
    # TODO(synk): for long L drive the MXU via pltpu.matmul_push_rhs(w_hh) once +
    # matmul_acc_lhs per step, and switch to lax.fori_loop(..., unroll=2-4); at
    # production scale also cast the hoisted gi matmul operands to bf16 (keep
    # h_t / sigmoid / tanh in f32, esp. on v5e).
    h_t = prior_hidden
    for t in range(L):
        gi = gi_scr[pl.ds(t * B, B), :]                                    # [B, 3P]
        gh = jnp.dot(h_t, w_hh, preferred_element_type=jnp.float32) + b_hh
        r = jax.nn.sigmoid(gi[:, 0:P] + gh[:, 0:P])
        z = jax.nn.sigmoid(gi[:, P:2 * P] + gh[:, P:2 * P])
        n = jnp.tanh(gi[:, 2 * P:3 * P] + r * gh[:, 2 * P:3 * P])          # b_hn inside gh
        h_t = (1.0 - z) * n + z * h_t
        gru_scr[pl.ds(t * B, B), :] = h_t                                  # VMEM scratch only

    # ---- ONE lane/sublane-dense bulk store of [gru_out ; prior_hidden] ----
    out_ref[...] = gru_scr[...]

    # ---- batched epilogue: fc_after_gru over [LB + B, P] in one pass ----
    g = gru_scr[...]
    for j in range(n_after):
        g = dense(g, i_after[j], r_after[j])
    ph = g[LB:, :]                                                         # prior features [B, P]

    # time-mean of the gru part (short static accumulation, off the critical path)
    acc = g[0:B, :]
    for t in range(1, L):
        acc = acc + g[t * B:(t + 1) * B, :]
    gmean = acc * jnp.float32(1.0 / L)                                     # [B, P]

    # stacked mu / logvar heads: one matmul each on [2B, P]
    hfeat = jnp.concatenate([ph, gmean], axis=0)                           # [2B, P]
    mu_all = dense(hfeat, i_mu, r_bmu, relu=False)                         # [2B, P]
    lv_all = dense(hfeat, i_lv, r_blv, relu=False)                         # [2B, P]
    heads_ref[...] = jnp.concatenate([mu_all, lv_all], axis=0)             # [4B, P]


# ------------------------- parameters, packing & forward ---------------------------

def init_params(key, He=32, Hg=32, Se=32, dL=8,
                layers_before=(32,), layers_after=(32,)):
    """Deterministic synthetic parameters (x @ W + b convention)."""
    def lin(k, fan_in, fan_out):
        kw, kb = jax.random.split(k)
        w = jax.random.normal(kw, (fan_in, fan_out), jnp.float32) * 0.1
        b = jax.random.normal(kb, (fan_out,), jnp.float32) * 0.01
        return w, b

    keys = jax.random.split(key, 16)
    params = {}
    params["ve"] = lin(keys[0], 1, He)        # value_expand: Linear(1, He)
    params["pte"] = lin(keys[1], He, Hg)      # prior_time_encoder
    params["se"] = lin(keys[2], He, Se)       # state_encoder

    d = Se
    params["before"] = []
    for j, n in enumerate(layers_before):
        params["before"].append(lin(keys[3 + j], d, n))
        d = n
    gru_in = d

    # GRU weights packed as [*, 3H] with gate order (r | z | n); module zeroes biases.
    kgru = jax.random.split(keys[7], 6)
    w_ih = jnp.concatenate(
        [jax.random.normal(kgru[i], (gru_in, Hg), jnp.float32) * 0.1 for i in range(3)],
        axis=1)
    w_hh = jnp.concatenate(
        [jax.random.normal(kgru[3 + i], (Hg, Hg), jnp.float32) * 0.1 for i in range(3)],
        axis=1)
    b_ih = jnp.zeros((3 * Hg,), jnp.float32)
    b_hh = jnp.zeros((3 * Hg,), jnp.float32)
    params["gru"] = (w_ih, w_hh, b_ih, b_hh)

    d = Hg
    params["after"] = []
    for j, n in enumerate(layers_after):
        params["after"].append(lin(keys[8 + j], d, n))
        d = n
    params["mu"] = lin(keys[12], d, dL)
    params["lv"] = lin(keys[13], d, dL)
    return params


def pack_params(params):
    """Pack all weights/biases into three DMA-friendly slabs (do this ONCE, not per call)."""
    f32 = jnp.float32

    def pad_block(w):                       # [K, N] -> [P, P]
        K, N = w.shape
        assert K <= P and N <= P, "feature dims must fit one 128-lane tile"
        return jnp.zeros((P, P), f32).at[:K, :N].set(w.astype(f32))

    def pad_row(v):                         # [N] -> [1, P]
        v = jnp.asarray(v, f32).reshape(-1)
        assert v.shape[0] <= P
        return jnp.zeros((1, P), f32).at[0, :v.shape[0]].set(v)

    dense_ws = ([params["pte"][0], params["se"][0]]
                + [w for w, _ in params["before"]]
                + [w for w, _ in params["after"]]
                + [params["mu"][0], params["lv"][0]])
    wslab = jnp.concatenate([pad_block(w) for w in dense_ws], axis=0)      # [nd*P, P]

    bias_rows = ([params["ve"][0].reshape(-1), params["ve"][1],
                  params["pte"][1], params["se"][1]]
                 + [b for _, b in params["before"]]
                 + [b for _, b in params["after"]]
                 + [params["mu"][1], params["lv"][1]])
    bslab = jnp.concatenate([pad_row(v) for v in bias_rows], axis=0)       # [nb, P]

    w_ih, w_hh, b_ih, b_hh = params["gru"]
    I = w_ih.shape[0]
    H = w_hh.shape[0]
    assert w_ih.shape[1] == 3 * H and I <= P and H <= P

    def pad_gate_w(w, K):                   # [K, 3H] -> [P, 3P] (gate g -> lanes g*P..)
        out = jnp.zeros((P, G), f32)
        for g in range(3):
            out = out.at[:K, g * P:g * P + H].set(w[:, g * H:(g + 1) * H].astype(f32))
        return out

    def pad_gate_b(b):                      # [3H] -> [1, 3P]
        out = jnp.zeros((1, G), f32)
        for g in range(3):
            out = out.at[0, g * P:g * P + H].set(b[g * H:(g + 1) * H].astype(f32))
        return out

    gslab = jnp.concatenate(
        [pad_gate_b(b_ih), pad_gate_b(b_hh), jnp.zeros((GOFF - 2, G), f32),
         pad_gate_w(w_ih, I), pad_gate_w(w_hh, H)], axis=0)                # [GOFF+2P, 3P]

    slabs = dict(wslab=wslab, gslab=gslab, bslab=bslab)
    meta = dict(Hg=H, dL=params["mu"][0].shape[1],
                n_before=len(params["before"]), n_after=len(params["after"]))
    return slabs, meta


def rnn_encoder_forward(slabs, X, T, key, *, Hg, dL, n_before, n_after, sample=True):
    B, S = X.shape
    L = 2 * S

    # XT = cat(X, T, dim=1).unsqueeze(-1); sequence-major rows (row = t*B + b).
    XT = jnp.concatenate([X, T], axis=1)                    # [B, 2S]
    xt = XT.T.reshape(L * B, 1).astype(jnp.float32)         # [2S*B, 1]

    out_rows = (L + 1) * B
    out_shapes = (
        jax.ShapeDtypeStruct((out_rows, P), jnp.float32),   # [gru_out ; prior_hidden]
        jax.ShapeDtypeStruct((4 * B, P), jnp.float32),      # [p_mu ; l_mu ; p_lv ; l_lv]
    )

    def full_spec(shape):
        return pl.BlockSpec(shape, lambda i, nd=len(shape): (0,) * nd)

    kernel = functools.partial(_fused_encoder_kernel, L=L, B=B,
                               n_before=n_before, n_after=n_after)
    inputs = (xt, slabs["wslab"], slabs["gslab"], slabs["bslab"])

    # TODO(synk): for larger B (or when vmapping over sequences) add a leading
    # "parallel" grid axis over batch chunks so v7x's second TensorCore is used,
    # and re-derive the gi/gru scratch budget for v7x's 64 MiB VMEM (bf16 gi +
    # pltpu.emit_pipeline over time when L*B*H grows).
    out_flat, heads = pl.pallas_call(
        kernel,
        out_shape=out_shapes,
        grid=(1,),
        in_specs=[full_spec(a.shape) for a in inputs],
        out_specs=tuple(full_spec(s.shape) for s in out_shapes),
        scratch_shapes=[pltpu.VMEM((L * B, G), jnp.float32),       # hoisted input gates
                        pltpu.VMEM((out_rows, P), jnp.float32)],   # gru outs + prior hidden
        compiler_params=pltpu.CompilerParams(
            dimension_semantics=("arbitrary",)),
    )(*inputs)

    # Lane-dense kernel outputs -> module-shaped results (cheap wrapper slices).
    gru_out = out_flat[:L * B, :Hg].reshape(L, B, Hg)
    prior_hidden = out_flat[L * B:, :Hg]
    output = jnp.concatenate([prior_hidden[None], gru_out], axis=0)   # [1+2S, B, Hg]

    prior_mean = heads[0:B, :dL]
    latent_mean = heads[B:2 * B, :dL]
    prior_logvar = heads[2 * B:3 * B, :dL]
    latent_logvar = heads[3 * B:4 * B, :dL]

    # Reparameterise (torch.randn_like -> jax.random.normal; elementwise glue).
    if sample:
        k1, k2 = jax.random.split(key)
        prior_sample = prior_mean + jnp.exp(0.5 * prior_logvar) * jax.random.normal(
            k1, prior_mean.shape, jnp.float32)
        latent_sample = latent_mean + jnp.exp(0.5 * latent_logvar) * jax.random.normal(
            k2, latent_mean.shape, jnp.float32)
    else:
        prior_sample, latent_sample = prior_mean, latent_mean

    # cat prior and posterior along the leading (seq) dim -> [2, B, dL]
    latent_sample = jnp.stack([prior_sample, latent_sample], axis=0)
    latent_mean = jnp.stack([prior_mean, latent_mean], axis=0)
    latent_logvar = jnp.stack([prior_logvar, latent_logvar], axis=0)
    # latent_mean.shape[0] == 2, so no final squeeze (matches the torch branch).
    return latent_sample, latent_mean, latent_logvar, output


if __name__ == "__main__":
    key = jax.random.PRNGKey(0)
    kp, kx, ks = jax.random.split(key, 3)

    B, S = 2, 8
    params = init_params(kp, He=32, Hg=32, Se=32, dL=8,
                         layers_before=(32,), layers_after=(32,))
    slabs, meta = pack_params(params)

    X = jax.random.normal(kx, (B, S), jnp.float32)
    T = jnp.tile(jnp.linspace(0.0, 1.0, S, dtype=jnp.float32)[None, :], (B, 1))

    fwd = jax.jit(functools.partial(rnn_encoder_forward, sample=True, **meta))
    outs = jax.block_until_ready(fwd(slabs, X, T, ks))

    latent_sample, latent_mean, latent_logvar, output = outs
    assert latent_sample.shape == (2, B, 8)
    assert latent_mean.shape == (2, B, 8)
    assert latent_logvar.shape == (2, B, 8)
    assert output.shape == (1 + 2 * S, B, 32)
    assert all(bool(jnp.all(jnp.isfinite(o))) for o in outs)
    print("KERNEL_OK")
</pallas_src>

<mosaic_0001>
module attributes {stable_mosaic.version = 11 : i64} {
  func.func @_fused_encoder_kernel(%arg0: i32, %arg1: memref<32x1xf32, #tpu.memory_space<vmem>>, %arg2: memref<768x128xf32, #tpu.memory_space<vmem>>, %arg3: memref<264x384xf32, #tpu.memory_space<vmem>>, %arg4: memref<8x128xf32, #tpu.memory_space<vmem>>, %arg5: memref<34x128xf32, #tpu.memory_space<vmem>>, %arg6: memref<8x128xf32, #tpu.memory_space<vmem>>, %arg7: memref<32x384xf32, #tpu.memory_space<vmem>>, %arg8: memref<34x128xf32, #tpu.memory_space<vmem>>) attributes {dimension_semantics = [#tpu.dimension_semantics<arbitrary>], iteration_bounds = array<i64: 1>, scalar_prefetch = 0 : i64, scratch_operands = 2 : i64, tpu.core_type = #tpu.core_type<tc>, window_params = [{pipeline_mode = #tpu.pipeline_mode<synchronous>, transform_indices = @transform_0, window_bounds = array<i64: 32, 1>}, {pipeline_mode = #tpu.pipeline_mode<synchronous>, transform_indices = @transform_1, window_bounds = array<i64: 768, 128>}, {pipeline_mode = #tpu.pipeline_mode<synchronous>, transform_indices = @transform_2, window_bounds = array<i64: 264, 384>}, {pipeline_mode = #tpu.pipeline_mode<synchronous>, transform_indices = @transform_3, window_bounds = array<i64: 8, 128>}, {pipeline_mode = #tpu.pipeline_mode<synchronous>, transform_indices = @transform_4, window_bounds = array<i64: 34, 128>}, {pipeline_mode = #tpu.pipeline_mode<synchronous>, transform_indices = @transform_5, window_bounds = array<i64: 8, 128>}]} {
    %c0 = arith.constant 0 : index
    %c0_0 = arith.constant 0 : index
    %0 = vector.load %arg1[%c0, %c0_0] : memref<32x1xf32, #tpu.memory_space<vmem>>, vector<32x1xf32>
    %c0_1 = arith.constant 0 : index
    %c0_2 = arith.constant 0 : index
    %1 = vector.load %arg4[%c0_1, %c0_2] : memref<8x128xf32, #tpu.memory_space<vmem>>, vector<1x128xf32>
    %2 = vector.broadcast %0 : vector<32x1xf32> to vector<32x128xf32>
    %3 = vector.broadcast %1 : vector<1x128xf32> to vector<32x128xf32>
    %4 = arith.mulf %2, %3 : vector<32x128xf32>
    %c1 = arith.constant 1 : index
    %c0_3 = arith.constant 0 : index
    %5 = vector.load %arg4[%c1, %c0_3] : memref<8x128xf32, #tpu.memory_space<vmem>>, vector<1x128xf32>
    %6 = vector.broadcast %5 : vector<1x128xf32> to vector<32x128xf32>
    %7 = arith.addf %4, %6 : vector<32x128xf32>
    %cst = arith.constant 0.000000e+00 : f32
    %8 = vector.broadcast %cst : f32 to vector<32x128xf32>
    %9 = arith.maximumf %7, %8 : vector<32x128xf32>
    %10 = vector.extract_strided_slice %9 {offsets = [30, 0], sizes = [2, 128], strides = [1, 1]} : vector<32x128xf32> to vector<2x128xf32>
    %c0_4 = arith.constant 0 : index
    %c0_5 = arith.constant 0 : index
    %11 = vector.load %arg2[%c0_4, %c0_5] : memref<768x128xf32, #tpu.memory_space<vmem>>, vector<128x128xf32>
    %cst_6 = arith.constant dense<0.000000e+00> : vector<2x128xf32>
    %12 = tpu.matmul %10, %11, %cst_6 {dimension_numbers = #tpu.dot_dimension_numbers<[1], [0], [0], [1], [0, 0, 1, 1], [], []>} : vector<2x128xf32>, vector<128x128xf32>, vector<2x128xf32> -> vector<2x128xf32>
    %c2 = arith.constant 2 : index
    %c0_7 = arith.constant 0 : index
    %13 = vector.load %arg4[%c2, %c0_7] : memref<8x128xf32, #tpu.memory_space<vmem>>, vector<1x128xf32>
    %14 = vector.broadcast %13 : vector<1x128xf32> to vector<2x128xf32>
    %15 = arith.addf %12, %14 : vector<2x128xf32>
    %cst_8 = arith.constant 0.000000e+00 : f32
    %16 = vector.broadcast %cst_8 : f32 to vector<2x128xf32>
    %17 = arith.maximumf %15, %16 : vector<2x128xf32>
    %c128 = arith.constant 128 : index
    %c0_9 = arith.constant 0 : index
    %18 = vector.load %arg2[%c128, %c0_9] : memref<768x128xf32, #tpu.memory_space<vmem>>, vector<128x128xf32>
    %cst_10 = arith.constant dense<0.000000e+00> : vector<32x128xf32>
    %19 = tpu.matmul %9, %18, %cst_10 {dimension_numbers = #tpu.dot_dimension_numbers<[1], [0], [0], [1], [0, 0, 1, 1], [], []>} : vector<32x128xf32>, vector<128x128xf32>, vector<32x128xf32> -> vector<32x128xf32>
    %c3 = arith.constant 3 : index
    %c0_11 = arith.constant 0 : index
    %20 = vector.load %arg4[%c3, %c0_11] : memref<8x128xf32, #tpu.memory_space<vmem>>, vector<1x128xf32>
    %21 = vector.broadcast %20 : vector<1x128xf32> to vector<32x128xf32>
    %22 = arith.addf %19, %21 : vector<32x128xf32>
    %cst_12 = arith.constant 0.000000e+00 : f32
    %23 = vector.broadcast %cst_12 : f32 to vector<32x128xf32>
    %24 = arith.maximumf %22, %23 : vector<32x128xf32>
    %c256 = arith.constant 256 : index
    %c0_13 = arith.constant 0 : index
    %25 = vector.load %arg2[%c256, %c0_13] : memref<768x128xf32, #tpu.memory_space<vmem>>, vector<128x128xf32>
    %cst_14 = arith.constant dense<0.000000e+00> : vector<32x128xf32>
    %26 = tpu.matmul %24, %25, %cst_14 {dimension_numbers = #tpu.dot_dimension_numbers<[1], [0], [0], [1], [0, 0, 1, 1], [], []>} : vector<32x128xf32>, vector<128x128xf32>, vector<32x128xf32> -> vector<32x128xf32>
    %c4 = arith.constant 4 : index
    %c0_15 = arith.constant 0 : index
    %27 = vector.load %arg4[%c4, %c0_15] : memref<8x128xf32, #tpu.memory_space<vmem>>, vector<1x128xf32>
    %28 = vector.broadcast %27 : vector<1x128xf32> to vector<32x128xf32>
    %29 = arith.addf %26, %28 : vector<32x128xf32>
    %cst_16 = arith.constant 0.000000e+00 : f32
    %30 = vector.broadcast %cst_16 : f32 to vector<32x128xf32>
    %31 = arith.maximumf %29, %30 : vector<32x128xf32>
    %c0_17 = arith.constant 0 : index
    %c0_18 = arith.constant 0 : index
    %32 = vector.load %arg3[%c0_17, %c0_18] : memref<264x384xf32, #tpu.memory_space<vmem>>, vector<1x384xf32>
    %c1_19 = arith.constant 1 : index
    %c0_20 = arith.constant 0 : index
    %33 = vector.load %arg3[%c1_19, %c0_20] : memref<264x384xf32, #tpu.memory_space<vmem>>, vector<1x384xf32>
    %c8 = arith.constant 8 : index
    %c0_21 = arith.constant 0 : index
    %34 = vector.load %arg3[%c8, %c0_21] : memref<264x384xf32, #tpu.memory_space<vmem>>, vector<128x384xf32>
    %cst_22 = arith.constant dense<0.000000e+00> : vector<32x384xf32>
    %35 = tpu.matmul %31, %34, %cst_22 {dimension_numbers = #tpu.dot_dimension_numbers<[1], [0], [0], [1], [0, 0, 1, 1], [], []>} : vector<32x128xf32>, vector<128x384xf32>, vector<32x384xf32> -> vector<32x384xf32>
    %36 = vector.broadcast %32 : vector<1x384xf32> to vector<32x384xf32>
    %37 = arith.addf %35, %36 : vector<32x384xf32>
    %c0_23 = arith.constant 0 : index
    %c0_24 = arith.constant 0 : index
    %38 = vector.load %arg7[%c0_23, %c0_24] : memref<32x384xf32, #tpu.memory_space<vmem>>, vector<32x384xf32>
    tpu.vector_store %arg7[%c0_23, %c0_24], %37 {strides = array<i32>} : memref<32x384xf32, #tpu.memory_space<vmem>>, vector<32x384xf32>,
    %c136 = arith.constant 136 : index
    %c0_25 = arith.constant 0 : index
    %39 = vector.load %arg3[%c136, %c0_25] : memref<264x384xf32, #tpu.memory_space<vmem>>, vector<128x384xf32>
    %c32 = arith.constant 32 : index
    %c0_26 = arith.constant 0 : index
    %40 = vector.load %arg8[%c32, %c0_26] : memref<34x128xf32, #tpu.memory_space<vmem>>, vector<2x128xf32>
    tpu.vector_store %arg8[%c32, %c0_26], %17 {strides = array<i32>} : memref<34x128xf32, #tpu.memory_space<vmem>>, vector<2x128xf32>,
    %c0_27 = arith.constant 0 : index
    %c0_28 = arith.constant 0 : index
    %41 = vector.load %arg7[%c0_27, %c0_28] : memref<32x384xf32, #tpu.memory_space<vmem>>, vector<2x384xf32>
    %cst_29 = arith.constant dense<0.000000e+00> : vector<2x384xf32>
    %42 = tpu.matmul %17, %39, %cst_29 {dimension_numbers = #tpu.dot_dimension_numbers<[1], [0], [0], [1], [0, 0, 1, 1], [], []>} : vector<2x128xf32>, vector<128x384xf32>, vector<2x384xf32> -> vector<2x384xf32>
    %43 = vector.broadcast %33 : vector<1x384xf32> to vector<2x384xf32>
    %44 = arith.addf %42, %43 : vector<2x384xf32>
    %45 = vector.extract_strided_slice %41 {offsets = [0, 0], sizes = [2, 128], strides = [1, 1]} : vector<2x384xf32> to vector<2x128xf32>
    %46 = vector.extract_strided_slice %44 {offsets = [0, 0], sizes = [2, 128], strides = [1, 1]} : vector<2x384xf32> to vector<2x128xf32>
    %47 = arith.addf %45, %46 : vector<2x128xf32>
    %48 = arith.negf %47 : vector<2x128xf32>
    %49 = math.exp %48 : vector<2x128xf32>
    %cst_30 = arith.constant 1.000000e+00 : f32
    %50 = vector.broadcast %cst_30 : f32 to vector<2x128xf32>
    %51 = arith.addf %50, %49 : vector<2x128xf32>
    %52 = arith.divf %50, %51 : vector<2x128xf32>
    %53 = vector.extract_strided_slice %41 {offsets = [0, 128], sizes = [2, 128], strides = [1, 1]} : vector<2x384xf32> to vector<2x128xf32>
    %54 = vector.extract_strided_slice %44 {offsets = [0, 128], sizes = [2, 128], strides = [1, 1]} : vector<2x384xf32> to vector<2x128xf32>
    %55 = arith.addf %53, %54 : vector<2x128xf32>
    %56 = arith.negf %55 : vector<2x128xf32>
    %57 = math.exp %56 : vector<2x128xf32>
    %cst_31 = arith.constant 1.000000e+00 : f32
    %58 = vector.broadcast %cst_31 : f32 to vector<2x128xf32>
    %59 = arith.addf %58, %57 : vector<2x128xf32>
    %60 = arith.divf %58, %59 : vector<2x128xf32>
    %61 = vector.extract_strided_slice %41 {offsets = [0, 256], sizes = [2, 128], strides = [1, 1]} : vector<2x384xf32> to vector<2x128xf32>
    %62 = vector.extract_strided_slice %44 {offsets = [0, 256], sizes = [2, 128], strides = [1, 1]} : vector<2x384xf32> to vector<2x128xf32>
    %63 = arith.mulf %52, %62 : vector<2x128xf32>
    %64 = arith.addf %61, %63 : vector<2x128xf32>
    %65 = math.tanh %64 : vector<2x128xf32>
    %cst_32 = arith.constant 1.000000e+00 : f32
    %66 = vector.broadcast %cst_32 : f32 to vector<2x128xf32>
    %67 = arith.subf %66, %60 : vector<2x128xf32>
    %68 = arith.mulf %67, %65 : vector<2x128xf32>
    %69 = arith.mulf %60, %17 : vector<2x128xf32>
    %70 = arith.addf %68, %69 : vector<2x128xf32>
    %c0_33 = arith.constant 0 : index
    %c0_34 = arith.constant 0 : index
    %71 = vector.load %arg8[%c0_33, %c0_34] : memref<34x128xf32, #tpu.memory_space<vmem>>, vector<2x128xf32>
    tpu.vector_store %arg8[%c0_33, %c0_34], %70 {strides = array<i32>} : memref<34x128xf32, #tpu.memory_space<vmem>>, vector<2x128xf32>,
    %c2_35 = arith.constant 2 : index
    %c0_36 = arith.constant 0 : index
    %72 = vector.load %arg7[%c2_35, %c0_36] : memref<32x384xf32, #tpu.memory_space<vmem>>, vector<2x384xf32>
    %cst_37 = arith.constant dense<0.000000e+00> : vector<2x384xf32>
    %73 = tpu.matmul %70, %39, %cst_37 {dimension_numbers = #tpu.dot_dimension_numbers<[1], [0], [0], [1], [0, 0, 1, 1], [], []>} : vector<2x128xf32>, vector<128x384xf32>, vector<2x384xf32> -> vector<2x384xf32>
    %74 = vector.broadcast %33 : vector<1x384xf32> to vector<2x384xf32>
    %75 = arith.addf %73, %74 : vector<2x384xf32>
    %76 = vector.extract_strided_slice %72 {offsets = [0, 0], sizes = [2, 128], strides = [1, 1]} : vector<2x384xf32> to vector<2x128xf32>
    %77 = vector.extract_strided_slice %75 {offsets = [0, 0], sizes = [2, 128], strides = [1, 1]} : vector<2x384xf32> to vector<2x128xf32>
    %78 = arith.addf %76, %77 : vector<2x128xf32>
    %79 = arith.negf %78 : vector<2x128xf32>
    %80 = math.exp %79 : vector<2x128xf32>
    %cst_38 = arith.constant 1.000000e+00 : f32
    %81 = vector.broadcast %cst_38 : f32 to vector<2x128xf32>
    %82 = arith.addf %81, %80 : vector<2x128xf32>
    %83 = arith.divf %81, %82 : vector<2x128xf32>
    %84 = vector.extract_strided_slice %72 {offsets = [0, 128], sizes = [2, 128], strides = [1, 1]} : vector<2x384xf32> to vector<2x128xf32>
    %85 = vector.extract_strided_slice %75 {offsets = [0, 128], sizes = [2, 128], strides = [1, 1]} : vector<2x384xf32> to vector<2x128xf32>
    %86 = arith.addf %84, %85 : vector<2x128xf32>
    %87 = arith.negf %86 : vector<2x128xf32>
    %88 = math.exp %87 : vector<2x128xf32>
    %cst_39 = arith.constant 1.000000e+00 : f32
    %89 = vector.broadcast %cst_39 : f32 to vector<2x128xf32>
    %90 = arith.addf %89, %88 : vector<2x128xf32>
    %91 = arith.divf %89, %90 : vector<2x128xf32>
    %92 = vector.extract_strided_slice %72 {offsets = [0, 256], sizes = [2, 128], strides = [1, 1]} : vector<2x384xf32> to vector<2x128xf32>
    %93 = vector.extract_strided_slice %75 {offsets = [0, 256], sizes = [2, 128], strides = [1, 1]} : vector<2x384xf32> to vector<2x128xf32>
    %94 = arith.mulf %83, %93 : vector<2x128xf32>
    %95 = arith.addf %92, %94 : vector<2x128xf32>
    %96 = math.tanh %95 : vector<2x128xf32>
    %cst_40 = arith.constant 1.000000e+00 : f32
    %97 = vector.broadcast %cst_40 : f32 to vector<2x128xf32>
    %98 = arith.subf %97, %91 : vector<2x128xf32>
    %99 = arith.mulf %98, %96 : vector<2x128xf32>
    %100 = arith.mulf %91, %70 : vector<2x128xf32>
    %101 = arith.addf %99, %100 : vector<2x128xf32>
    %c2_41 = arith.constant 2 : index
    %c0_42 = arith.constant 0 : index
    %102 = vector.load %arg8[%c2_41, %c0_42] : memref<34x128xf32, #tpu.memory_space<vmem>>, vector<2x128xf32>
    tpu.vector_store %arg8[%c2_41, %c0_42], %101 {strides = array<i32>} : memref<34x128xf32, #tpu.memory_space<vmem>>, vector<2x128xf32>,
    %c4_43 = arith.constant 4 : index
    %c0_44 = arith.constant 0 : index
    %103 = vector.load %arg7[%c4_43, %c0_44] : memref<32x384xf32, #tpu.memory_space<vmem>>, vector<2x384xf32>
    %cst_45 = arith.constant dense<0.000000e+00> : vector<2x384xf32>
    %104 = tpu.matmul %101, %39, %cst_45 {dimension_numbers = #tpu.dot_dimension_numbers<[1], [0], [0], [1], [0, 0, 1, 1], [], []>} : vector<2x128xf32>, vector<128x384xf32>, vector<2x384xf32> -> vector<2x384xf32>
    %105 = vector.broadcast %33 : vector<1x384xf32> to vector<2x384xf32>
    %106 = arith.addf %104, %105 : vector<2x384xf32>
    %107 = vector.extract_strided_slice %103 {offsets = [0, 0], sizes = [2, 128], strides = [1, 1]} : vector<2x384xf32> to vector<2x128xf32>
    %108 = vector.extract_strided_slice %106 {offsets = [0, 0], sizes = [2, 128], strides = [1, 1]} : vector<2x384xf32> to vector<2x128xf32>
    %109 = arith.addf %107, %108 : vector<2x128xf32>
    %110 = arith.negf %109 : vector<2x128xf32>
    %111 = math.exp %110 : vector<2x128xf32>
    %cst_46 = arith.constant 1.000000e+00 : f32
    %112 = vector.broadcast %cst_46 : f32 to vector<2x128xf32>
    %113 = arith.addf %112, %111 : vector<2x128xf32>
    %114 = arith.divf %112, %113 : vector<2x128xf32>
    %115 = vector.extract_strided_slice %103 {offsets = [0, 128], sizes = [2, 128], strides = [1, 1]} : vector<2x384xf32> to vector<2x128xf32>
    %116 = vector.extract_strided_slice %106 {offsets = [0, 128], sizes = [2, 128], strides = [1, 1]} : vector<2x384xf32> to vector<2x128xf32>
    %117 = arith.addf %115, %116 : vector<2x128xf32>
    %118 = arith.negf %117 : vector<2x128xf32>
    %119 = math.exp %118 : vector<2x128xf32>
    %cst_47 = arith.constant 1.000000e+00 : f32
    %120 = vector.broadcast %cst_47 : f32 to vector<2x128xf32>
    %121 = arith.addf %120, %119 : vector<2x128xf32>
    %122 = arith.divf %120, %121 : vector<2x128xf32>
    %123 = vector.extract_strided_slice %103 {offsets = [0, 256], sizes = [2, 128], strides = [1, 1]} : vector<2x384xf32> to vector<2x128xf32>
    %124 = vector.extract_strided_slice %106 {offsets = [0, 256], sizes = [2, 128], strides = [1, 1]} : vector<2x384xf32> to vector<2x128xf32>
    %125 = arith.mulf %114, %124 : vector<2x128xf32>
    %126 = arith.addf %123, %125 : vector<2x128xf32>
    %127 = math.tanh %126 : vector<2x128xf32>
    %cst_48 = arith.constant 1.000000e+00 : f32
    %128 = vector.broadcast %cst_48 : f32 to vector<2x128xf32>
    %129 = arith.subf %128, %122 : vector<2x128xf32>
    %130 = arith.mulf %129, %127 : vector<2x128xf32>
    %131 = arith.mulf %122, %101 : vector<2x128xf32>
    %132 = arith.addf %130, %131 : vector<2x128xf32>
    %c4_49 = arith.constant 4 : index
    %c0_50 = arith.constant 0 : index
    %133 = vector.load %arg8[%c4_49, %c0_50] : memref<34x128xf32, #tpu.memory_space<vmem>>, vector<2x128xf32>
    tpu.vector_store %arg8[%c4_49, %c0_50], %132 {strides = array<i32>} : memref<34x128xf32, #tpu.memory_space<vmem>>, vector<2x128xf32>,
    %c6 = arith.constant 6 : index
    %c0_51 = arith.constant 0 : index
    %134 = vector.load %arg7[%c6, %c0_51] : memref<32x384xf32, #tpu.memory_space<vmem>>, vector<2x384xf32>
    %cst_52 = arith.constant dense<0.000000e+00> : vector<2x384xf32>
    %135 = tpu.matmul %132, %39, %cst_52 {dimension_numbers = #tpu.dot_dimension_numbers<[1], [0], [0], [1], [0, 0, 1, 1], [], []>} : vector<2x128xf32>, vector<128x384xf32>, vector<2x384xf32> -> vector<2x384xf32>
    %136 = vector.broadcast %33 : vector<1x384xf32> to vector<2x384xf32>
    %137 = arith.addf %135, %136 : vector<2x384xf32>
    %138 = vector.extract_strided_slice %134 {offsets = [0, 0], sizes = [2, 128], strides = [1, 1]} : vector<2x384xf32> to vector<2x128xf32>
    %139 = vector.extract_strided_slice %137 {offsets = [0, 0], sizes = [2, 128], strides = [1, 1]} : vector<2x384xf32> to vector<2x128xf32>
    %140 = arith.addf %138, %139 : vector<2x128xf32>
    %141 = arith.negf %140 : vector<2x128xf32>
    %142 = math.exp %141 : vector<2x128xf32>
    %cst_53 = arith.constant 1.000000e+00 : f32
    %143 = vector.broadcast %cst_53 : f32 to vector<2x128xf32>
    %144 = arith.addf %143, %142 : vector<2x128xf32>
    %145 = arith.divf %143, %144 : vector<2x128xf32>
    %146 = vector.extract_strided_slice %134 {offsets = [0, 128], sizes = [2, 128], strides = [1, 1]} : vector<2x384xf32> to vector<2x128xf32>
    %147 = vector.extract_strided_slice %137 {offsets = [0, 128], sizes = [2, 128], strides = [1, 1]} : vector<2x384xf32> to vector<2x128xf32>
    %148 = arith.addf %146, %147 : vector<2x128xf32>
    %149 = arith.negf %148 : vector<2x128xf32>
    %150 = math.exp %149 : vector<2x128xf32>
    %cst_54 = arith.constant 1.000000e+00 : f32
    %151 = vector.broadcast %cst_54 : f32 to vector<2x128xf32>
    %152 = arith.addf %151, %150 : vector<2x128xf32>
    %153 = arith.divf %151, %152 : vector<2x128xf32>
    %154 = vector.extract_strided_slice %134 {offsets = [0, 256], sizes = [2, 128], strides = [1, 1]} : vector<2x384xf32> to vector<2x128xf32>
    %155 = vector.extract_strided_slice %137 {offsets = [0, 256], sizes = [2, 128], strides = [1, 1]} : vector<2x384xf32> to vector<2x128xf32>
    %156 = arith.mulf %145, %155 : vector<2x128xf32>
    %157 = arith.addf %154, %156 : vector<2x128xf32>
    %158 = math.tanh %157 : vector<2x128xf32>
    %cst_55 = arith.constant 1.000000e+00 : f32
    %159 = vector.broadcast %cst_55 : f32 to vector<2x128xf32>
    %160 = arith.subf %159, %153 : vector<2x128xf32>
    %161 = arith.mulf %160, %158 : vector<2x128xf32>
    %162 = arith.mulf %153, %132 : vector<2x128xf32>
    %163 = arith.addf %161, %162 : vector<2x128xf32>
    %c6_56 = arith.constant 6 : index
    %c0_57 = arith.constant 0 : index
    %164 = vector.load %arg8[%c6_56, %c0_57] : memref<34x128xf32, #tpu.memory_space<vmem>>, vector<2x128xf32>
    tpu.vector_store %arg8[%c6_56, %c0_57], %163 {strides = array<i32>} : memref<34x128xf32, #tpu.memory_space<vmem>>, vector<2x128xf32>,
    %c8_58 = arith.constant 8 : index
    %c0_59 = arith.constant 0 : index
    %165 = vector.load %arg7[%c8_58, %c0_59] : memref<32x384xf32, #tpu.memory_space<vmem>>, vector<2x384xf32>
    %cst_60 = arith.constant dense<0.000000e+00> : vector<2x384xf32>
    %166 = tpu.matmul %163, %39, %cst_60 {dimension_numbers = #tpu.dot_dimension_numbers<[1], [0], [0], [1], [0, 0, 1, 1], [], []>} : vector<2x128xf32>, vector<128x384xf32>, vector<2x384xf32> -> vector<2x384xf32>
    %167 = vector.broadcast %33 : vector<1x384xf32> to vector<2x384xf32>
    %168 = arith.addf %166, %167 : vector<2x384xf32>
    %169 = vector.extract_strided_slice %165 {offsets = [0, 0], sizes = [2, 128], strides = [1, 1]} : vector<2x384xf32> to vector<2x128xf32>
    %170 = vector.extract_strided_slice %168 {offsets = [0, 0], sizes = [2, 128], strides = [1, 1]} : vector<2x384xf32> to vector<2x128xf32>
    %171 = arith.addf %169, %170 : vector<2x128xf32>
    %172 = arith.negf %171 : vector<2x128xf32>
    %173 = math.exp %172 : vector<2x128xf32>
    %cst_61 = arith.constant 1.000000e+00 : f32
    %174 = vector.broadcast %cst_61 : f32 to vector<2x128xf32>
    %175 = arith.addf %174, %173 : vector<2x128xf32>
    %176 = arith.divf %174, %175 : vector<2x128xf32>
    %177 = vector.extract_strided_slice %165 {offsets = [0, 128], sizes = [2, 128], strides = [1, 1]} : vector<2x384xf32> to vector<2x128xf32>
    %178 = vector.extract_strided_slice %168 {offsets = [0, 128], sizes = [2, 128], strides = [1, 1]} : vector<2x384xf32> to vector<2x128xf32>
    %179 = arith.addf %177, %178 : vector<2x128xf32>
    %180 = arith.negf %179 : vector<2x128xf32>
    %181 = math.exp %180 : vector<2x128xf32>
    %cst_62 = arith.constant 1.000000e+00 : f32
    %182 = vector.broadcast %cst_62 : f32 to vector<2x128xf32>
    %183 = arith.addf %182, %181 : vector<2x128xf32>
    %184 = arith.divf %182, %183 : vector<2x128xf32>
    %185 = vector.extract_strided_slice %165 {offsets = [0, 256], sizes = [2, 128], strides = [1, 1]} : vector<2x384xf32> to vector<2x128xf32>
    %186 = vector.extract_strided_slice %168 {offsets = [0, 256], sizes = [2, 128], strides = [1, 1]} : vector<2x384xf32> to vector<2x128xf32>
    %187 = arith.mulf %176, %186 : vector<2x128xf32>
    %188 = arith.addf %185, %187 : vector<2x128xf32>
    %189 = math.tanh %188 : vector<2x128xf32>
    %cst_63 = arith.constant 1.000000e+00 : f32
    %190 = vector.broadcast %cst_63 : f32 to vector<2x128xf32>
    %191 = arith.subf %190, %184 : vector<2x128xf32>
    %192 = arith.mulf %191, %189 : vector<2x128xf32>
    %193 = arith.mulf %184, %163 : vector<2x128xf32>
    %194 = arith.addf %192, %193 : vector<2x128xf32>
    %c8_64 = arith.constant 8 : index
    %c0_65 = arith.constant 0 : index
    %195 = vector.load %arg8[%c8_64, %c0_65] : memref<34x128xf32, #tpu.memory_space<vmem>>, vector<2x128xf32>
    tpu.vector_store %arg8[%c8_64, %c0_65], %194 {strides = array<i32>} : memref<34x128xf32, #tpu.memory_space<vmem>>, vector<2x128xf32>,
    %c10 = arith.constant 10 : index
    %c0_66 = arith.constant 0 : index
    %196 = vector.load %arg7[%c10, %c0_66] : memref<32x384xf32, #tpu.memory_space<vmem>>, vector<2x384xf32>
    %cst_67 = arith.constant dense<0.000000e+00> : vector<2x384xf32>
    %197 = tpu.matmul %194, %39, %cst_67 {dimension_numbers = #tpu.dot_dimension_numbers<[1], [0], [0], [1], [0, 0, 1, 1], [], []>} : vector<2x128xf32>, vector<128x384xf32>, vector<2x384xf32> -> vector<2x384xf32>
    %198 = vector.broadcast %33 : vector<1x384xf32> to vector<2x384xf32>
    %199 = arith.addf %197, %198 : vector<2x384xf32>
    %200 = vector.extract_strided_slice %196 {offsets = [0, 0], sizes = [2, 128], strides = [1, 1]} : vector<2x384xf32> to vector<2x128xf32>
    %201 = vector.extract_strided_slice %199 {offsets = [0, 0], sizes = [2, 128], strides = [1, 1]} : vector<2x384xf32> to vector<2x128xf32>
    %202 = arith.addf %200, %201 : vector<2x128xf32>
    %203 = arith.negf %202 : vector<2x128xf32>
    %204 = math.exp %203 : vector<2x128xf32>
    %cst_68 = arith.constant 1.000000e+00 : f32
    %205 = vector.broadcast %cst_68 : f32 to vector<2x128xf32>
    %206 = arith.addf %205, %204 : vector<2x128xf32>
    %207 = arith.divf %205, %206 : vector<2x128xf32>
    %208 = vector.extract_strided_slice %196 {offsets = [0, 128], sizes = [2, 128], strides = [1, 1]} : vector<2x384xf32> to vector<2x128xf32>
    %209 = vector.extract_strided_slice %199 {offsets = [0, 128], sizes = [2, 128], strides = [1, 1]} : vector<2x384xf32> to vector<2x128xf32>
    %210 = arith.addf %208, %209 : vector<2x128xf32>
    %211 = arith.negf %210 : vector<2x128xf32>
    %212 = math.exp %211 : vector<2x128xf32>
    %cst_69 = arith.constant 1.000000e+00 : f32
    %213 = vector.broadcast %cst_69 : f32 to vector<2x128xf32>
    %214 = arith.addf %213, %212 : vector<2x128xf32>
    %215 = arith.divf %213, %214 : vector<2x128xf32>
    %216 = vector.extract_strided_slice %196 {offsets = [0, 256], sizes = [2, 128], strides = [1, 1]} : vector<2x384xf32> to vector<2x128xf32>
    %217 = vector.extract_strided_slice %199 {offsets = [0, 256], sizes = [2, 128], strides = [1, 1]} : vector<2x384xf32> to vector<2x128xf32>
    %218 = arith.mulf %207, %217 : vector<2x128xf32>
    %219 = arith.addf %216, %218 : vector<2x128xf32>
    %220 = math.tanh %219 : vector<2x128xf32>
    %cst_70 = arith.constant 1.000000e+00 : f32
    %221 = vector.broadcast %cst_70 : f32 to vector<2x128xf32>
    %222 = arith.subf %221, %215 : vector<2x128xf32>
    %223 = arith.mulf %222, %220 : vector<2x128xf32>
    %224 = arith.mulf %215, %194 : vector<2x128xf32>
    %225 = arith.addf %223, %224 : vector<2x128xf32>
    %c10_71 = arith.constant 10 : index
    %c0_72 = arith.constant 0 : index
    %226 = vector.load %arg8[%c10_71, %c0_72] : memref<34x128xf32, #tpu.memory_space<vmem>>, vector<2x128xf32>
    tpu.vector_store %arg8[%c10_71, %c0_72], %225 {strides = array<i32>} : memref<34x128xf32, #tpu.memory_space<vmem>>, vector<2x128xf32>,
    %c12 = arith.constant 12 : index
    %c0_73 = arith.constant 0 : index
    %227 = vector.load %arg7[%c12, %c0_73] : memref<32x384xf32, #tpu.memory_space<vmem>>, vector<2x384xf32>
    %cst_74 = arith.constant dense<0.000000e+00> : vector<2x384xf32>
    %228 = tpu.matmul %225, %39, %cst_74 {dimension_numbers = #tpu.dot_dimension_numbers<[1], [0], [0], [1], [0, 0, 1, 1], [], []>} : vector<2x128xf32>, vector<128x384xf32>, vector<2x384xf32> -> vector<2x384xf32>
    %229 = vector.broadcast %33 : vector<1x384xf32> to vector<2x384xf32>
    %230 = arith.addf %228, %229 : vector<2x384xf32>
    %231 = vector.extract_strided_slice %227 {offsets = [0, 0], sizes = [2, 128], strides = [1, 1]} : vector<2x384xf32> to vector<2x128xf32>
    %232 = vector.extract_strided_slice %230 {offsets = [0, 0], sizes = [2, 128], strides = [1, 1]} : vector<2x384xf32> to vector<2x128xf32>
    %233 = arith.addf %231, %232 : vector<2x128xf32>
    %234 = arith.negf %233 : vector<2x128xf32>
    %235 = math.exp %234 : vector<2x128xf32>
    %cst_75 = arith.constant 1.000000e+00 : f32
    %236 = vector.broadcast %cst_75 : f32 to vector<2x128xf32>
    %237 = arith.addf %236, %235 : vector<2x128xf32>
    %238 = arith.divf %236, %237 : vector<2x128xf32>
    %239 = vector.extract_strided_slice %227 {offsets = [0, 128], sizes = [2, 128], strides = [1, 1]} : vector<2x384xf32> to vector<2x128xf32>
    %240 = vector.extract_strided_slice %230 {offsets = [0, 128], sizes = [2, 128], strides = [1, 1]} : vector<2x384xf32> to vector<2x128xf32>
    %241 = arith.addf %239, %240 : vector<2x128xf32>
    %242 = arith.negf %241 : vector<2x128xf32>
    %243 = math.exp %242 : vector<2x128xf32>
    %cst_76 = arith.constant 1.000000e+00 : f32
    %244 = vector.broadcast %cst_76 : f32 to vector<2x128xf32>
    %245 = arith.addf %244, %243 : vector<2x128xf32>
    %246 = arith.divf %244, %245 : vector<2x128xf32>
    %247 = vector.extract_strided_slice %227 {offsets = [0, 256], sizes = [2, 128], strides = [1, 1]} : vector<2x384xf32> to vector<2x128xf32>
    %248 = vector.extract_strided_slice %230 {offsets = [0, 256], sizes = [2, 128], strides = [1, 1]} : vector<2x384xf32> to vector<2x128xf32>
    %249 = arith.mulf %238, %248 : vector<2x128xf32>
    %250 = arith.addf %247, %249 : vector<2x128xf32>
    %251 = math.tanh %250 : vector<2x128xf32>
    %cst_77 = arith.constant 1.000000e+00 : f32
    %252 = vector.broadcast %cst_77 : f32 to vector<2x128xf32>
    %253 = arith.subf %252, %246 : vector<2x128xf32>
    %254 = arith.mulf %253, %251 : vector<2x128xf32>
    %255 = arith.mulf %246, %225 : vector<2x128xf32>
    %256 = arith.addf %254, %255 : vector<2x128xf32>
    %c12_78 = arith.constant 12 : index
    %c0_79 = arith.constant 0 : index
    %257 = vector.load %arg8[%c12_78, %c0_79] : memref<34x128xf32, #tpu.memory_space<vmem>>, vector<2x128xf32>
    tpu.vector_store %arg8[%c12_78, %c0_79], %256 {strides = array<i32>} : memref<34x128xf32, #tpu.memory_space<vmem>>, vector<2x128xf32>,
    %c14 = arith.constant 14 : index
    %c0_80 = arith.constant 0 : index
    %258 = vector.load %arg7[%c14, %c0_80] : memref<32x384xf32, #tpu.memory_space<vmem>>, vector<2x384xf32>
    %cst_81 = arith.constant dense<0.000000e+00> : vector<2x384xf32>
    %259 = tpu.matmul %256, %39, %cst_81 {dimension_numbers = #tpu.dot_dimension_numbers<[1], [0], [0], [1], [0, 0, 1, 1], [], []>} : vector<2x128xf32>, vector<128x384xf32>, vector<2x384xf32> -> vector<2x384xf32>
    %260 = vector.broadcast %33 : vector<1x384xf32> to vector<2x384xf32>
    %261 = arith.addf %259, %260 : vector<2x384xf32>
    %262 = vector.extract_strided_slice %258 {offsets = [0, 0], sizes = [2, 128], strides = [1, 1]} : vector<2x384xf32> to vector<2x128xf32>
    %263 = vector.extract_strided_slice %261 {offsets = [0, 0], sizes = [2, 128], strides = [1, 1]} : vector<2x384xf32> to vector<2x128xf32>
    %264 = arith.addf %262, %263 : vector<2x128xf32>
    %265 = arith.negf %264 : vector<2x128xf32>
    %266 = math.exp %265 : vector<2x128xf32>
    %cst_82 = arith.constant 1.000000e+00 : f32
    %267 = vector.broadcast %cst_82 : f32 to vector<2x128xf32>
    %268 = arith.addf %267, %266 : vector<2x128xf32>
    %269 = arith.divf %267, %268 : vector<2x128xf32>
    %270 = vector.extract_strided_slice %258 {offsets = [0, 128], sizes = [2, 128], strides = [1, 1]} : vector<2x384xf32> to vector<2x128xf32>
    %271 = vector.extract_strided_slice %261 {offsets = [0, 128], sizes = [2, 128], strides = [1, 1]} : vector<2x384xf32> to vector<2x128xf32>
    %272 = arith.addf %270, %271 : vector<2x128xf32>
    %273 = arith.negf %272 : vector<2x128xf32>
    %274 = math.exp %273 : vector<2x128xf32>
    %cst_83 = arith.constant 1.000000e+00 : f32
    %275 = vector.broadcast %cst_83 : f32 to vector<2x128xf32>
    %276 = arith.addf %275, %274 : vector<2x128xf32>
    %277 = arith.divf %275, %276 : vector<2x128xf32>
    %278 = vector.extract_strided_slice %258 {offsets = [0, 256], sizes = [2, 128], strides = [1, 1]} : vector<2x384xf32> to vector<2x128xf32>
    %279 = vector.extract_strided_slice %261 {offsets = [0, 256], sizes = [2, 128], strides = [1, 1]} : vector<2x384xf32> to vector<2x128xf32>
    %280 = arith.mulf %269, %279 : vector<2x128xf32>
    %281 = arith.addf %278, %280 : vector<2x128xf32>
    %282 = math.tanh %281 : vector<2x128xf32>
    %cst_84 = arith.constant 1.000000e+00 : f32
    %283 = vector.broadcast %cst_84 : f32 to vector<2x128xf32>
    %284 = arith.subf %283, %277 : vector<2x128xf32>
    %285 = arith.mulf %284, %282 : vector<2x128xf32>
    %286 = arith.mulf %277, %256 : vector<2x128xf32>
    %287 = arith.addf %285, %286 : vector<2x128xf32>
    %c14_85 = arith.constant 14 : index
    %c0_86 = arith.constant 0 : index
    %288 = vector.load %arg8[%c14_85, %c0_86] : memref<34x128xf32, #tpu.memory_space<vmem>>, vector<2x128xf32>
    tpu.vector_store %arg8[%c14_85, %c0_86], %287 {strides = array<i32>} : memref<34x128xf32, #tpu.memory_space<vmem>>, vector<2x128xf32>,
    %c16 = arith.constant 16 : index
    %c0_87 = arith.constant 0 : index
    %289 = vector.load %arg7[%c16, %c0_87] : memref<32x384xf32, #tpu.memory_space<vmem>>, vector<2x384xf32>
    %cst_88 = arith.constant dense<0.000000e+00> : vector<2x384xf32>
    %290 = tpu.matmul %287, %39, %cst_88 {dimension_numbers = #tpu.dot_dimension_numbers<[1], [0], [0], [1], [0, 0, 1, 1], [], []>} : vector<2x128xf32>, vector<128x384xf32>, vector<2x384xf32> -> vector<2x384xf32>
    %291 = vector.broadcast %33 : vector<1x384xf32> to vector<2x384xf32>
    %292 = arith.addf %290, %291 : vector<2x384xf32>
    %293 = vector.extract_strided_slice %289 {offsets = [0, 0], sizes = [2, 128], strides = [1, 1]} : vector<2x384xf32> to vector<2x128xf32>
    %294 = vector.extract_strided_slice %292 {offsets = [0, 0], sizes = [2, 128], strides = [1, 1]} : vector<2x384xf32> to vector<2x128xf32>
    %295 = arith.addf %293, %294 : vector<2x128xf32>
    %296 = arith.negf %295 : vector<2x128xf32>
    %297 = math.exp %296 : vector<2x128xf32>
    %cst_89 = arith.constant 1.000000e+00 : f32
    %298 = vector.broadcast %cst_89 : f32 to vector<2x128xf32>
    %299 = arith.addf %298, %297 : vector<2x128xf32>
    %300 = arith.divf %298, %299 : vector<2x128xf32>
    %301 = vector.extract_strided_slice %289 {offsets = [0, 128], sizes = [2, 128], strides = [1, 1]} : vector<2x384xf32> to vector<2x128xf32>
    %302 = vector.extract_strided_slice %292 {offsets = [0, 128], sizes = [2, 128], strides = [1, 1]} : vector<2x384xf32> to vector<2x128xf32>
    %303 = arith.addf %301, %302 : vector<2x128xf32>
    %304 = arith.negf %303 : vector<2x128xf32>
    %305 = math.exp %304 : vector<2x128xf32>
    %cst_90 = arith.constant 1.000000e+00 : f32
    %306 = vector.broadcast %cst_90 : f32 to vector<2x128xf32>
    %307 = arith.addf %306, %305 : vector<2x128xf32>
    %308 = arith.divf %306, %307 : vector<2x128xf32>
    %309 = vector.extract_strided_slice %289 {offsets = [0, 256], sizes = [2, 128], strides = [1, 1]} : vector<2x384xf32> to vector<2x128xf32>
    %310 = vector.extract_strided_slice %292 {offsets = [0, 256], sizes = [2, 128], strides = [1, 1]} : vector<2x384xf32> to vector<2x128xf32>
    %311 = arith.mulf %300, %310 : vector<2x128xf32>
    %312 = arith.addf %309, %311 : vector<2x128xf32>
    %313 = math.tanh %312 : vector<2x128xf32>
    %cst_91 = arith.constant 1.000000e+00 : f32
    %314 = vector.broadcast %cst_91 : f32 to vector<2x128xf32>
    %315 = arith.subf %314, %308 : vector<2x128xf32>
    %316 = arith.mulf %315, %313 : vector<2x128xf32>
    %317 = arith.mulf %308, %287 : vector<2x128xf32>
    %318 = arith.addf %316, %317 : vector<2x128xf32>
    %c16_92 = arith.constant 16 : index
    %c0_93 = arith.constant 0 : index
    %319 = vector.load %arg8[%c16_92, %c0_93] : memref<34x128xf32, #tpu.memory_space<vmem>>, vector<2x128xf32>
    tpu.vector_store %arg8[%c16_92, %c0_93], %318 {strides = array<i32>} : memref<34x128xf32, #tpu.memory_space<vmem>>, vector<2x128xf32>,
    %c18 = arith.constant 18 : index
    %c0_94 = arith.constant 0 : index
    %320 = vector.load %arg7[%c18, %c0_94] : memref<32x384xf32, #tpu.memory_space<vmem>>, vector<2x384xf32>
    %cst_95 = arith.constant dense<0.000000e+00> : vector<2x384xf32>
    %321 = tpu.matmul %318, %39, %cst_95 {dimension_numbers = #tpu.dot_dimension_numbers<[1], [0], [0], [1], [0, 0, 1, 1], [], []>} : vector<2x128xf32>, vector<128x384xf32>, vector<2x384xf32> -> vector<2x384xf32>
    %322 = vector.broadcast %33 : vector<1x384xf32> to vector<2x384xf32>
    %323 = arith.addf %321, %322 : vector<2x384xf32>
    %324 = vector.extract_strided_slice %320 {offsets = [0, 0], sizes = [2, 128], strides = [1, 1]} : vector<2x384xf32> to vector<2x128xf32>
    %325 = vector.extract_strided_slice %323 {offsets = [0, 0], sizes = [2, 128], strides = [1, 1]} : vector<2x384xf32> to vector<2x128xf32>
    %326 = arith.addf %324, %325 : vector<2x128xf32>
    %327 = arith.negf %326 : vector<2x128xf32>
    %328 = math.exp %327 : vector<2x128xf32>
    %cst_96 = arith.constant 1.000000e+00 : f32
    %329 = vector.broadcast %cst_96 : f32 to vector<2x128xf32>
    %330 = arith.addf %329, %328 : vector<2x128xf32>
    %331 = arith.divf %329, %330 : vector<2x128xf32>
    %332 = vector.extract_strided_slice %320 {offsets = [0, 128], sizes = [2, 128], strides = [1, 1]} : vector<2x384xf32> to vector<2x128xf32>
    %333 = vector.extract_strided_slice %323 {offsets = [0, 128], sizes = [2, 128], strides = [1, 1]} : vector<2x384xf32> to vector<2x128xf32>
    %334 = arith.addf %332, %333 : vector<2x128xf32>
    %335 = arith.negf %334 : vector<2x128xf32>
    %336 = math.exp %335 : vector<2x128xf32>
    %cst_97 = arith.constant 1.000000e+00 : f32
    %337 = vector.broadcast %cst_97 : f32 to vector<2x128xf32>
    %338 = arith.addf %337, %336 : vector<2x128xf32>
    %339 = arith.divf %337, %338 : vector<2x128xf32>
    %340 = vector.extract_strided_slice %320 {offsets = [0, 256], sizes = [2, 128], strides = [1, 1]} : vector<2x384xf32> to vector<2x128xf32>
    %341 = vector.extract_strided_slice %323 {offsets = [0, 256], sizes = [2, 128], strides = [1, 1]} : vector<2x384xf32> to vector<2x128xf32>
    %342 = arith.mulf %331, %341 : vector<2x128xf32>
    %343 = arith.addf %340, %342 : vector<2x128xf32>
    %344 = math.tanh %343 : vector<2x128xf32>
    %cst_98 = arith.constant 1.000000e+00 : f32
    %345 = vector.broadcast %cst_98 : f32 to vector<2x128xf32>
    %346 = arith.subf %345, %339 : vector<2x128xf32>
    %347 = arith.mulf %346, %344 : vector<2x128xf32>
    %348 = arith.mulf %339, %318 : vector<2x128xf32>
    %349 = arith.addf %347, %348 : vector<2x128xf32>
    %c18_99 = arith.constant 18 : index
    %c0_100 = arith.constant 0 : index
    %350 = vector.load %arg8[%c18_99, %c0_100] : memref<34x128xf32, #tpu.memory_space<vmem>>, vector<2x128xf32>
    tpu.vector_store %arg8[%c18_99, %c0_100], %349 {strides = array<i32>} : memref<34x128xf32, #tpu.memory_space<vmem>>, vector<2x128xf32>,
    %c20 = arith.constant 20 : index
    %c0_101 = arith.constant 0 : index
    %351 = vector.load %arg7[%c20, %c0_101] : memref<32x384xf32, #tpu.memory_space<vmem>>, vector<2x384xf32>
    %cst_102 = arith.constant dense<0.000000e+00> : vector<2x384xf32>
    %352 = tpu.matmul %349, %39, %cst_102 {dimension_numbers = #tpu.dot_dimension_numbers<[1], [0], [0], [1], [0, 0, 1, 1], [], []>} : vector<2x128xf32>, vector<128x384xf32>, vector<2x384xf32> -> vector<2x384xf32>
    %353 = vector.broadcast %33 : vector<1x384xf32> to vector<2x384xf32>
    %354 = arith.addf %352, %353 : vector<2x384xf32>
    %355 = vector.extract_strided_slice %351 {offsets = [0, 0], sizes = [2, 128], strides = [1, 1]} : vector<2x384xf32> to vector<2x128xf32>
    %356 = vector.extract_strided_slice %354 {offsets = [0, 0], sizes = [2, 128], strides = [1, 1]} : vector<2x384xf32> to vector<2x128xf32>
    %357 = arith.addf %355, %356 : vector<2x128xf32>
    %358 = arith.negf %357 : vector<2x128xf32>
    %359 = math.exp %358 : vector<2x128xf32>
    %cst_103 = arith.constant 1.000000e+00 : f32
    %360 = vector.broadcast %cst_103 : f32 to vector<2x128xf32>
    %361 = arith.addf %360, %359 : vector<2x128xf32>
    %362 = arith.divf %360, %361 : vector<2x128xf32>
    %363 = vector.extract_strided_slice %351 {offsets = [0, 128], sizes = [2, 128], strides = [1, 1]} : vector<2x384xf32> to vector<2x128xf32>
    %364 = vector.extract_strided_slice %354 {offsets = [0, 128], sizes = [2, 128], strides = [1, 1]} : vector<2x384xf32> to vector<2x128xf32>
    %365 = arith.addf %363, %364 : vector<2x128xf32>
    %366 = arith.negf %365 : vector<2x128xf32>
    %367 = math.exp %366 : vector<2x128xf32>
    %cst_104 = arith.constant 1.000000e+00 : f32
    %368 = vector.broadcast %cst_104 : f32 to vector<2x128xf32>
    %369 = arith.addf %368, %367 : vector<2x128xf32>
    %370 = arith.divf %368, %369 : vector<2x128xf32>
    %371 = vector.extract_strided_slice %351 {offsets = [0, 256], sizes = [2, 128], strides = [1, 1]} : vector<2x384xf32> to vector<2x128xf32>
    %372 = vector.extract_strided_slice %354 {offsets = [0, 256], sizes = [2, 128], strides = [1, 1]} : vector<2x384xf32> to vector<2x128xf32>
    %373 = arith.mulf %362, %372 : vector<2x128xf32>
    %374 = arith.addf %371, %373 : vector<2x128xf32>
    %375 = math.tanh %374 : vector<2x128xf32>
    %cst_105 = arith.constant 1.000000e+00 : f32
    %376 = vector.broadcast %cst_105 : f32 to vector<2x128xf32>
    %377 = arith.subf %376, %370 : vector<2x128xf32>
    %378 = arith.mulf %377, %375 : vector<2x128xf32>
    %379 = arith.mulf %370, %349 : vector<2x128xf32>
    %380 = arith.addf %378, %379 : vector<2x128xf32>
    %c20_106 = arith.constant 20 : index
    %c0_107 = arith.constant 0 : index
    %381 = vector.load %arg8[%c20_106, %c0_107] : memref<34x128xf32, #tpu.memory_space<vmem>>, vector<2x128xf32>
    tpu.vector_store %arg8[%c20_106, %c0_107], %380 {strides = array<i32>} : memref<34x128xf32, #tpu.memory_space<vmem>>, vector<2x128xf32>,
    %c22 = arith.constant 22 : index
    %c0_108 = arith.constant 0 : index
    %382 = vector.load %arg7[%c22, %c0_108] : memref<32x384xf32, #tpu.memory_space<vmem>>, vector<2x384xf32>
    %cst_109 = arith.constant dense<0.000000e+00> : vector<2x384xf32>
    %383 = tpu.matmul %380, %39, %cst_109 {dimension_numbers = #tpu.dot_dimension_numbers<[1], [0], [0], [1], [0, 0, 1, 1], [], []>} : vector<2x128xf32>, vector<128x384xf32>, vector<2x384xf32> -> vector<2x384xf32>
    %384 = vector.broadcast %33 : vector<1x384xf32> to vector<2x384xf32>
    %385 = arith.addf %383, %384 : vector<2x384xf32>
    %386 = vector.extract_strided_slice %382 {offsets = [0, 0], sizes = [2, 128], strides = [1, 1]} : vector<2x384xf32> to vector<2x128xf32>
    %387 = vector.extract_strided_slice %385 {offsets = [0, 0], sizes = [2, 128], strides = [1, 1]} : vector<2x384xf32> to vector<2x128xf32>
    %388 = arith.addf %386, %387 : vector<2x128xf32>
    %389 = arith.negf %388 : vector<2x128xf32>
    %390 = math.exp %389 : vector<2x128xf32>
    %cst_110 = arith.constant 1.000000e+00 : f32
    %391 = vector.broadcast %cst_110 : f32 to vector<2x128xf32>
    %392 = arith.addf %391, %390 : vector<2x128xf32>
    %393 = arith.divf %391, %392 : vector<2x128xf32>
    %394 = vector.extract_strided_slice %382 {offsets = [0, 128], sizes = [2, 128], strides = [1, 1]} : vector<2x384xf32> to vector<2x128xf32>
    %395 = vector.extract_strided_slice %385 {offsets = [0, 128], sizes = [2, 128], strides = [1, 1]} : vector<2x384xf32> to vector<2x128xf32>
    %396 = arith.addf %394, %395 : vector<2x128xf32>
    %397 = arith.negf %396 : vector<2x128xf32>
    %398 = math.exp %397 : vector<2x128xf32>
    %cst_111 = arith.constant 1.000000e+00 : f32
    %399 = vector.broadcast %cst_111 : f32 to vector<2x128xf32>
    %400 = arith.addf %399, %398 : vector<2x128xf32>
    %401 = arith.divf %399, %400 : vector<2x128xf32>
    %402 = vector.extract_strided_slice %382 {offsets = [0, 256], sizes = [2, 128], strides = [1, 1]} : vector<2x384xf32> to vector<2x128xf32>
    %403 = vector.extract_strided_slice %385 {offsets = [0, 256], sizes = [2, 128], strides = [1, 1]} : vector<2x384xf32> to vector<2x128xf32>
    %404 = arith.mulf %393, %403 : vector<2x128xf32>
    %405 = arith.addf %402, %404 : vector<2x128xf32>
    %406 = math.tanh %405 : vector<2x128xf32>
    %cst_112 = arith.constant 1.000000e+00 : f32
    %407 = vector.broadcast %cst_112 : f32 to vector<2x128xf32>
    %408 = arith.subf %407, %401 : vector<2x128xf32>
    %409 = arith.mulf %408, %406 : vector<2x128xf32>
    %410 = arith.mulf %401, %380 : vector<2x128xf32>
    %411 = arith.addf %409, %410 : vector<2x128xf32>
    %c22_113 = arith.constant 22 : index
    %c0_114 = arith.constant 0 : index
    %412 = vector.load %arg8[%c22_113, %c0_114] : memref<34x128xf32, #tpu.memory_space<vmem>>, vector<2x128xf32>
    tpu.vector_store %arg8[%c22_113, %c0_114], %411 {strides = array<i32>} : memref<34x128xf32, #tpu.memory_space<vmem>>, vector<2x128xf32>,
    %c24 = arith.constant 24 : index
    %c0_115 = arith.constant 0 : index
    %413 = vector.load %arg7[%c24, %c0_115] : memref<32x384xf32, #tpu.memory_space<vmem>>, vector<2x384xf32>
    %cst_116 = arith.constant dense<0.000000e+00> : vector<2x384xf32>
    %414 = tpu.matmul %411, %39, %cst_116 {dimension_numbers = #tpu.dot_dimension_numbers<[1], [0], [0], [1], [0, 0, 1, 1], [], []>} : vector<2x128xf32>, vector<128x384xf32>, vector<2x384xf32> -> vector<2x384xf32>
    %415 = vector.broadcast %33 : vector<1x384xf32> to vector<2x384xf32>
    %416 = arith.addf %414, %415 : vector<2x384xf32>
    %417 = vector.extract_strided_slice %413 {offsets = [0, 0], sizes = [2, 128], strides = [1, 1]} : vector<2x384xf32> to vector<2x128xf32>
    %418 = vector.extract_strided_slice %416 {offsets = [0, 0], sizes = [2, 128], strides = [1, 1]} : vector<2x384xf32> to vector<2x128xf32>
    %419 = arith.addf %417, %418 : vector<2x128xf32>
    %420 = arith.negf %419 : vector<2x128xf32>
    %421 = math.exp %420 : vector<2x128xf32>
    %cst_117 = arith.constant 1.000000e+00 : f32
    %422 = vector.broadcast %cst_117 : f32 to vector<2x128xf32>
    %423 = arith.addf %422, %421 : vector<2x128xf32>
    %424 = arith.divf %422, %423 : vector<2x128xf32>
    %425 = vector.extract_strided_slice %413 {offsets = [0, 128], sizes = [2, 128], strides = [1, 1]} : vector<2x384xf32> to vector<2x128xf32>
    %426 = vector.extract_strided_slice %416 {offsets = [0, 128], sizes = [2, 128], strides = [1, 1]} : vector<2x384xf32> to vector<2x128xf32>
    %427 = arith.addf %425, %426 : vector<2x128xf32>
    %428 = arith.negf %427 : vector<2x128xf32>
    %429 = math.exp %428 : vector<2x128xf32>
    %cst_118 = arith.constant 1.000000e+00 : f32
    %430 = vector.broadcast %cst_118 : f32 to vector<2x128xf32>
    %431 = arith.addf %430, %429 : vector<2x128xf32>
    %432 = arith.divf %430, %431 : vector<2x128xf32>
    %433 = vector.extract_strided_slice %413 {offsets = [0, 256], sizes = [2, 128], strides = [1, 1]} : vector<2x384xf32> to vector<2x128xf32>
    %434 = vector.extract_strided_slice %416 {offsets = [0, 256], sizes = [2, 128], strides = [1, 1]} : vector<2x384xf32> to vector<2x128xf32>
    %435 = arith.mulf %424, %434 : vector<2x128xf32>
    %436 = arith.addf %433, %435 : vector<2x128xf32>
    %437 = math.tanh %436 : vector<2x128xf32>
    %cst_119 = arith.constant 1.000000e+00 : f32
    %438 = vector.broadcast %cst_119 : f32 to vector<2x128xf32>
    %439 = arith.subf %438, %432 : vector<2x128xf32>
    %440 = arith.mulf %439, %437 : vector<2x128xf32>
    %441 = arith.mulf %432, %411 : vector<2x128xf32>
    %442 = arith.addf %440, %441 : vector<2x128xf32>
    %c24_120 = arith.constant 24 : index
    %c0_121 = arith.constant 0 : index
    %443 = vector.load %arg8[%c24_120, %c0_121] : memref<34x128xf32, #tpu.memory_space<vmem>>, vector<2x128xf32>
    tpu.vector_store %arg8[%c24_120, %c0_121], %442 {strides = array<i32>} : memref<34x128xf32, #tpu.memory_space<vmem>>, vector<2x128xf32>,
    %c26 = arith.constant 26 : index
    %c0_122 = arith.constant 0 : index
    %444 = vector.load %arg7[%c26, %c0_122] : memref<32x384xf32, #tpu.memory_space<vmem>>, vector<2x384xf32>
    %cst_123 = arith.constant dense<0.000000e+00> : vector<2x384xf32>
    %445 = tpu.matmul %442, %39, %cst_123 {dimension_numbers = #tpu.dot_dimension_numbers<[1], [0], [0], [1], [0, 0, 1, 1], [], []>} : vector<2x128xf32>, vector<128x384xf32>, vector<2x384xf32> -> vector<2x384xf32>
    %446 = vector.broadcast %33 : vector<1x384xf32> to vector<2x384xf32>
    %447 = arith.addf %445, %446 : vector<2x384xf32>
    %448 = vector.extract_strided_slice %444 {offsets = [0, 0], sizes = [2, 128], strides = [1, 1]} : vector<2x384xf32> to vector<2x128xf32>
    %449 = vector.extract_strided_slice %447 {offsets = [0, 0], sizes = [2, 128], strides = [1, 1]} : vector<2x384xf32> to vector<2x128xf32>
    %450 = arith.addf %448, %449 : vector<2x128xf32>
    %451 = arith.negf %450 : vector<2x128xf32>
    %452 = math.exp %451 : vector<2x128xf32>
    %cst_124 = arith.constant 1.000000e+00 : f32
    %453 = vector.broadcast %cst_124 : f32 to vector<2x128xf32>
    %454 = arith.addf %453, %452 : vector<2x128xf32>
    %455 = arith.divf %453, %454 : vector<2x128xf32>
    %456 = vector.extract_strided_slice %444 {offsets = [0, 128], sizes = [2, 128], strides = [1, 1]} : vector<2x384xf32> to vector<2x128xf32>
    %457 = vector.extract_strided_slice %447 {offsets = [0, 128], sizes = [2, 128], strides = [1, 1]} : vector<2x384xf32> to vector<2x128xf32>
    %458 = arith.addf %456, %457 : vector<2x128xf32>
    %459 = arith.negf %458 : vector<2x128xf32>
    %460 = math.exp %459 : vector<2x128xf32>
    %cst_125 = arith.constant 1.000000e+00 : f32
    %461 = vector.broadcast %cst_125 : f32 to vector<2x128xf32>
    %462 = arith.addf %461, %460 : vector<2x128xf32>
    %463 = arith.divf %461, %462 : vector<2x128xf32>
    %464 = vector.extract_strided_slice %444 {offsets = [0, 256], sizes = [2, 128], strides = [1, 1]} : vector<2x384xf32> to vector<2x128xf32>
    %465 = vector.extract_strided_slice %447 {offsets = [0, 256], sizes = [2, 128], strides = [1, 1]} : vector<2x384xf32> to vector<2x128xf32>
    %466 = arith.mulf %455, %465 : vector<2x128xf32>
    %467 = arith.addf %464, %466 : vector<2x128xf32>
    %468 = math.tanh %467 : vector<2x128xf32>
    %cst_126 = arith.constant 1.000000e+00 : f32
    %469 = vector.broadcast %cst_126 : f32 to vector<2x128xf32>
    %470 = arith.subf %469, %463 : vector<2x128xf32>
    %471 = arith.mulf %470, %468 : vector<2x128xf32>
    %472 = arith.mulf %463, %442 : vector<2x128xf32>
    %473 = arith.addf %471, %472 : vector<2x128xf32>
    %c26_127 = arith.constant 26 : index
    %c0_128 = arith.constant 0 : index
    %474 = vector.load %arg8[%c26_127, %c0_128] : memref<34x128xf32, #tpu.memory_space<vmem>>, vector<2x128xf32>
    tpu.vector_store %arg8[%c26_127, %c0_128], %473 {strides = array<i32>} : memref<34x128xf32, #tpu.memory_space<vmem>>, vector<2x128xf32>,
    %c28 = arith.constant 28 : index
    %c0_129 = arith.constant 0 : index
    %475 = vector.load %arg7[%c28, %c0_129] : memref<32x384xf32, #tpu.memory_space<vmem>>, vector<2x384xf32>
    %cst_130 = arith.constant dense<0.000000e+00> : vector<2x384xf32>
    %476 = tpu.matmul %473, %39, %cst_130 {dimension_numbers = #tpu.dot_dimension_numbers<[1], [0], [0], [1], [0, 0, 1, 1], [], []>} : vector<2x128xf32>, vector<128x384xf32>, vector<2x384xf32> -> vector<2x384xf32>
    %477 = vector.broadcast %33 : vector<1x384xf32> to vector<2x384xf32>
    %478 = arith.addf %476, %477 : vector<2x384xf32>
    %479 = vector.extract_strided_slice %475 {offsets = [0, 0], sizes = [2, 128], strides = [1, 1]} : vector<2x384xf32> to vector<2x128xf32>
    %480 = vector.extract_strided_slice %478 {offsets = [0, 0], sizes = [2, 128], strides = [1, 1]} : vector<2x384xf32> to vector<2x128xf32>
    %481 = arith.addf %479, %480 : vector<2x128xf32>
    %482 = arith.negf %481 : vector<2x128xf32>
    %483 = math.exp %482 : vector<2x128xf32>
    %cst_131 = arith.constant 1.000000e+00 : f32
    %484 = vector.broadcast %cst_131 : f32 to vector<2x128xf32>
    %485 = arith.addf %484, %483 : vector<2x128xf32>
    %486 = arith.divf %484, %485 : vector<2x128xf32>
    %487 = vector.extract_strided_slice %475 {offsets = [0, 128], sizes = [2, 128], strides = [1, 1]} : vector<2x384xf32> to vector<2x128xf32>
    %488 = vector.extract_strided_slice %478 {offsets = [0, 128], sizes = [2, 128], strides = [1, 1]} : vector<2x384xf32> to vector<2x128xf32>
    %489 = arith.addf %487, %488 : vector<2x128xf32>
    %490 = arith.negf %489 : vector<2x128xf32>
    %491 = math.exp %490 : vector<2x128xf32>
    %cst_132 = arith.constant 1.000000e+00 : f32
    %492 = vector.broadcast %cst_132 : f32 to vector<2x128xf32>
    %493 = arith.addf %492, %491 : vector<2x128xf32>
    %494 = arith.divf %492, %493 : vector<2x128xf32>
    %495 = vector.extract_strided_slice %475 {offsets = [0, 256], sizes = [2, 128], strides = [1, 1]} : vector<2x384xf32> to vector<2x128xf32>
    %496 = vector.extract_strided_slice %478 {offsets = [0, 256], sizes = [2, 128], strides = [1, 1]} : vector<2x384xf32> to vector<2x128xf32>
    %497 = arith.mulf %486, %496 : vector<2x128xf32>
    %498 = arith.addf %495, %497 : vector<2x128xf32>
    %499 = math.tanh %498 : vector<2x128xf32>
    %cst_133 = arith.constant 1.000000e+00 : f32
    %500 = vector.broadcast %cst_133 : f32 to vector<2x128xf32>
    %501 = arith.subf %500, %494 : vector<2x128xf32>
    %502 = arith.mulf %501, %499 : vector<2x128xf32>
    %503 = arith.mulf %494, %473 : vector<2x128xf32>
    %504 = arith.addf %502, %503 : vector<2x128xf32>
    %c28_134 = arith.constant 28 : index
    %c0_135 = arith.constant 0 : index
    %505 = vector.load %arg8[%c28_134, %c0_135] : memref<34x128xf32, #tpu.memory_space<vmem>>, vector<2x128xf32>
    tpu.vector_store %arg8[%c28_134, %c0_135], %504 {strides = array<i32>} : memref<34x128xf32, #tpu.memory_space<vmem>>, vector<2x128xf32>,
    %c30 = arith.constant 30 : index
    %c0_136 = arith.constant 0 : index
    %506 = vector.load %arg7[%c30, %c0_136] : memref<32x384xf32, #tpu.memory_space<vmem>>, vector<2x384xf32>
    %cst_137 = arith.constant dense<0.000000e+00> : vector<2x384xf32>
    %507 = tpu.matmul %504, %39, %cst_137 {dimension_numbers = #tpu.dot_dimension_numbers<[1], [0], [0], [1], [0, 0, 1, 1], [], []>} : vector<2x128xf32>, vector<128x384xf32>, vector<2x384xf32> -> vector<2x384xf32>
    %508 = vector.broadcast %33 : vector<1x384xf32> to vector<2x384xf32>
    %509 = arith.addf %507, %508 : vector<2x384xf32>
    %510 = vector.extract_strided_slice %506 {offsets = [0, 0], sizes = [2, 128], strides = [1, 1]} : vector<2x384xf32> to vector<2x128xf32>
    %511 = vector.extract_strided_slice %509 {offsets = [0, 0], sizes = [2, 128], strides = [1, 1]} : vector<2x384xf32> to vector<2x128xf32>
    %512 = arith.addf %510, %511 : vector<2x128xf32>
    %513 = arith.negf %512 : vector<2x128xf32>
    %514 = math.exp %513 : vector<2x128xf32>
    %cst_138 = arith.constant 1.000000e+00 : f32
    %515 = vector.broadcast %cst_138 : f32 to vector<2x128xf32>
    %516 = arith.addf %515, %514 : vector<2x128xf32>
    %517 = arith.divf %515, %516 : vector<2x128xf32>
    %518 = vector.extract_strided_slice %506 {offsets = [0, 128], sizes = [2, 128], strides = [1, 1]} : vector<2x384xf32> to vector<2x128xf32>
    %519 = vector.extract_strided_slice %509 {offsets = [0, 128], sizes = [2, 128], strides = [1, 1]} : vector<2x384xf32> to vector<2x128xf32>
    %520 = arith.addf %518, %519 : vector<2x128xf32>
    %521 = arith.negf %520 : vector<2x128xf32>
    %522 = math.exp %521 : vector<2x128xf32>
    %cst_139 = arith.constant 1.000000e+00 : f32
    %523 = vector.broadcast %cst_139 : f32 to vector<2x128xf32>
    %524 = arith.addf %523, %522 : vector<2x128xf32>
    %525 = arith.divf %523, %524 : vector<2x128xf32>
    %526 = vector.extract_strided_slice %506 {offsets = [0, 256], sizes = [2, 128], strides = [1, 1]} : vector<2x384xf32> to vector<2x128xf32>
    %527 = vector.extract_strided_slice %509 {offsets = [0, 256], sizes = [2, 128], strides = [1, 1]} : vector<2x384xf32> to vector<2x128xf32>
    %528 = arith.mulf %517, %527 : vector<2x128xf32>
    %529 = arith.addf %526, %528 : vector<2x128xf32>
    %530 = math.tanh %529 : vector<2x128xf32>
    %cst_140 = arith.constant 1.000000e+00 : f32
    %531 = vector.broadcast %cst_140 : f32 to vector<2x128xf32>
    %532 = arith.subf %531, %525 : vector<2x128xf32>
    %533 = arith.mulf %532, %530 : vector<2x128xf32>
    %534 = arith.mulf %525, %504 : vector<2x128xf32>
    %535 = arith.addf %533, %534 : vector<2x128xf32>
    %c30_141 = arith.constant 30 : index
    %c0_142 = arith.constant 0 : index
    %536 = vector.load %arg8[%c30_141, %c0_142] : memref<34x128xf32, #tpu.memory_space<vmem>>, vector<2x128xf32>
    tpu.vector_store %arg8[%c30_141, %c0_142], %535 {strides = array<i32>} : memref<34x128xf32, #tpu.memory_space<vmem>>, vector<2x128xf32>,
    %c0_143 = arith.constant 0 : index
    %c0_144 = arith.constant 0 : index
    %537 = vector.load %arg8[%c0_143, %c0_144] : memref<34x128xf32, #tpu.memory_space<vmem>>, vector<34x128xf32>
    %c0_145 = arith.constant 0 : index
    %c0_146 = arith.constant 0 : index
    %538 = vector.load %arg5[%c0_145, %c0_146] : memref<34x128xf32, #tpu.memory_space<vmem>>, vector<34x128xf32>
    tpu.vector_store %arg5[%c0_145, %c0_146], %537 {strides = array<i32>} : memref<34x128xf32, #tpu.memory_space<vmem>>, vector<34x128xf32>,
    %c0_147 = arith.constant 0 : index
    %c0_148 = arith.constant 0 : index
    %539 = vector.load %arg8[%c0_147, %c0_148] : memref<34x128xf32, #tpu.memory_space<vmem>>, vector<34x128xf32>
    %c384 = arith.constant 384 : index
    %c0_149 = arith.constant 0 : index
    %540 = vector.load %arg2[%c384, %c0_149] : memref<768x128xf32, #tpu.memory_space<vmem>>, vector<128x128xf32>
    %cst_150 = arith.constant dense<0.000000e+00> : vector<34x128xf32>
    %541 = tpu.matmul %539, %540, %cst_150 {dimension_numbers = #tpu.dot_dimension_numbers<[1], [0], [0], [1], [0, 0, 1, 1], [], []>} : vector<34x128xf32>, vector<128x128xf32>, vector<34x128xf32> -> vector<34x128xf32>
    %c5 = arith.constant 5 : index
    %c0_151 = arith.constant 0 : index
    %542 = vector.load %arg4[%c5, %c0_151] : memref<8x128xf32, #tpu.memory_space<vmem>>, vector<1x128xf32>
    %543 = vector.broadcast %542 : vector<1x128xf32> to vector<34x128xf32>
    %544 = arith.addf %541, %543 : vector<34x128xf32>
    %cst_152 = arith.constant 0.000000e+00 : f32
    %545 = vector.broadcast %cst_152 : f32 to vector<34x128xf32>
    %546 = arith.maximumf %544, %545 : vector<34x128xf32>
    %547 = vector.extract_strided_slice %546 {offsets = [32, 0], sizes = [2, 128], strides = [1, 1]} : vector<34x128xf32> to vector<2x128xf32>
    %548 = vector.extract_strided_slice %546 {offsets = [0, 0], sizes = [2, 128], strides = [1, 1]} : vector<34x128xf32> to vector<2x128xf32>
    %549 = vector.extract_strided_slice %546 {offsets = [2, 0], sizes = [2, 128], strides = [1, 1]} : vector<34x128xf32> to vector<2x128xf32>
    %550 = arith.addf %548, %549 : vector<2x128xf32>
    %551 = vector.extract_strided_slice %546 {offsets = [4, 0], sizes = [2, 128], strides = [1, 1]} : vector<34x128xf32> to vector<2x128xf32>
    %552 = arith.addf %550, %551 : vector<2x128xf32>
    %553 = vector.extract_strided_slice %546 {offsets = [6, 0], sizes = [2, 128], strides = [1, 1]} : vector<34x128xf32> to vector<2x128xf32>
    %554 = arith.addf %552, %553 : vector<2x128xf32>
    %555 = vector.extract_strided_slice %546 {offsets = [8, 0], sizes = [2, 128], strides = [1, 1]} : vector<34x128xf32> to vector<2x128xf32>
    %556 = arith.addf %554, %555 : vector<2x128xf32>
    %557 = vector.extract_strided_slice %546 {offsets = [10, 0], sizes = [2, 128], strides = [1, 1]} : vector<34x128xf32> to vector<2x128xf32>
    %558 = arith.addf %556, %557 : vector<2x128xf32>
    %559 = vector.extract_strided_slice %546 {offsets = [12, 0], sizes = [2, 128], strides = [1, 1]} : vector<34x128xf32> to vector<2x128xf32>
    %560 = arith.addf %558, %559 : vector<2x128xf32>
    %561 = vector.extract_strided_slice %546 {offsets = [14, 0], sizes = [2, 128], strides = [1, 1]} : vector<34x128xf32> to vector<2x128xf32>
    %562 = arith.addf %560, %561 : vector<2x128xf32>
    %563 = vector.extract_strided_slice %546 {offsets = [16, 0], sizes = [2, 128], strides = [1, 1]} : vector<34x128xf32> to vector<2x128xf32>
    %564 = arith.addf %562, %563 : vector<2x128xf32>
    %565 = vector.extract_strided_slice %546 {offsets = [18, 0], sizes = [2, 128], strides = [1, 1]} : vector<34x128xf32> to vector<2x128xf32>
    %566 = arith.addf %564, %565 : vector<2x128xf32>
    %567 = vector.extract_strided_slice %546 {offsets = [20, 0], sizes = [2, 128], strides = [1, 1]} : vector<34x128xf32> to vector<2x128xf32>
    %568 = arith.addf %566, %567 : vector<2x128xf32>
    %569 = vector.extract_strided_slice %546 {offsets = [22, 0], sizes = [2, 128], strides = [1, 1]} : vector<34x128xf32> to vector<2x128xf32>
    %570 = arith.addf %568, %569 : vector<2x128xf32>
    %571 = vector.extract_strided_slice %546 {offsets = [24, 0], sizes = [2, 128], strides = [1, 1]} : vector<34x128xf32> to vector<2x128xf32>
    %572 = arith.addf %570, %571 : vector<2x128xf32>
    %573 = vector.extract_strided_slice %546 {offsets = [26, 0], sizes = [2, 128], strides = [1, 1]} : vector<34x128xf32> to vector<2x128xf32>
    %574 = arith.addf %572, %573 : vector<2x128xf32>
    %575 = vector.extract_strided_slice %546 {offsets = [28, 0], sizes = [2, 128], strides = [1, 1]} : vector<34x128xf32> to vector<2x128xf32>
    %576 = arith.addf %574, %575 : vector<2x128xf32>
    %577 = vector.extract_strided_slice %546 {offsets = [30, 0], sizes = [2, 128], strides = [1, 1]} : vector<34x128xf32> to vector<2x128xf32>
    %578 = arith.addf %576, %577 : vector<2x128xf32>
    %cst_153 = arith.constant 6.250000e-02 : f32
    %579 = vector.broadcast %cst_153 : f32 to vector<2x128xf32>
    %580 = arith.mulf %578, %579 : vector<2x128xf32>
    %581 = tpu.concatenate %547, %580 in 0 : vector<2x128xf32>, vector<2x128xf32> -> vector<4x128xf32>
    %c512 = arith.constant 512 : index
    %c0_154 = arith.constant 0 : index
    %582 = vector.load %arg2[%c512, %c0_154] : memref<768x128xf32, #tpu.memory_space<vmem>>, vector<128x128xf32>
    %cst_155 = arith.constant dense<0.000000e+00> : vector<4x128xf32>
    %583 = tpu.matmul %581, %582, %cst_155 {dimension_numbers = #tpu.dot_dimension_numbers<[1], [0], [0], [1], [0, 0, 1, 1], [], []>} : vector<4x128xf32>, vector<128x128xf32>, vector<4x128xf32> -> vector<4x128xf32>
    %c6_156 = arith.constant 6 : index
    %c0_157 = arith.constant 0 : index
    %584 = vector.load %arg4[%c6_156, %c0_157] : memref<8x128xf32, #tpu.memory_space<vmem>>, vector<1x128xf32>
    %585 = vector.broadcast %584 : vector<1x128xf32> to vector<4x128xf32>
    %586 = arith.addf %583, %585 : vector<4x128xf32>
    %c640 = arith.constant 640 : index
    %c0_158 = arith.constant 0 : index
    %587 = vector.load %arg2[%c640, %c0_158] : memref<768x128xf32, #tpu.memory_space<vmem>>, vector<128x128xf32>
    %cst_159 = arith.constant dense<0.000000e+00> : vector<4x128xf32>
    %588 = tpu.matmul %581, %587, %cst_159 {dimension_numbers = #tpu.dot_dimension_numbers<[1], [0], [0], [1], [0, 0, 1, 1], [], []>} : vector<4x128xf32>, vector<128x128xf32>, vector<4x128xf32> -> vector<4x128xf32>
    %c7 = arith.constant 7 : index
    %c0_160 = arith.constant 0 : index
    %589 = vector.load %arg4[%c7, %c0_160] : memref<8x128xf32, #tpu.memory_space<vmem>>, vector<1x128xf32>
    %590 = vector.broadcast %589 : vector<1x128xf32> to vector<4x128xf32>
    %591 = arith.addf %588, %590 : vector<4x128xf32>
    %592 = tpu.concatenate %586, %591 in 0 : vector<4x128xf32>, vector<4x128xf32> -> vector<8x128xf32>
    %c0_161 = arith.constant 0 : index
    %c0_162 = arith.constant 0 : index
    %593 = vector.load %arg6[%c0_161, %c0_162] : memref<8x128xf32, #tpu.memory_space<vmem>>, vector<8x128xf32>
    tpu.vector_store %arg6[%c0_161, %c0_162], %592 {strides = array<i32>} : memref<8x128xf32, #tpu.memory_space<vmem>>, vector<8x128xf32>,
    return
  }
  func.func @transform_0(%arg0: i32) -> (i32, i32) {
    %c0_i32 = arith.constant 0 : i32
    %c0_i32_0 = arith.constant 0 : i32
    %c0_i32_1 = arith.constant 0 : i32
    return %c0_i32, %c0_i32_0 : i32, i32
  }
  func.func @transform_1(%arg0: i32) -> (i32, i32) {
    %c0_i32 = arith.constant 0 : i32
    %c0_i32_0 = arith.constant 0 : i32
    %c0_i32_1 = arith.constant 0 : i32
    return %c0_i32, %c0_i32_0 : i32, i32
  }
  func.func @transform_2(%arg0: i32) -> (i32, i32) {
    %c0_i32 = arith.constant 0 : i32
    %c0_i32_0 = arith.constant 0 : i32
    %c0_i32_1 = arith.constant 0 : i32
    return %c0_i32, %c0_i32_0 : i32, i32
  }
  func.func @transform_3(%arg0: i32) -> (i32, i32) {
    %c0_i32 = arith.constant 0 : i32
    %c0_i32_0 = arith.constant 0 : i32
    %c0_i32_1 = arith.constant 0 : i32
    return %c0_i32, %c0_i32_0 : i32, i32
  }
  func.func @transform_4(%arg0: i32) -> (i32, i32) {
    %c0_i32 = arith.constant 0 : i32
    %c0_i32_0 = arith.constant 0 : i32
    %c0_i32_1 = arith.constant 0 : i32
    return %c0_i32, %c0_i32_0 : i32, i32
  }
  func.func @transform_5(%arg0: i32) -> (i32, i32) {
    %c0_i32 = arith.constant 0 : i32
    %c0_i32_0 = arith.constant 0 : i32
    %c0_i32_1 = arith.constant 0 : i32
    return %c0_i32, %c0_i32_0 : i32, i32
  }
}

</mosaic_0001>

<llo_original>
// kernel: rnn_encoder_forward.3
$region0: #{rnn_encoder_forward.3}
  #allocation0 [shape = 'u32[]', space=smem, size = 0x4, offset = 0x4, fixed_abs, tag = 'smem constant byte address 0x4 - core index']
  #allocation1 [shape = 'u32[144,128]{1,0:T(1,128)}', space=vmem, size = 0x12000, scoped, tag = 'internal scratch']
  #allocation2 [shape = 'f32[32,384]{1,0:T(8,128)}', space=vmem, size = 0xc000, scoped, tag = 'scratch operand']
  #allocation3 [shape = 'f32[34,128]{1,0:T(8,128)}', space=vmem, size = 0x5000, scoped, tag = 'scratch operand']
  %s0 = inlined_call_operand.vmem [shape: f32[32,1], index: 0, kind: input, shape index: {}]
  %s1 = inlined_call_operand.hbm [shape: f32[768,128], index: 1, kind: input, shape index: {}]
  %s2 = inlined_call_operand.hbm [shape: f32[264,384], index: 2, kind: input, shape index: {}]
  %s3 = inlined_call_operand.vmem [shape: f32[8,128], index: 3, kind: input, shape index: {}]
  %s4 = inlined_call_operand.vmem [shape: f32[34,128], index: 4, kind: output, shape index: {0}]
  %s5 = inlined_call_operand.vmem [shape: f32[8,128], index: 5, kind: output, shape index: {1}]
  %6 = xla_tuple %s4, %s5
  %s7 = sld [smem:[#allocation0]]
  $region42: #{rnn_encoder_forward.3} parent=0
    _
  %s9 = ssub.s32 1, %s7
  %s10 = scalar_select 0, %s9, %s7
  $region1: #{rnn_encoder_forward.3} parent=0
    #allocation4 [shape = 'u8[393216]{0}', space=vmem, size = 0x60000, scoped, tag = 'input window, operand 1, single buffered']
    #allocation5 [shape = 's32[1]{0}', space=sflag, size = 0x4, scoped, tag = 'scoped memory for rnn_encoder_forward.3']
    #allocation6 [shape = 'u8[405504]{0}', space=vmem, size = 0x63000, scoped, tag = 'input window, operand 2, single buffered']
    #allocation7 [shape = 's32[1]{0}', space=sflag, size = 0x4, scoped, tag = 'scoped memory for rnn_encoder_forward.3']
    %11 = vsyncpa [#allocation5], 0
    %12 = vsyncpa [#allocation7], 0
    // Predicated region
    $region2: #{rnn_encoder_forward.3} parent=1 // pred_check
      _
    $region3: #{rnn_encoder_forward.3} parent=1 // pred_check_branch
      %14 = sbr.rel (0) target = $region5
    $region4: #{rnn_encoder_forward.3} parent=1 // pred_region
      _
    $region5: #{rnn_encoder_forward.3} parent=1 // pred_fallthru
      _
    // Predicated region
    $region6: #{rnn_encoder_forward.3} parent=1 // pred_check
      _
    $region7: #{rnn_encoder_forward.3} parent=1 // pred_check_branch
      %16 = sbr.rel (0) target = $region9
    $region8: #{rnn_encoder_forward.3} parent=1 // pred_region
      %s18 = ssub.s32 12288, 12288
      %19 = vsyncadd [#allocation5], %s18
      %s20 = sshll.u32 [#allocation4], 4
      %s21 = int_to_ptr.vmem [resolvable:$true] %s20
      %26 = dma.hbm_to_vmem [thread:$0]  %s1, 12288, %s21, [#allocation5], 128, 128, 8
    $region9: #{rnn_encoder_forward.3} parent=1 // pred_fallthru
      _
    // Predicated region
    $region10: #{rnn_encoder_forward.3} parent=1 // pred_check
      _
    $region11: #{rnn_encoder_forward.3} parent=1 // pred_check_branch
      %28 = sbr.rel (0) target = $region13
    $region12: #{rnn_encoder_forward.3} parent=1 // pred_region
      %s30 = ssub.s32 12672, 12672
      %31 = vsyncadd [#allocation7], %s30
      %s32 = sshll.u32 [#allocation6], 4
      %s33 = int_to_ptr.vmem [resolvable:$true] %s32
      %38 = dma.hbm_to_vmem [thread:$0]  %s2, 12672, %s33, [#allocation7], 384, 384, 24
    $region13: #{rnn_encoder_forward.3} parent=1 // pred_fallthru
      _
    // Predicated region
    $region14: #{rnn_encoder_forward.3} parent=1 // pred_check
      _
    $region15: #{rnn_encoder_forward.3} parent=1 // pred_check_branch
      %40 = sbr.rel (0) target = $region17
    $region16: #{rnn_encoder_forward.3} parent=1 // pred_region
      _
    $region17: #{rnn_encoder_forward.3} parent=1 // pred_fallthru
      _
    // Predicated region
    $region18: #{rnn_encoder_forward.3} parent=1 // pred_check
      _
    $region19: #{rnn_encoder_forward.3} parent=1 // pred_check_branch
      %42 = sbr.rel (0) target = $region21
    $region20: #{rnn_encoder_forward.3} parent=1 // pred_region
      %43 = dma.done [#allocation5], 12288
    $region21: #{rnn_encoder_forward.3} parent=1 // pred_fallthru
      _
    // Predicated region
    $region22: #{rnn_encoder_forward.3} parent=1 // pred_check
      _
    $region23: #{rnn_encoder_forward.3} parent=1 // pred_check_branch
      %45 = sbr.rel (0) target = $region25
    $region24: #{rnn_encoder_forward.3} parent=1 // pred_region
      %46 = dma.done [#allocation7], 12672
    $region25: #{rnn_encoder_forward.3} parent=1 // pred_fallthru
      _
    %v47 = vld [vmem:[%s0] sm:$0xff]
    %v48 = vld [vmem:[%s0 + $0x8] sm:$0xff]
    %v49 = vld [vmem:[%s0 + $0x10] sm:$0xff]
    %v50 = vld [vmem:[%s0 + $0x18] sm:$0xff]
    %v51 = vld [vmem:[%s3] sm:$0x1]
    %53 = vset.pattern.permute.xlu0 0
    %54 = vperm.xlu0 %53, %v47
    %v55 = vpop.permute.xlu0 %54
    %58 = vset.pattern.permute.xlu0 0
    %59 = vperm.xlu0 %58, %v48
    %v60 = vpop.permute.xlu0 %59
    %63 = vset.pattern.permute.xlu0 0
    %64 = vperm.xlu0 %63, %v49
    %v65 = vpop.permute.xlu0 %64
    %68 = vset.pattern.permute.xlu0 0
    %69 = vperm.xlu0 %68, %v50
    %v70 = vpop.permute.xlu0 %69
    %v72 = vlaneseq
    %v73 = vshrl.u32 %v72, 7
    %v74 = vsub.s32 0, %v73
    %v75 = vrot.slane %v51, %v74
    %v76 = vmul.f32 %v55, %v75
    %v77 = vmul.f32 %v60, %v75
    %v78 = vmul.f32 %v65, %v75
    %v79 = vmul.f32 %v70, %v75
    %v80 = vld [vmem:[%s3 + $0x1] sm:$0x1]
    %v81 = vlaneseq
    %v82 = vshrl.u32 %v81, 7
    %v83 = vsub.s32 0, %v82
    %v84 = vrot.slane %v80, %v83
    %v85 = vadd.f32 %v76, %v84
    %v86 = vadd.f32 %v77, %v84
    %v87 = vadd.f32 %v78, %v84
    %v88 = vadd.f32 %v79, %v84
    %v89 = vmax.f32 %v85, 0.0
    %v90 = vmax.f32 %v86, 0.0
    %v91 = vmax.f32 %v87, 0.0
    %v92 = vmax.f32 %v88, 0.0
    %v93 = vld [vmem:[#allocation4] sm:$0xff]
    %v94 = vld [vmem:[#allocation4 + $0x8] sm:$0xff]
    %v95 = vld [vmem:[#allocation4 + $0x10] sm:$0xff]
    %v96 = vld [vmem:[#allocation4 + $0x18] sm:$0xff]
    %v97 = vld [vmem:[#allocation4 + $0x20] sm:$0xff]
    %v98 = vld [vmem:[#allocation4 + $0x28] sm:$0xff]
    %v99 = vld [vmem:[#allocation4 + $0x30] sm:$0xff]
    %v100 = vld [vmem:[#allocation4 + $0x38] sm:$0xff]
    %v101 = vld [vmem:[#allocation4 + $0x40] sm:$0xff]
    %v102 = vld [vmem:[#allocation4 + $0x48] sm:$0xff]
    %v103 = vld [vmem:[#allocation4 + $0x50] sm:$0xff]
    %v104 = vld [vmem:[#allocation4 + $0x58] sm:$0xff]
    %v105 = vld [vmem:[#allocation4 + $0x60] sm:$0xff]
    %v106 = vld [vmem:[#allocation4 + $0x68] sm:$0xff]
    %v107 = vld [vmem:[#allocation4 + $0x70] sm:$0xff]
    %v108 = vld [vmem:[#allocation4 + $0x78] sm:$0xff]
    %v109 = vld [vmem:[%s3 + $0x2] sm:$0x1]
    %v110 = vlaneseq
    %v111 = vshrl.u32 %v110, 7
    %v112 = vsub.s32 0, %v111
    %v113 = vrot.slane %v109, %v112
    %v115 = vrot.slane %v92, 6
    %117 = vmatprep.subr.mxu0 0.0
    %118 = vmatpush1.msra.mxu0 %v93
    %119 = vmatprep.subr.mxu0 0.0
    %120 = vmatpush1.msra.mxu0 %v94
    %121 = vmatprep.subr.mxu0 0.0
    %122 = vmatpush1.msra.mxu0 %v95
    %123 = vmatprep.subr.mxu0 0.0
    %124 = vmatpush1.msra.mxu0 %v96
    %125 = vmatprep.subr.mxu0 0.0
    %126 = vmatpush1.msra.mxu0 %v97
    %127 = vmatprep.subr.mxu0 0.0
    %128 = vmatpush1.msra.mxu0 %v98
    %129 = vmatprep.subr.mxu0 0.0
    %130 = vmatpush1.msra.mxu0 %v99
    %131 = vmatprep.subr.mxu0 0.0
    %132 = vmatpush1.msra.mxu0 %v100
    %133 = vmatprep.subr.mxu0 0.0
    %134 = vmatpush1.msra.mxu0 %v101
    %135 = vmatprep.subr.mxu0 0.0
    %136 = vmatpush1.msra.mxu0 %v102
    %137 = vmatprep.subr.mxu0 0.0
    %138 = vmatpush1.msra.mxu0 %v103
    %139 = vmatprep.subr.mxu0 0.0
    %140 = vmatpush1.msra.mxu0 %v104
    %141 = vmatprep.subr.mxu0 0.0
    %142 = vmatpush1.msra.mxu0 %v105
    %143 = vmatprep.subr.mxu0 0.0
    %144 = vmatpush1.msra.mxu0 %v106
    %145 = vmatprep.subr.mxu0 0.0
    %146 = vmatpush1.msra.mxu0 %v107
    %147 = vmatprep.subr.mxu0 0.0
    %148 = vmatpush1.msra.mxu0 %v108
    %149 = vmatprep.subr.mxu0 0.0
    %150 = vmatpush1.msra.mxu0 0.0
    %151 = vmatprep.subr.mxu0 0.0
    %152 = vmatpush1.msra.mxu0 0.0
    %153 = vmatprep.subr.mxu0 0.0
    %154 = vmatpush1.msra.mxu0 0.0
    %155 = vmatprep.subr.mxu0 0.0
    %156 = vmatpush1.msra.mxu0 0.0
    %157 = vmatprep.subr.mxu0 0.0
    %158 = vmatpush1.msra.mxu0 0.0
    %159 = vmatprep.subr.mxu0 0.0
    %160 = vmatpush1.msra.mxu0 0.0
    %161 = vmatprep.subr.mxu0 0.0
    %162 = vmatpush1.msra.mxu0 0.0
    %163 = vmatprep.subr.mxu0 0.0
    %164 = vmatpush1.msra.mxu0 0.0
    %165 = vmatprep.subr.mxu0 0.0
    %166 = vmatpush1.msra.mxu0 0.0
    %167 = vmatprep.subr.mxu0 0.0
    %168 = vmatpush1.msra.mxu0 0.0
    %169 = vmatprep.subr.mxu0 0.0
    %170 = vmatpush1.msra.mxu0 0.0
    %171 = vmatprep.subr.mxu0 0.0
    %172 = vmatpush1.msra.mxu0 0.0
    %173 = vmatprep.subr.mxu0 0.0
    %174 = vmatpush1.msra.mxu0 0.0
    %175 = vmatprep.subr.mxu0 0.0
    %176 = vmatpush1.msra.mxu0 0.0
    %177 = vmatprep.subr.mxu0 0.0
    %178 = vmatpush1.msra.mxu0 0.0
    %179 = vmatprep.subr.mxu0 0.0
    %180 = vmatpush1.msra.mxu0 0.0
    %181 = vmatprep.mubr.f32.mxu0 0.0
    %182 = vmatmul.mubr.f32.gmra.mrb[0].mxu0 %v115
    %v183 = vpop.f32.mrb[0].mxu0
    %v184 = vadd.f32 %v113, %v183
    %v185 = vpop.f32.mrb[0].mxu0
    %186 = vdwg.mxu0
    %v187 = vmax.f32 %v184, 0.0
    %v188 = vld [vmem:[#allocation4 + $0x80] sm:$0xff]
    %v189 = vld [vmem:[#allocation4 + $0x88] sm:$0xff]
    %v190 = vld [vmem:[#allocation4 + $0x90] sm:$0xff]
    %v191 = vld [vmem:[#allocation4 + $0x98] sm:$0xff]
    %v192 = vld [vmem:[#allocation4 + $0xa0] sm:$0xff]
    %v193 = vld [vmem:[#allocation4 + $0xa8] sm:$0xff]
    %v194 = vld [vmem:[#allocation4 + $0xb0] sm:$0xff]
    %v195 = vld [vmem:[#allocation4 + $0xb8] sm:$0xff]
    %v196 = vld [vmem:[#allocation4 + $0xc0] sm:$0xff]
    %v197 = vld [vmem:[#allocation4 + $0xc8] sm:$0xff]
    %v198 = vld [vmem:[#allocation4 + $0xd0] sm:$0xff]
    %v199 = vld [vmem:[#allocation4 + $0xd8] sm:$0xff]
    %v200 = vld [vmem:[#allocation4 + $0xe0] sm:$0xff]
    %v201 = vld [vmem:[#allocation4 + $0xe8] sm:$0xff]
    %v202 = vld [vmem:[#allocation4 + $0xf0] sm:$0xff]
    %v203 = vld [vmem:[#allocation4 + $0xf8] sm:$0xff]
    %v204 = vld [vmem:[%s3 + $0x3] sm:$0x1]
    %v205 = vlaneseq
    %v206 = vshrl.u32 %v205, 7
    %v207 = vsub.s32 0, %v206
    %v208 = vrot.slane %v204, %v207
    %209 = vmatprep.subr.mxu0 0.0
    %210 = vmatpush1.msra.mxu0 %v188
    %211 = vmatprep.subr.mxu0 0.0
    %212 = vmatpush1.msra.mxu0 %v189
    %213 = vmatprep.subr.mxu0 0.0
    %214 = vmatpush1.msra.mxu0 %v190
    %215 = vmatprep.subr.mxu0 0.0
    %216 = vmatpush1.msra.mxu0 %v191
    %217 = vmatprep.subr.mxu0 0.0
    %218 = vmatpush1.msra.mxu0 %v192
    %219 = vmatprep.subr.mxu0 0.0
    %220 = vmatpush1.msra.mxu0 %v193
    %221 = vmatprep.subr.mxu0 0.0
    %222 = vmatpush1.msra.mxu0 %v194
    %223 = vmatprep.subr.mxu0 0.0
    %224 = vmatpush1.msra.mxu0 %v195
    %225 = vmatprep.subr.mxu0 0.0
    %226 = vmatpush1.msra.mxu0 %v196
    %227 = vmatprep.subr.mxu0 0.0
    %228 = vmatpush1.msra.mxu0 %v197
    %229 = vmatprep.subr.mxu0 0.0
    %230 = vmatpush1.msra.mxu0 %v198
    %231 = vmatprep.subr.mxu0 0.0
    %232 = vmatpush1.msra.mxu0 %v199
    %233 = vmatprep.subr.mxu0 0.0
    %234 = vmatpush1.msra.mxu0 %v200
    %235 = vmatprep.subr.mxu0 0.0
    %236 = vmatpush1.msra.mxu0 %v201
    %237 = vmatprep.subr.mxu0 0.0
    %238 = vmatpush1.msra.mxu0 %v202
    %239 = vmatprep.subr.mxu0 0.0
    %240 = vmatpush1.msra.mxu0 %v203
    %241 = vmatprep.subr.mxu0 0.0
    %242 = vmatpush1.msra.mxu0 0.0
    %243 = vmatprep.subr.mxu0 0.0
    %244 = vmatpush1.msra.mxu0 0.0
    %245 = vmatprep.subr.mxu0 0.0
    %246 = vmatpush1.msra.mxu0 0.0
    %247 = vmatprep.subr.mxu0 0.0
    %248 = vmatpush1.msra.mxu0 0.0
    %249 = vmatprep.subr.mxu0 0.0
    %250 = vmatpush1.msra.mxu0 0.0
    %251 = vmatprep.subr.mxu0 0.0
    %252 = vmatpush1.msra.mxu0 0.0
    %253 = vmatprep.subr.mxu0 0.0
    %254 = vmatpush1.msra.mxu0 0.0
    %255 = vmatprep.subr.mxu0 0.0
    %256 = vmatpush1.msra.mxu0 0.0
    %257 = vmatprep.subr.mxu0 0.0
    %258 = vmatpush1.msra.mxu0 0.0
    %259 = vmatprep.subr.mxu0 0.0
    %260 = vmatpush1.msra.mxu0 0.0
    %261 = vmatprep.subr.mxu0 0.0
    %262 = vmatpush1.msra.mxu0 0.0
    %263 = vmatprep.subr.mxu0 0.0
    %264 = vmatpush1.msra.mxu0 0.0
    %265 = vmatprep.subr.mxu0 0.0
    %266 = vmatpush1.msra.mxu0 0.0
    %267 = vmatprep.subr.mxu0 0.0
    %268 = vmatpush1.msra.mxu0 0.0
    %269 = vmatprep.subr.mxu0 0.0
    %270 = vmatpush1.msra.mxu0 0.0
    %271 = vmatprep.subr.mxu0 0.0
    %272 = vmatpush1.msra.mxu0 0.0
    %273 = vmatprep.mubr.f32.mxu0 0.0
    %274 = vmatmul.mubr.f32.gmra.mrb[0].mxu0 %v89
    %v275 = vpop.f32.mrb[0].mxu0
    %v276 = vadd.f32 %v208, %v275
    %v277 = vpop.f32.mrb[0].mxu0
    %278 = vmatprep.mubr.f32.mxu0 0.0
    %279 = vmatmul.mubr.f32.gmra.mrb[0].mxu0 %v90
    %v280 = vpop.f32.mrb[0].mxu0
    %v281 = vadd.f32 %v208, %v280
    %v282 = vpop.f32.mrb[0].mxu0
    %283 = vmatprep.mubr.f32.mxu0 0.0
    %284 = vmatmul.mubr.f32.gmra.mrb[0].mxu0 %v91
    %v285 = vpop.f32.mrb[0].mxu0
    %v286 = vadd.f32 %v208, %v285
    %v287 = vpop.f32.mrb[0].mxu0
    %288 = vmatprep.mubr.f32.mxu0 0.0
    %289 = vmatmul.mubr.f32.gmra.mrb[0].mxu0 %v92
    %v290 = vpop.f32.mrb[0].mxu0
    %v291 = vadd.f32 %v208, %v290
    %v292 = vpop.f32.mrb[0].mxu0
    %293 = vdwg.mxu0
    %v294 = vmax.f32 %v276, 0.0
    %v295 = vmax.f32 %v281, 0.0
    %v296 = vmax.f32 %v286, 0.0
    %v297 = vmax.f32 %v291, 0.0
    %v298 = vld [vmem:[#allocation4 + $0x100] sm:$0xff]
    %v299 = vld [vmem:[#allocation4 + $0x108] sm:$0xff]
    %v300 = vld [vmem:[#allocation4 + $0x110] sm:$0xff]
    %v301 = vld [vmem:[#allocation4 + $0x118] sm:$0xff]
    %v302 = vld [vmem:[#allocation4 + $0x120] sm:$0xff]
    %v303 = vld [vmem:[#allocation4 + $0x128] sm:$0xff]
    %v304 = vld [vmem:[#allocation4 + $0x130] sm:$0xff]
    %v305 = vld [vmem:[#allocation4 + $0x138] sm:$0xff]
    %v306 = vld [vmem:[#allocation4 + $0x140] sm:$0xff]
    %v307 = vld [vmem:[#allocation4 + $0x148] sm:$0xff]
    %v308 = vld [vmem:[#allocation4 + $0x150] sm:$0xff]
    %v309 = vld [vmem:[#allocation4 + $0x158] sm:$0xff]
    %v310 = vld [vmem:[#allocation4 + $0x160] sm:$0xff]
    %v311 = vld [vmem:[#allocation4 + $0x168] sm:$0xff]
    %v312 = vld [vmem:[#allocation4 + $0x170] sm:$0xff]
    %v313 = vld [vmem:[#allocation4 + $0x178] sm:$0xff]
    %v314 = vld [vmem:[%s3 + $0x4] sm:$0x1]
    %v315 = vlaneseq
    %v316 = vshrl.u32 %v315, 7
    %v317 = vsub.s32 0, %v316
    %v318 = vrot.slane %v314, %v317
    %319 = vmatprep.subr.mxu0 0.0
    %320 = vmatpush1.msra.mxu0 %v298
    %321 = vmatprep.subr.mxu0 0.0
    %322 = vmatpush1.msra.mxu0 %v299
    %323 = vmatprep.subr.mxu0 0.0
    %324 = vmatpush1.msra.mxu0 %v300
    %325 = vmatprep.subr.mxu0 0.0
    %326 = vmatpush1.msra.mxu0 %v301
    %327 = vmatprep.subr.mxu0 0.0
    %328 = vmatpush1.msra.mxu0 %v302
    %329 = vmatprep.subr.mxu0 0.0
    %330 = vmatpush1.msra.mxu0 %v303
    %331 = vmatprep.subr.mxu0 0.0
    %332 = vmatpush1.msra.mxu0 %v304
    %333 = vmatprep.subr.mxu0 0.0
    %334 = vmatpush1.msra.mxu0 %v305
    %335 = vmatprep.subr.mxu0 0.0
    %336 = vmatpush1.msra.mxu0 %v306
    %337 = vmatprep.subr.mxu0 0.0
    %338 = vmatpush1.msra.mxu0 %v307
    %339 = vmatprep.subr.mxu0 0.0
    %340 = vmatpush1.msra.mxu0 %v308
    %341 = vmatprep.subr.mxu0 0.0
    %342 = vmatpush1.msra.mxu0 %v309
    %343 = vmatprep.subr.mxu0 0.0
    %344 = vmatpush1.msra.mxu0 %v310
    %345 = vmatprep.subr.mxu0 0.0
    %346 = vmatpush1.msra.mxu0 %v311
    %347 = vmatprep.subr.mxu0 0.0
    %348 = vmatpush1.msra.mxu0 %v312
    %349 = vmatprep.subr.mxu0 0.0
    %350 = vmatpush1.msra.mxu0 %v313
    %351 = vmatprep.subr.mxu0 0.0
    %352 = vmatpush1.msra.mxu0 0.0
    %353 = vmatprep.subr.mxu0 0.0
    %354 = vmatpush1.msra.mxu0 0.0
    %355 = vmatprep.subr.mxu0 0.0
    %356 = vmatpush1.msra.mxu0 0.0
    %357 = vmatprep.subr.mxu0 0.0
    %358 = vmatpush1.msra.mxu0 0.0
    %359 = vmatprep.subr.mxu0 0.0
    %360 = vmatpush1.msra.mxu0 0.0
    %361 = vmatprep.subr.mxu0 0.0
    %362 = vmatpush1.msra.mxu0 0.0
    %363 = vmatprep.subr.mxu0 0.0
    %364 = vmatpush1.msra.mxu0 0.0
    %365 = vmatprep.subr.mxu0 0.0
    %366 = vmatpush1.msra.mxu0 0.0
    %367 = vmatprep.subr.mxu0 0.0
    %368 = vmatpush1.msra.mxu0 0.0
    %369 = vmatprep.subr.mxu0 0.0
    %370 = vmatpush1.msra.mxu0 0.0
    %371 = vmatprep.subr.mxu0 0.0
    %372 = vmatpush1.msra.mxu0 0.0
    %373 = vmatprep.subr.mxu0 0.0
    %374 = vmatpush1.msra.mxu0 0.0
    %375 = vmatprep.subr.mxu0 0.0
    %376 = vmatpush1.msra.mxu0 0.0
    %377 = vmatprep.subr.mxu0 0.0
    %378 = vmatpush1.msra.mxu0 0.0
    %379 = vmatprep.subr.mxu0 0.0
    %380 = vmatpush1.msra.mxu0 0.0
    %381 = vmatprep.subr.mxu0 0.0
    %382 = vmatpush1.msra.mxu0 0.0
    %383 = vmatprep.mubr.f32.mxu0 0.0
    %384 = vmatmul.mubr.f32.gmra.mrb[0].mxu0 %v294
    %v385 = vpop.f32.mrb[0].mxu0
    %v386 = vadd.f32 %v318, %v385
    %v387 = vpop.f32.mrb[0].mxu0
    %388 = vmatprep.mubr.f32.mxu0 0.0
    %389 = vmatmul.mubr.f32.gmra.mrb[0].mxu0 %v295
    %v390 = vpop.f32.mrb[0].mxu0
    %v391 = vadd.f32 %v318, %v390
    %v392 = vpop.f32.mrb[0].mxu0
    %393 = vmatprep.mubr.f32.mxu0 0.0
    %394 = vmatmul.mubr.f32.gmra.mrb[0].mxu0 %v296
    %v395 = vpop.f32.mrb[0].mxu0
    %v396 = vadd.f32 %v318, %v395
    %v397 = vpop.f32.mrb[0].mxu0
    %398 = vmatprep.mubr.f32.mxu0 0.0
    %399 = vmatmul.mubr.f32.gmra.mrb[0].mxu0 %v297
    %v400 = vpop.f32.mrb[0].mxu0
    %v401 = vadd.f32 %v318, %v400
    %v402 = vpop.f32.mrb[0].mxu0
    %403 = vdwg.mxu0
    %v404 = vmax.f32 %v386, 0.0
    %v405 = vmax.f32 %v391, 0.0
    %v406 = vmax.f32 %v396, 0.0
    %v407 = vmax.f32 %v401, 0.0
    %v408 = vld [vmem:[#allocation6] ss:$8 sm:$0x7]
    %s409 = scalar_lea.vmem [#allocation6], 1
    %v410 = vld [vmem:[%s409] ss:$8 sm:$0x7]
    %v411 = vld [vmem:[#allocation6 + $0x18] sm:$0xff]
    %v412 = vld [vmem:[#allocation6 + $0x20] sm:$0xff]
    %v413 = vld [vmem:[#allocation6 + $0x28] sm:$0xff]
    %v414 = vld [vmem:[#allocation6 + $0x30] sm:$0xff]
    %v415 = vld [vmem:[#allocation6 + $0x38] sm:$0xff]
    %v416 = vld [vmem:[#allocation6 + $0x40] sm:$0xff]
    %v417 = vld [vmem:[#allocation6 + $0x48] sm:$0xff]
    %v418 = vld [vmem:[#allocation6 + $0x50] sm:$0xff]
    %v419 = vld [vmem:[#allocation6 + $0x58] sm:$0xff]
    %v420 = vld [vmem:[#allocation6 + $0x60] sm:$0xff]
    %v421 = vld [vmem:[#allocation6 + $0x68] sm:$0xff]
    %v422 = vld [vmem:[#allocation6 + $0x70] sm:$0xff]
    %v423 = vld [vmem:[#allocation6 + $0x78] sm:$0xff]
    %v424 = vld [vmem:[#allocation6 + $0x80] sm:$0xff]
    %v425 = vld [vmem:[#allocation6 + $0x88] sm:$0xff]
    %v426 = vld [vmem:[#allocation6 + $0x90] sm:$0xff]
    %v427 = vld [vmem:[#allocation6 + $0x98] sm:$0xff]
    %v428 = vld [vmem:[#allocation6 + $0xa0] sm:$0xff]
    %v429 = vld [vmem:[#allocation6 + $0xa8] sm:$0xff]
    %v430 = vld [vmem:[#allocation6 + $0xb0] sm:$0xff]
    %v431 = vld [vmem:[#allocation6 + $0xb8] sm:$0xff]
    %v432 = vld [vmem:[#allocation6 + $0xc0] sm:$0xff]
    %v433 = vld [vmem:[#allocation6 + $0xc8] sm:$0xff]
    %v434 = vld [vmem:[#allocation6 + $0xd0] sm:$0xff]
    %v435 = vld [vmem:[#allocation6 + $0xd8] sm:$0xff]
    %v436 = vld [vmem:[#allocation6 + $0xe0] sm:$0xff]
    %v437 = vld [vmem:[#allocation6 + $0xe8] sm:$0xff]
    %v438 = vld [vmem:[#allocation6 + $0xf0] sm:$0xff]
    %v439 = vld [vmem:[#allocation6 + $0xf8] sm:$0xff]
    %v440 = vld [vmem:[#allocation6 + $0x100] sm:$0xff]
    %v441 = vld [vmem:[#allocation6 + $0x108] sm:$0xff]
    %v442 = vld [vmem:[#allocation6 + $0x110] sm:$0xff]
    %v443 = vld [vmem:[#allocation6 + $0x118] sm:$0xff]
    %v444 = vld [vmem:[#allocation6 + $0x120] sm:$0xff]
    %v445 = vld [vmem:[#allocation6 + $0x128] sm:$0xff]
    %v446 = vld [vmem:[#allocation6 + $0x130] sm:$0xff]
    %v447 = vld [vmem:[#allocation6 + $0x138] sm:$0xff]
    %v448 = vld [vmem:[#allocation6 + $0x140] sm:$0xff]
    %v449 = vld [vmem:[#allocation6 + $0x148] sm:$0xff]
    %v450 = vld [vmem:[#allocation6 + $0x150] sm:$0xff]
    %v451 = vld [vmem:[#allocation6 + $0x158] sm:$0xff]
    %v452 = vld [vmem:[#allocation6 + $0x160] sm:$0xff]
    %v453 = vld [vmem:[#allocation6 + $0x168] sm:$0xff]
    %v454 = vld [vmem:[#allocation6 + $0x170] sm:$0xff]
    %v455 = vld [vmem:[#allocation6 + $0x178] sm:$0xff]
    %v456 = vld [vmem:[#allocation6 + $0x180] sm:$0xff]
    %v457 = vld [vmem:[#allocation6 + $0x188] sm:$0xff]
    %v458 = vld [vmem:[#allocation6 + $0x190] sm:$0xff]
    %v460 = vlaneseq
    %v461 = vshrl.u32 %v460, 7
    %v462 = vsub.s32 0, %v461
    %v463 = vrot.slane %v408, %v462
    %v464 = vlaneseq
    %v465 = vshrl.u32 %v464, 7
    %v466 = vsub.s32 1, %v465
    %v467 = vrot.slane %v408, %v466
    %v468 = vlaneseq
    %v469 = vshrl.u32 %v468, 7
    %v470 = vsub.s32 2, %v469
    %v471 = vrot.slane %v408, %v470
    %475 = vmatprep.subr.mxu0 %v412
    %476 = vmatpush1.msra.mxu0 %v411
    %477 = vmatprep.subr.mxu0 %v415
    %478 = vmatpush1.msra.mxu0 %v414
    %479 = vmatprep.subr.mxu0 %v418
    %480 = vmatpush1.msra.mxu0 %v417
    %481 = vmatprep.subr.mxu0 %v421
    %482 = vmatpush1.msra.mxu0 %v420
    %483 = vmatprep.subr.mxu0 %v424
    %484 = vmatpush1.msra.mxu0 %v423
    %485 = vmatprep.subr.mxu0 %v427
    %486 = vmatpush1.msra.mxu0 %v426
    %487 = vmatprep.subr.mxu0 %v430
    %488 = vmatpush1.msra.mxu0 %v429
    %489 = vmatprep.subr.mxu0 %v433
    %490 = vmatpush1.msra.mxu0 %v432
    %491 = vmatprep.subr.mxu0 %v436
    %492 = vmatpush1.msra.mxu0 %v435
    %493 = vmatprep.subr.mxu0 %v439
    %494 = vmatpush1.msra.mxu0 %v438
    %495 = vmatprep.subr.mxu0 %v442
    %496 = vmatpush1.msra.mxu0 %v441
    %497 = vmatprep.subr.mxu0 %v445
    %498 = vmatpush1.msra.mxu0 %v444
    %499 = vmatprep.subr.mxu0 %v448
    %500 = vmatpush1.msra.mxu0 %v447
    %501 = vmatprep.subr.mxu0 %v451
    %502 = vmatpush1.msra.mxu0 %v450
    %503 = vmatprep.subr.mxu0 %v454
    %504 = vmatpush1.msra.mxu0 %v453
    %505 = vmatprep.subr.mxu0 %v457
    %506 = vmatpush1.msra.mxu0 %v456
    %507 = vmatprep.subr.mxu0 0.0
    %508 = vmatpush1.msra.mxu0 0.0
    %509 = vmatprep.subr.mxu0 0.0
    %510 = vmatpush1.msra.mxu0 0.0
    %511 = vmatprep.subr.mxu0 0.0
    %512 = vmatpush1.msra.mxu0 0.0
    %513 = vmatprep.subr.mxu0 0.0
    %514 = vmatpush1.msra.mxu0 0.0
    %515 = vmatprep.subr.mxu0 0.0
    %516 = vmatpush1.msra.mxu0 0.0
    %517 = vmatprep.subr.mxu0 0.0
    %518 = vmatpush1.msra.mxu0 0.0
    %519 = vmatprep.subr.mxu0 0.0
    %520 = vmatpush1.msra.mxu0 0.0
    %521 = vmatprep.subr.mxu0 0.0
    %522 = vmatpush1.msra.mxu0 0.0
    %523 = vmatprep.subr.mxu0 0.0
    %524 = vmatpush1.msra.mxu0 0.0
    %525 = vmatprep.subr.mxu0 0.0
    %526 = vmatpush1.msra.mxu0 0.0
    %527 = vmatprep.subr.mxu0 0.0
    %528 = vmatpush1.msra.mxu0 0.0
    %529 = vmatprep.subr.mxu0 0.0
    %530 = vmatpush1.msra.mxu0 0.0
    %531 = vmatprep.subr.mxu0 0.0
    %532 = vmatpush1.msra.mxu0 0.0
    %533 = vmatprep.subr.mxu0 0.0
    %534 = vmatpush1.msra.mxu0 0.0
    %535 = vmatprep.subr.mxu0 0.0
    %536 = vmatpush1.msra.mxu0 0.0
    %537 = vmatprep.subr.mxu0 0.0
    %538 = vmatpush1.msra.mxu0 0.0
    %539 = vmatprep.mubr.f32.mxu0 0.0
    %540 = vmatmul.mubr.f32.gmra.mrb[0].mxu0 %v404
    %v541 = vpop.f32.mrb[0].mxu0
    %v542 = vadd.f32 %v463, %v541
    %v543 = vpop.f32.mrb[0].mxu0
    %v544 = vadd.f32 %v467, %v543
    %545 = vmatprep.mubr.f32.mxu0 0.0
    %546 = vmatmul.mubr.f32.gmra.mrb[0].mxu0 %v405
    %v547 = vpop.f32.mrb[0].mxu0
    %v548 = vadd.f32 %v463, %v547
    %v549 = vpop.f32.mrb[0].mxu0
    %v550 = vadd.f32 %v467, %v549
    %551 = vmatprep.mubr.f32.mxu0 0.0
    %552 = vmatmul.mubr.f32.gmra.mrb[0].mxu0 %v406
    %v553 = vpop.f32.mrb[0].mxu0
    %v554 = vadd.f32 %v463, %v553
    %v555 = vpop.f32.mrb[0].mxu0
    %v556 = vadd.f32 %v467, %v555
    %557 = vmatprep.mubr.f32.mxu0 0.0
    %558 = vmatmul.mubr.f32.gmra.mrb[0].mxu0 %v407
    %v559 = vpop.f32.mrb[0].mxu0
    %v560 = vadd.f32 %v463, %v559
    %v561 = vpop.f32.mrb[0].mxu0
    %v562 = vadd.f32 %v467, %v561
    %563 = vdwg.mxu0
    %564 = vmatprep.subr.mxu0 0.0
    %565 = vmatpush1.msra.mxu0 %v413
    %566 = vmatprep.subr.mxu0 0.0
    %567 = vmatpush1.msra.mxu0 %v416
    %568 = vmatprep.subr.mxu0 0.0
    %569 = vmatpush1.msra.mxu0 %v419
    %570 = vmatprep.subr.mxu0 0.0
    %571 = vmatpush1.msra.mxu0 %v422
    %572 = vmatprep.subr.mxu0 0.0
    %573 = vmatpush1.msra.mxu0 %v425
    %574 = vmatprep.subr.mxu0 0.0
    %575 = vmatpush1.msra.mxu0 %v428
    %576 = vmatprep.subr.mxu0 0.0
    %577 = vmatpush1.msra.mxu0 %v431
    %578 = vmatprep.subr.mxu0 0.0
    %579 = vmatpush1.msra.mxu0 %v434
    %580 = vmatprep.subr.mxu0 0.0
    %581 = vmatpush1.msra.mxu0 %v437
    %582 = vmatprep.subr.mxu0 0.0
    %583 = vmatpush1.msra.mxu0 %v440
    %584 = vmatprep.subr.mxu0 0.0
    %585 = vmatpush1.msra.mxu0 %v443
    %586 = vmatprep.subr.mxu0 0.0
    %587 = vmatpush1.msra.mxu0 %v446
    %588 = vmatprep.subr.mxu0 0.0
    %589 = vmatpush1.msra.mxu0 %v449
    %590 = vmatprep.subr.mxu0 0.0
    %591 = vmatpush1.msra.mxu0 %v452
    %592 = vmatprep.subr.mxu0 0.0
    %593 = vmatpush1.msra.mxu0 %v455
    %594 = vmatprep.subr.mxu0 0.0
    %595 = vmatpush1.msra.mxu0 %v458
    %596 = vmatprep.subr.mxu0 0.0
    %597 = vmatpush1.msra.mxu0 0.0
    %598 = vmatprep.subr.mxu0 0.0
    %599 = vmatpush1.msra.mxu0 0.0
    %600 = vmatprep.subr.mxu0 0.0
    %601 = vmatpush1.msra.mxu0 0.0
    %602 = vmatprep.subr.mxu0 0.0
    %603 = vmatpush1.msra.mxu0 0.0
    %604 = vmatprep.subr.mxu0 0.0
    %605 = vmatpush1.msra.mxu0 0.0
    %606 = vmatprep.subr.mxu0 0.0
    %607 = vmatpush1.msra.mxu0 0.0
    %608 = vmatprep.subr.mxu0 0.0
    %609 = vmatpush1.msra.mxu0 0.0
    %610 = vmatprep.subr.mxu0 0.0
    %611 = vmatpush1.msra.mxu0 0.0
    %612 = vmatprep.subr.mxu0 0.0
    %613 = vmatpush1.msra.mxu0 0.0
    %614 = vmatprep.subr.mxu0 0.0
    %615 = vmatpush1.msra.mxu0 0.0
    %616 = vmatprep.subr.mxu0 0.0
    %617 = vmatpush1.msra.mxu0 0.0
    %618 = vmatprep.subr.mxu0 0.0
    %619 = vmatpush1.msra.mxu0 0.0
    %620 = vmatprep.subr.mxu0 0.0
    %621 = vmatpush1.msra.mxu0 0.0
    %622 = vmatprep.subr.mxu0 0.0
    %623 = vmatpush1.msra.mxu0 0.0
    %624 = vmatprep.subr.mxu0 0.0
    %625 = vmatpush1.msra.mxu0 0.0
    %626 = vmatprep.subr.mxu0 0.0
    %627 = vmatpush1.msra.mxu0 0.0
    %628 = vmatprep.mubr.f32.mxu0 0.0
    %629 = vmatmul.mubr.f32.gmra.mrb[0].mxu0 %v404
    %v630 = vpop.f32.mrb[0].mxu0
    %v631 = vadd.f32 %v471, %v630
    %v632 = vpop.f32.mrb[0].mxu0
    %633 = vmatprep.mubr.f32.mxu0 0.0
    %634 = vmatmul.mubr.f32.gmra.mrb[0].mxu0 %v405
    %v635 = vpop.f32.mrb[0].mxu0
    %v636 = vadd.f32 %v471, %v635
    %v637 = vpop.f32.mrb[0].mxu0
    %638 = vmatprep.mubr.f32.mxu0 0.0
    %639 = vmatmul.mubr.f32.gmra.mrb[0].mxu0 %v406
    %v640 = vpop.f32.mrb[0].mxu0
    %v641 = vadd.f32 %v471, %v640
    %v642 = vpop.f32.mrb[0].mxu0
    %643 = vmatprep.mubr.f32.mxu0 0.0
    %644 = vmatmul.mubr.f32.gmra.mrb[0].mxu0 %v407
    %v645 = vpop.f32.mrb[0].mxu0
    %v646 = vadd.f32 %v471, %v645
    %v647 = vpop.f32.mrb[0].mxu0
    %648 = vdwg.mxu0
    %649 = vst [vmem:[#allocation2] sm:$0xff] %v542
    %650 = vst [vmem:[#allocation2 + $0x8] sm:$0xff] %v544
    %651 = vst [vmem:[#allocation2 + $0x10] sm:$0xff] %v631
    %652 = vst [vmem:[#allocation2 + $0x18] sm:$0xff] %v548
    %653 = vst [vmem:[#allocation2 + $0x20] sm:$0xff] %v550
    %654 = vst [vmem:[#allocation2 + $0x28] sm:$0xff] %v636
    %655 = vst [vmem:[#allocation2 + $0x30] sm:$0xff] %v554
    %656 = vst [vmem:[#allocation2 + $0x38] sm:$0xff] %v556
    %657 = vst [vmem:[#allocation2 + $0x40] sm:$0xff] %v641
    %658 = vst [vmem:[#allocation2 + $0x48] sm:$0xff] %v560
    %659 = vst [vmem:[#allocation2 + $0x50] sm:$0xff] %v562
    %660 = vst [vmem:[#allocation2 + $0x58] sm:$0xff] %v646
    %v661 = vld [vmem:[#allocation6 + $0x198] sm:$0xff]
    %v662 = vld [vmem:[#allocation6 + $0x1a0] sm:$0xff]
    %v663 = vld [vmem:[#allocation6 + $0x1a8] sm:$0xff]
    %v664 = vld [vmem:[#allocation6 + $0x1b0] sm:$0xff]
    %v665 = vld [vmem:[#allocation6 + $0x1b8] sm:$0xff]
    %v666 = vld [vmem:[#allocation6 + $0x1c0] sm:$0xff]
    %v667 = vld [vmem:[#allocation6 + $0x1c8] sm:$0xff]
    %v668 = vld [vmem:[#allocation6 + $0x1d0] sm:$0xff]
    %v669 = vld [vmem:[#allocation6 + $0x1d8] sm:$0xff]
    %v670 = vld [vmem:[#allocation6 + $0x1e0] sm:$0xff]
    %v671 = vld [vmem:[#allocation6 + $0x1e8] sm:$0xff]
    %v672 = vld [vmem:[#allocation6 + $0x1f0] sm:$0xff]
    %v673 = vld [vmem:[#allocation6 + $0x1f8] sm:$0xff]
    %v674 = vld [vmem:[#allocation6 + $0x200] sm:$0xff]
    %v675 = vld [vmem:[#allocation6 + $0x208] sm:$0xff]
    %v676 = vld [vmem:[#allocation6 + $0x210] sm:$0xff]
    %v677 = vld [vmem:[#allocation6 + $0x218] sm:$0xff]
    %v678 = vld [vmem:[#allocation6 + $0x220] sm:$0xff]
    %v679 = vld [vmem:[#allocation6 + $0x228] sm:$0xff]
    %v680 = vld [vmem:[#allocation6 + $0x230] sm:$0xff]
    %v681 = vld [vmem:[#allocation6 + $0x238] sm:$0xff]
    %v682 = vld [vmem:[#allocation6 + $0x240] sm:$0xff]
    %v683 = vld [vmem:[#allocation6 + $0x248] sm:$0xff]
    %v684 = vld [vmem:[#allocation6 + $0x250] sm:$0xff]
    %v685 = vld [vmem:[#allocation6 + $0x258] sm:$0xff]
    %v686 = vld [vmem:[#allocation6 + $0x260] sm:$0xff]
    %v687 = vld [vmem:[#allocation6 + $0x268] sm:$0xff]
    %v688 = vld [vmem:[#allocation6 + $0x270] sm:$0xff]
    %v689 = vld [vmem:[#allocation6 + $0x278] sm:$0xff]
    %v690 = vld [vmem:[#allocation6 + $0x280] sm:$0xff]
    %v691 = vld [vmem:[#allocation6 + $0x288] sm:$0xff]
    %v692 = vld [vmem:[#allocation6 + $0x290] sm:$0xff]
    %v693 = vld [vmem:[#allocation6 + $0x298] sm:$0xff]
    %v694 = vld [vmem:[#allocation6 + $0x2a0] sm:$0xff]
    %v695 = vld [vmem:[#allocation6 + $0x2a8] sm:$0xff]
    %v696 = vld [vmem:[#allocation6 + $0x2b0] sm:$0xff]
    %v697 = vld [vmem:[#allocation6 + $0x2b8] sm:$0xff]
    %v698 = vld [vmem:[#allocation6 + $0x2c0] sm:$0xff]
    %v699 = vld [vmem:[#allocation6 + $0x2c8] sm:$0xff]
    %v700 = vld [vmem:[#allocation6 + $0x2d0] sm:$0xff]
    %v701 = vld [vmem:[#allocation6 + $0x2d8] sm:$0xff]
    %v702 = vld [vmem:[#allocation6 + $0x2e0] sm:$0xff]
    %v703 = vld [vmem:[#allocation6 + $0x2e8] sm:$0xff]
    %v704 = vld [vmem:[#allocation6 + $0x2f0] sm:$0xff]
    %v705 = vld [vmem:[#allocation6 + $0x2f8] sm:$0xff]
    %v706 = vld [vmem:[#allocation6 + $0x300] sm:$0xff]
    %v707 = vld [vmem:[#allocation6 + $0x308] sm:$0xff]
    %v708 = vld [vmem:[#allocation6 + $0x310] sm:$0xff]
    %709 = vst [vmem:[#allocation3 + $0x20] sm:$0x3] %v187
    %v710 = vld [vmem:[#allocation2] sm:$0x3]
    %v711 = vld [vmem:[#allocation2 + $0x8] sm:$0x3]
    %v712 = vld [vmem:[#allocation2 + $0x10] sm:$0x3]
    %v714 = vlaneseq
    %v715 = vshrl.u32 %v714, 7
    %v716 = vsub.s32 0, %v715
    %v717 = vrot.slane %v410, %v716
    %v718 = vlaneseq
    %v719 = vshrl.u32 %v718, 7
    %v720 = vsub.s32 1, %v719
    %v721 = vrot.slane %v410, %v720
    %v722 = vlaneseq
    %v723 = vshrl.u32 %v722, 7
    %v724 = vsub.s32 2, %v723
    %v725 = vrot.slane %v410, %v724
    %729 = vmatprep.subr.mxu0 %v662
    %730 = vmatpush1.msra.mxu0 %v661
    %731 = vmatprep.subr.mxu0 %v665
    %732 = vmatpush1.msra.mxu0 %v664
    %733 = vmatprep.subr.mxu0 %v668
    %734 = vmatpush1.msra.mxu0 %v667
    %735 = vmatprep.subr.mxu0 %v671
    %736 = vmatpush1.msra.mxu0 %v670
    %737 = vmatprep.subr.mxu0 %v674
    %738 = vmatpush1.msra.mxu0 %v673
    %739 = vmatprep.subr.mxu0 %v677
    %740 = vmatpush1.msra.mxu0 %v676
    %741 = vmatprep.subr.mxu0 %v680
    %742 = vmatpush1.msra.mxu0 %v679
    %743 = vmatprep.subr.mxu0 %v683
    %744 = vmatpush1.msra.mxu0 %v682
    %745 = vmatprep.subr.mxu0 %v686
    %746 = vmatpush1.msra.mxu0 %v685
    %747 = vmatprep.subr.mxu0 %v689
    %748 = vmatpush1.msra.mxu0 %v688
    %749 = vmatprep.subr.mxu0 %v692
    %750 = vmatpush1.msra.mxu0 %v691
    %751 = vmatprep.subr.mxu0 %v695
    %752 = vmatpush1.msra.mxu0 %v694
    %753 = vmatprep.subr.mxu0 %v698
    %754 = vmatpush1.msra.mxu0 %v697
    %755 = vmatprep.subr.mxu0 %v701
    %756 = vmatpush1.msra.mxu0 %v700
    %757 = vmatprep.subr.mxu0 %v704
    %758 = vmatpush1.msra.mxu0 %v703
    %759 = vmatprep.subr.mxu0 %v707
    %760 = vmatpush1.msra.mxu0 %v706
    %761 = vmatprep.subr.mxu0 0.0
    %762 = vmatpush1.msra.mxu0 0.0
    %763 = vmatprep.subr.mxu0 0.0
    %764 = vmatpush1.msra.mxu0 0.0
    %765 = vmatprep.subr.mxu0 0.0
    %766 = vmatpush1.msra.mxu0 0.0
    %767 = vmatprep.subr.mxu0 0.0
    %768 = vmatpush1.msra.mxu0 0.0
    %769 = vmatprep.subr.mxu0 0.0
    %770 = vmatpush1.msra.mxu0 0.0
    %771 = vmatprep.subr.mxu0 0.0
    %772 = vmatpush1.msra.mxu0 0.0
    %773 = vmatprep.subr.mxu0 0.0
    %774 = vmatpush1.msra.mxu0 0.0
    %775 = vmatprep.subr.mxu0 0.0
    %776 = vmatpush1.msra.mxu0 0.0
    %777 = vmatprep.subr.mxu0 0.0
    %778 = vmatpush1.msra.mxu0 0.0
    %779 = vmatprep.subr.mxu0 0.0
    %780 = vmatpush1.msra.mxu0 0.0
    %781 = vmatprep.subr.mxu0 0.0
    %782 = vmatpush1.msra.mxu0 0.0
    %783 = vmatprep.subr.mxu0 0.0
    %784 = vmatpush1.msra.mxu0 0.0
    %785 = vmatprep.subr.mxu0 0.0
    %786 = vmatpush1.msra.mxu0 0.0
    %787 = vmatprep.subr.mxu0 0.0
    %788 = vmatpush1.msra.mxu0 0.0
    %789 = vmatprep.subr.mxu0 0.0
    %790 = vmatpush1.msra.mxu0 0.0
    %791 = vmatprep.subr.mxu0 0.0
    %792 = vmatpush1.msra.mxu0 0.0
    %793 = vmatprep.mubr.f32.mxu0 0.0
    %794 = vmatmul.mubr.f32.gmra.mrb[0].mxu0 %v187
    %v795 = vpop.f32.mrb[0].mxu0
    %v796 = vadd.f32 %v717, %v795
    %v797 = vpop.f32.mrb[0].mxu0
    %v798 = vadd.f32 %v721, %v797
    %799 = vdwg.mxu0
    %800 = vmatprep.subr.mxu0 0.0
    %801 = vmatpush1.msra.mxu0 %v663
    %802 = vmatprep.subr.mxu0 0.0
    %803 = vmatpush1.msra.mxu0 %v666
    %804 = vmatprep.subr.mxu0 0.0
    %805 = vmatpush1.msra.mxu0 %v669
    %806 = vmatprep.subr.mxu0 0.0
    %807 = vmatpush1.msra.mxu0 %v672
    %808 = vmatprep.subr.mxu0 0.0
    %809 = vmatpush1.msra.mxu0 %v675
    %810 = vmatprep.subr.mxu0 0.0
    %811 = vmatpush1.msra.mxu0 %v678
    %812 = vmatprep.subr.mxu0 0.0
    %813 = vmatpush1.msra.mxu0 %v681
    %814 = vmatprep.subr.mxu0 0.0
    %815 = vmatpush1.msra.mxu0 %v684
    %816 = vmatprep.subr.mxu0 0.0
    %817 = vmatpush1.msra.mxu0 %v687
    %818 = vmatprep.subr.mxu0 0.0
    %819 = vmatpush1.msra.mxu0 %v690
    %820 = vmatprep.subr.mxu0 0.0
    %821 = vmatpush1.msra.mxu0 %v693
    %822 = vmatprep.subr.mxu0 0.0
    %823 = vmatpush1.msra.mxu0 %v696
    %824 = vmatprep.subr.mxu0 0.0
    %825 = vmatpush1.msra.mxu0 %v699
    %826 = vmatprep.subr.mxu0 0.0
    %827 = vmatpush1.msra.mxu0 %v702
    %828 = vmatprep.subr.mxu0 0.0
    %829 = vmatpush1.msra.mxu0 %v705
    %830 = vmatprep.subr.mxu0 0.0
    %831 = vmatpush1.msra.mxu0 %v708
    %832 = vmatprep.subr.mxu0 0.0
    %833 = vmatpush1.msra.mxu0 0.0
    %834 = vmatprep.subr.mxu0 0.0
    %835 = vmatpush1.msra.mxu0 0.0
    %836 = vmatprep.subr.mxu0 0.0
    %837 = vmatpush1.msra.mxu0 0.0
    %838 = vmatprep.subr.mxu0 0.0
    %839 = vmatpush1.msra.mxu0 0.0
    %840 = vmatprep.subr.mxu0 0.0
    %841 = vmatpush1.msra.mxu0 0.0
    %842 = vmatprep.subr.mxu0 0.0
    %843 = vmatpush1.msra.mxu0 0.0
    %844 = vmatprep.subr.mxu0 0.0
    %845 = vmatpush1.msra.mxu0 0.0
    %846 = vmatprep.subr.mxu0 0.0
    %847 = vmatpush1.msra.mxu0 0.0
    %848 = vmatprep.subr.mxu0 0.0
    %849 = vmatpush1.msra.mxu0 0.0
    %850 = vmatprep.subr.mxu0 0.0
    %851 = vmatpush1.msra.mxu0 0.0
    %852 = vmatprep.subr.mxu0 0.0
    %853 = vmatpush1.msra.mxu0 0.0
    %854 = vmatprep.subr.mxu0 0.0
    %855 = vmatpush1.msra.mxu0 0.0
    %856 = vmatprep.subr.mxu0 0.0
    %857 = vmatpush1.msra.mxu0 0.0
    %858 = vmatprep.subr.mxu0 0.0
    %859 = vmatpush1.msra.mxu0 0.0
    %860 = vmatprep.subr.mxu0 0.0
    %861 = vmatpush1.msra.mxu0 0.0
    %862 = vmatprep.subr.mxu0 0.0
    %863 = vmatpush1.msra.mxu0 0.0
    %864 = vmatprep.mubr.f32.mxu0 0.0
    %865 = vmatmul.mubr.f32.gmra.mrb[0].mxu0 %v187
    %v866 = vpop.f32.mrb[0].mxu0
    %v867 = vadd.f32 %v725, %v866
    %v868 = vpop.f32.mrb[0].mxu0
    %869 = vdwg.mxu0
    %v870 = vadd.f32 %v710, %v796
    %v871 = vxor.u32 %v870, 2147483648
    %v872 = vmul.f32 %v871, 1.442695
    %v873 = vpow.pop %v872
    %v874 = vadd.f32 %v873, 1.0
    %v875 = vrcp.pop %v874
    %v876 = vmul.f32 1.0, %v875
    %v877 = vadd.f32 %v711, %v798
    %v878 = vxor.u32 %v877, 2147483648
    %v879 = vmul.f32 %v878, 1.442695
    %v880 = vpow.pop %v879
    %v881 = vadd.f32 %v880, 1.0
    %v882 = vrcp.pop %v881
    %v883 = vmul.f32 1.0, %v882
    %v884 = vmul.f32 %v876, %v867
    %v885 = vadd.f32 %v712, %v884
    %v886 = vtanh.pop %v885
    %v887 = vsub.f32 1.0, %v883
    %v888 = vmul.f32 %v887, %v886
    %v889 = vmul.f32 %v883, %v187
    %v890 = vadd.f32 %v888, %v889
    %891 = vst [vmem:[#allocation3] sm:$0x3] %v890
    %v892 = vld [vmem:[#allocation2] sm:$0xc]
    %v893 = vld [vmem:[#allocation2 + $0x8] sm:$0xc]
    %v894 = vld [vmem:[#allocation2 + $0x10] sm:$0xc]
    %895 = vmatprep.subr.mxu0 %v662
    %896 = vmatpush1.msra.mxu0 %v661
    %897 = vmatprep.subr.mxu0 %v665
    %898 = vmatpush1.msra.mxu0 %v664
    %899 = vmatprep.subr.mxu0 %v668
    %900 = vmatpush1.msra.mxu0 %v667
    %901 = vmatprep.subr.mxu0 %v671
    %902 = vmatpush1.msra.mxu0 %v670
    %903 = vmatprep.subr.mxu0 %v674
    %904 = vmatpush1.msra.mxu0 %v673
    %905 = vmatprep.subr.mxu0 %v677
    %906 = vmatpush1.msra.mxu0 %v676
    %907 = vmatprep.subr.mxu0 %v680
    %908 = vmatpush1.msra.mxu0 %v679
    %909 = vmatprep.subr.mxu0 %v683
    %910 = vmatpush1.msra.mxu0 %v682
    %911 = vmatprep.subr.mxu0 %v686
    %912 = vmatpush1.msra.mxu0 %v685
    %913 = vmatprep.subr.mxu0 %v689
    %914 = vmatpush1.msra.mxu0 %v688
    %915 = vmatprep.subr.mxu0 %v692
    %916 = vmatpush1.msra.mxu0 %v691
    %917 = vmatprep.subr.mxu0 %v695
    %918 = vmatpush1.msra.mxu0 %v694
    %919 = vmatprep.subr.mxu0 %v698
    %920 = vmatpush1.msra.mxu0 %v697
    %921 = vmatprep.subr.mxu0 %v701
    %922 = vmatpush1.msra.mxu0 %v700
    %923 = vmatprep.subr.mxu0 %v704
    %924 = vmatpush1.msra.mxu0 %v703
    %925 = vmatprep.subr.mxu0 %v707
    %926 = vmatpush1.msra.mxu0 %v706
    %927 = vmatprep.subr.mxu0 0.0
    %928 = vmatpush1.msra.mxu0 0.0
    %929 = vmatprep.subr.mxu0 0.0
    %930 = vmatpush1.msra.mxu0 0.0
    %931 = vmatprep.subr.mxu0 0.0
    %932 = vmatpush1.msra.mxu0 0.0
    %933 = vmatprep.subr.mxu0 0.0
    %934 = vmatpush1.msra.mxu0 0.0
    %935 = vmatprep.subr.mxu0 0.0
    %936 = vmatpush1.msra.mxu0 0.0
    %937 = vmatprep.subr.mxu0 0.0
    %938 = vmatpush1.msra.mxu0 0.0
    %939 = vmatprep.subr.mxu0 0.0
    %940 = vmatpush1.msra.mxu0 0.0
    %941 = vmatprep.subr.mxu0 0.0
    %942 = vmatpush1.msra.mxu0 0.0
    %943 = vmatprep.subr.mxu0 0.0
    %944 = vmatpush1.msra.mxu0 0.0
    %945 = vmatprep.subr.mxu0 0.0
    %946 = vmatpush1.msra.mxu0 0.0
    %947 = vmatprep.subr.mxu0 0.0
    %948 = vmatpush1.msra.mxu0 0.0
    %949 = vmatprep.subr.mxu0 0.0
    %950 = vmatpush1.msra.mxu0 0.0
    %951 = vmatprep.subr.mxu0 0.0
    %952 = vmatpush1.msra.mxu0 0.0
    %953 = vmatprep.subr.mxu0 0.0
    %954 = vmatpush1.msra.mxu0 0.0
    %955 = vmatprep.subr.mxu0 0.0
    %956 = vmatpush1.msra.mxu0 0.0
    %957 = vmatprep.subr.mxu0 0.0
    %958 = vmatpush1.msra.mxu0 0.0
    %959 = vmatprep.mubr.f32.mxu0 0.0
    %960 = vmatmul.mubr.f32.gmra.mrb[0].mxu0 %v890
    %v961 = vpop.f32.mrb[0].mxu0
    %v962 = vadd.f32 %v717, %v961
    %v963 = vpop.f32.mrb[0].mxu0
    %v964 = vadd.f32 %v721, %v963
    %965 = vdwg.mxu0
    %966 = vmatprep.subr.mxu0 0.0
    %967 = vmatpush1.msra.mxu0 %v663
    %968 = vmatprep.subr.mxu0 0.0
    %969 = vmatpush1.msra.mxu0 %v666
    %970 = vmatprep.subr.mxu0 0.0
    %971 = vmatpush1.msra.mxu0 %v669
    %972 = vmatprep.subr.mxu0 0.0
    %973 = vmatpush1.msra.mxu0 %v672
    %974 = vmatprep.subr.mxu0 0.0
    %975 = vmatpush1.msra.mxu0 %v675
    %976 = vmatprep.subr.mxu0 0.0
    %977 = vmatpush1.msra.mxu0 %v678
    %978 = vmatprep.subr.mxu0 0.0
    %979 = vmatpush1.msra.mxu0 %v681
    %980 = vmatprep.subr.mxu0 0.0
    %981 = vmatpush1.msra.mxu0 %v684
    %982 = vmatprep.subr.mxu0 0.0
    %983 = vmatpush1.msra.mxu0 %v687
    %984 = vmatprep.subr.mxu0 0.0
    %985 = vmatpush1.msra.mxu0 %v690
    %986 = vmatprep.subr.mxu0 0.0
    %987 = vmatpush1.msra.mxu0 %v693
    %988 = vmatprep.subr.mxu0 0.0
    %989 = vmatpush1.msra.mxu0 %v696
    %990 = vmatprep.subr.mxu0 0.0
    %991 = vmatpush1.msra.mxu0 %v699
    %992 = vmatprep.subr.mxu0 0.0
    %993 = vmatpush1.msra.mxu0 %v702
    %994 = vmatprep.subr.mxu0 0.0
    %995 = vmatpush1.msra.mxu0 %v705
    %996 = vmatprep.subr.mxu0 0.0
    %997 = vmatpush1.msra.mxu0 %v708
    %998 = vmatprep.subr.mxu0 0.0
    %999 = vmatpush1.msra.mxu0 0.0
    %1000 = vmatprep.subr.mxu0 0.0
    %1001 = vmatpush1.msra.mxu0 0.0
    %1002 = vmatprep.subr.mxu0 0.0
    %1003 = vmatpush1.msra.mxu0 0.0
    %1004 = vmatprep.subr.mxu0 0.0
    %1005 = vmatpush1.msra.mxu0 0.0
    %1006 = vmatprep.subr.mxu0 0.0
    %1007 = vmatpush1.msra.mxu0 0.0
    %1008 = vmatprep.subr.mxu0 0.0
    %1009 = vmatpush1.msra.mxu0 0.0
    %1010 = vmatprep.subr.mxu0 0.0
    %1011 = vmatpush1.msra.mxu0 0.0
    %1012 = vmatprep.subr.mxu0 0.0
    %1013 = vmatpush1.msra.mxu0 0.0
    %1014 = vmatprep.subr.mxu0 0.0
    %1015 = vmatpush1.msra.mxu0 0.0
    %1016 = vmatprep.subr.mxu0 0.0
    %1017 = vmatpush1.msra.mxu0 0.0
    %1018 = vmatprep.subr.mxu0 0.0
    %1019 = vmatpush1.msra.mxu0 0.0
    %1020 = vmatprep.subr.mxu0 0.0
    %1021 = vmatpush1.msra.mxu0 0.0
    %1022 = vmatprep.subr.mxu0 0.0
    %1023 = vmatpush1.msra.mxu0 0.0
    %1024 = vmatprep.subr.mxu0 0.0
    %1025 = vmatpush1.msra.mxu0 0.0
    %1026 = vmatprep.subr.mxu0 0.0
    %1027 = vmatpush1.msra.mxu0 0.0
    %1028 = vmatprep.subr.mxu0 0.0
    %1029 = vmatpush1.msra.mxu0 0.0
    %1030 = vmatprep.mubr.f32.mxu0 0.0
    %1031 = vmatmul.mubr.f32.gmra.mrb[0].mxu0 %v890
    %v1032 = vpop.f32.mrb[0].mxu0
    %v1033 = vadd.f32 %v725, %v1032
    %v1034 = vpop.f32.mrb[0].mxu0
    %1035 = vdwg.mxu0
    %v1037 = vrot.slane %v962, 6
    %v1039 = vadd.f32 %v892, %v1037
    %v1040 = vxor.u32 %v1039, 2147483648
    %v1041 = vmul.f32 %v1040, 1.442695
    %v1042 = vpow.pop %v1041
    %v1043 = vadd.f32 %v1042, 1.0
    %v1044 = vrcp.pop %v1043
    %v1045 = vmul.f32 1.0, %v1044
    %v1047 = vrot.slane %v964, 6
    %v1049 = vadd.f32 %v893, %v1047
    %v1050 = vxor.u32 %v1049, 2147483648
    %v1051 = vmul.f32 %v1050, 1.442695
    %v1052 = vpow.pop %v1051
    %v1053 = vadd.f32 %v1052, 1.0
    %v1054 = vrcp.pop %v1053
    %v1055 = vmul.f32 1.0, %v1054
    %v1057 = vrot.slane %v1033, 6
    %v1059 = vmul.f32 %v1045, %v1057
    %v1060 = vadd.f32 %v894, %v1059
    %v1061 = vtanh.pop %v1060
    %v1062 = vsub.f32 1.0, %v1055
    %v1063 = vmul.f32 %v1062, %v1061
    %v1065 = vrot.slane %v890, 6
    %v1067 = vmul.f32 %v1055, %v1065
    %v1068 = vadd.f32 %v1063, %v1067
    %1069 = vst [vmem:[#allocation3] sm:$0xc] %v1068
    %v1070 = vld [vmem:[#allocation2] sm:$0x30]
    %v1071 = vld [vmem:[#allocation2 + $0x8] sm:$0x30]
    %v1072 = vld [vmem:[#allocation2 + $0x10] sm:$0x30]
    %v1074 = vrot.slane %v1068, 2
    %1076 = vmatprep.subr.mxu0 %v662
    %1077 = vmatpush1.msra.mxu0 %v661
    %1078 = vmatprep.subr.mxu0 %v665
    %1079 = vmatpush1.msra.mxu0 %v664
    %1080 = vmatprep.subr.mxu0 %v668
    %1081 = vmatpush1.msra.mxu0 %v667
    %1082 = vmatprep.subr.mxu0 %v671
    %1083 = vmatpush1.msra.mxu0 %v670
    %1084 = vmatprep.subr.mxu0 %v674
    %1085 = vmatpush1.msra.mxu0 %v673
    %1086 = vmatprep.subr.mxu0 %v677
    %1087 = vmatpush1.msra.mxu0 %v676
    %1088 = vmatprep.subr.mxu0 %v680
    %1089 = vmatpush1.msra.mxu0 %v679
    %1090 = vmatprep.subr.mxu0 %v683
    %1091 = vmatpush1.msra.mxu0 %v682
    %1092 = vmatprep.subr.mxu0 %v686
    %1093 = vmatpush1.msra.mxu0 %v685
    %1094 = vmatprep.subr.mxu0 %v689
    %1095 = vmatpush1.msra.mxu0 %v688
    %1096 = vmatprep.subr.mxu0 %v692
    %1097 = vmatpush1.msra.mxu0 %v691
    %1098 = vmatprep.subr.mxu0 %v695
    %1099 = vmatpush1.msra.mxu0 %v694
    %1100 = vmatprep.subr.mxu0 %v698
    %1101 = vmatpush1.msra.mxu0 %v697
    %1102 = vmatprep.subr.mxu0 %v701
    %1103 = vmatpush1.msra.mxu0 %v700
    %1104 = vmatprep.subr.mxu0 %v704
    %1105 = vmatpush1.msra.mxu0 %v703
    %1106 = vmatprep.subr.mxu0 %v707
    %1107 = vmatpush1.msra.mxu0 %v706
    %1108 = vmatprep.subr.mxu0 0.0
    %1109 = vmatpush1.msra.mxu0 0.0
    %1110 = vmatprep.subr.mxu0 0.0
    %1111 = vmatpush1.msra.mxu0 0.0
    %1112 = vmatprep.subr.mxu0 0.0
    %1113 = vmatpush1.msra.mxu0 0.0
    %1114 = vmatprep.subr.mxu0 0.0
    %1115 = vmatpush1.msra.mxu0 0.0
    %1116 = vmatprep.subr.mxu0 0.0
    %1117 = vmatpush1.msra.mxu0 0.0
    %1118 = vmatprep.subr.mxu0 0.0
    %1119 = vmatpush1.msra.mxu0 0.0
    %1120 = vmatprep.subr.mxu0 0.0
    %1121 = vmatpush1.msra.mxu0 0.0
    %1122 = vmatprep.subr.mxu0 0.0
    %1123 = vmatpush1.msra.mxu0 0.0
    %1124 = vmatprep.subr.mxu0 0.0
    %1125 = vmatpush1.msra.mxu0 0.0
    %1126 = vmatprep.subr.mxu0 0.0
    %1127 = vmatpush1.msra.mxu0 0.0
    %1128 = vmatprep.subr.mxu0 0.0
    %1129 = vmatpush1.msra.mxu0 0.0
    %1130 = vmatprep.subr.mxu0 0.0
    %1131 = vmatpush1.msra.mxu0 0.0
    %1132 = vmatprep.subr.mxu0 0.0
    %1133 = vmatpush1.msra.mxu0 0.0
    %1134 = vmatprep.subr.mxu0 0.0
    %1135 = vmatpush1.msra.mxu0 0.0
    %1136 = vmatprep.subr.mxu0 0.0
    %1137 = vmatpush1.msra.mxu0 0.0
    %1138 = vmatprep.subr.mxu0 0.0
    %1139 = vmatpush1.msra.mxu0 0.0
    %1140 = vmatprep.mubr.f32.mxu0 0.0
    %1141 = vmatmul.mubr.f32.gmra.mrb[0].mxu0 %v1074
    %v1142 = vpop.f32.mrb[0].mxu0
    %v1143 = vadd.f32 %v717, %v1142
    %v1144 = vpop.f32.mrb[0].mxu0
    %v1145 = vadd.f32 %v721, %v1144
    %1146 = vdwg.mxu0
    %1147 = vmatprep.subr.mxu0 0.0
    %1148 = vmatpush1.msra.mxu0 %v663
    %1149 = vmatprep.subr.mxu0 0.0
    %1150 = vmatpush1.msra.mxu0 %v666
    %1151 = vmatprep.subr.mxu0 0.0
    %1152 = vmatpush1.msra.mxu0 %v669
    %1153 = vmatprep.subr.mxu0 0.0
    %1154 = vmatpush1.msra.mxu0 %v672
    %1155 = vmatprep.subr.mxu0 0.0
    %1156 = vmatpush1.msra.mxu0 %v675
    %1157 = vmatprep.subr.mxu0 0.0
    %1158 = vmatpush1.msra.mxu0 %v678
    %1159 = vmatprep.subr.mxu0 0.0
    %1160 = vmatpush1.msra.mxu0 %v681
    %1161 = vmatprep.subr.mxu0 0.0
    %1162 = vmatpush1.msra.mxu0 %v684
    %1163 = vmatprep.subr.mxu0 0.0
    %1164 = vmatpush1.msra.mxu0 %v687
    %1165 = vmatprep.subr.mxu0 0.0
    %1166 = vmatpush1.msra.mxu0 %v690
    %1167 = vmatprep.subr.mxu0 0.0
    %1168 = vmatpush1.msra.mxu0 %v693
    %1169 = vmatprep.subr.mxu0 0.0
    %1170 = vmatpush1.msra.mxu0 %v696
    %1171 = vmatprep.subr.mxu0 0.0
    %1172 = vmatpush1.msra.mxu0 %v699
    %1173 = vmatprep.subr.mxu0 0.0
    %1174 = vmatpush1.msra.mxu0 %v702
    %1175 = vmatprep.subr.mxu0 0.0
    %1176 = vmatpush1.msra.mxu0 %v705
    %1177 = vmatprep.subr.mxu0 0.0
    %1178 = vmatpush1.msra.mxu0 %v708
    %1179 = vmatprep.subr.mxu0 0.0
    %1180 = vmatpush1.msra.mxu0 0.0
    %1181 = vmatprep.subr.mxu0 0.0
    %1182 = vmatpush1.msra.mxu0 0.0
    %1183 = vmatprep.subr.mxu0 0.0
    %1184 = vmatpush1.msra.mxu0 0.0
    %1185 = vmatprep.subr.mxu0 0.0
    %1186 = vmatpush1.msra.mxu0 0.0
    %1187 = vmatprep.subr.mxu0 0.0
    %1188 = vmatpush1.msra.mxu0 0.0
    %1189 = vmatprep.subr.mxu0 0.0
    %1190 = vmatpush1.msra.mxu0 0.0
    %1191 = vmatprep.subr.mxu0 0.0
    %1192 = vmatpush1.msra.mxu0 0.0
    %1193 = vmatprep.subr.mxu0 0.0
    %1194 = vmatpush1.msra.mxu0 0.0
    %1195 = vmatprep.subr.mxu0 0.0
    %1196 = vmatpush1.msra.mxu0 0.0
    %1197 = vmatprep.subr.mxu0 0.0
    %1198 = vmatpush1.msra.mxu0 0.0
    %1199 = vmatprep.subr.mxu0 0.0
    %1200 = vmatpush1.msra.mxu0 0.0
    %1201 = vmatprep.subr.mxu0 0.0
    %1202 = vmatpush1.msra.mxu0 0.0
    %1203 = vmatprep.subr.mxu0 0.0
    %1204 = vmatpush1.msra.mxu0 0.0
    %1205 = vmatprep.subr.mxu0 0.0
    %1206 = vmatpush1.msra.mxu0 0.0
    %1207 = vmatprep.subr.mxu0 0.0
    %1208 = vmatpush1.msra.mxu0 0.0
    %1209 = vmatprep.subr.mxu0 0.0
    %1210 = vmatpush1.msra.mxu0 0.0
    %1211 = vmatprep.mubr.f32.mxu0 0.0
    %1212 = vmatmul.mubr.f32.gmra.mrb[0].mxu0 %v1074
    %v1213 = vpop.f32.mrb[0].mxu0
    %v1214 = vadd.f32 %v725, %v1213
    %v1215 = vpop.f32.mrb[0].mxu0
    %1216 = vdwg.mxu0
    %v1218 = vrot.slane %v1143, 4
    %v1220 = vadd.f32 %v1070, %v1218
    %v1221 = vxor.u32 %v1220, 2147483648
    %v1222 = vmul.f32 %v1221, 1.442695
    %v1223 = vpow.pop %v1222
    %v1224 = vadd.f32 %v1223, 1.0
    %v1225 = vrcp.pop %v1224
    %v1226 = vmul.f32 1.0, %v1225
    %v1228 = vrot.slane %v1145, 4
    %v1230 = vadd.f32 %v1071, %v1228
    %v1231 = vxor.u32 %v1230, 2147483648
    %v1232 = vmul.f32 %v1231, 1.442695
    %v1233 = vpow.pop %v1232
    %v1234 = vadd.f32 %v1233, 1.0
    %v1235 = vrcp.pop %v1234
    %v1236 = vmul.f32 1.0, %v1235
    %v1238 = vrot.slane %v1214, 4
    %v1240 = vmul.f32 %v1226, %v1238
    %v1241 = vadd.f32 %v1072, %v1240
    %v1242 = vtanh.pop %v1241
    %v1243 = vsub.f32 1.0, %v1236
    %v1244 = vmul.f32 %v1243, %v1242
    %v1245 = vrot.slane %v1068, 6
    %v1247 = vmul.f32 %v1236, %v1245
    %v1248 = vadd.f32 %v1244, %v1247
    %1249 = vst [vmem:[#allocation3] sm:$0x30] %v1248
    %v1250 = vld [vmem:[#allocation2] sm:$0xc0]
    %v1251 = vld [vmem:[#allocation2 + $0x8] sm:$0xc0]
    %v1252 = vld [vmem:[#allocation2 + $0x10] sm:$0xc0]
    %v1254 = vrot.slane %v1248, 4
    %1256 = vmatprep.subr.mxu0 %v662
    %1257 = vmatpush1.msra.mxu0 %v661
    %1258 = vmatprep.subr.mxu0 %v665
    %1259 = vmatpush1.msra.mxu0 %v664
    %1260 = vmatprep.subr.mxu0 %v668
    %1261 = vmatpush1.msra.mxu0 %v667
    %1262 = vmatprep.subr.mxu0 %v671
    %1263 = vmatpush1.msra.mxu0 %v670
    %1264 = vmatprep.subr.mxu0 %v674
    %1265 = vmatpush1.msra.mxu0 %v673
    %1266 = vmatprep.subr.mxu0 %v677
    %1267 = vmatpush1.msra.mxu0 %v676
    %1268 = vmatprep.subr.mxu0 %v680
    %1269 = vmatpush1.msra.mxu0 %v679
    %1270 = vmatprep.subr.mxu0 %v683
    %1271 = vmatpush1.msra.mxu0 %v682
    %1272 = vmatprep.subr.mxu0 %v686
    %1273 = vmatpush1.msra.mxu0 %v685
    %1274 = vmatprep.subr.mxu0 %v689
    %1275 = vmatpush1.msra.mxu0 %v688
    %1276 = vmatprep.subr.mxu0 %v692
    %1277 = vmatpush1.msra.mxu0 %v691
    %1278 = vmatprep.subr.mxu0 %v695
    %1279 = vmatpush1.msra.mxu0 %v694
    %1280 = vmatprep.subr.mxu0 %v698
    %1281 = vmatpush1.msra.mxu0 %v697
    %1282 = vmatprep.subr.mxu0 %v701
    %1283 = vmatpush1.msra.mxu0 %v700
    %1284 = vmatprep.subr.mxu0 %v704
    %1285 = vmatpush1.msra.mxu0 %v703
    %1286 = vmatprep.subr.mxu0 %v707
    %1287 = vmatpush1.msra.mxu0 %v706
    %1288 = vmatprep.subr.mxu0 0.0
    %1289 = vmatpush1.msra.mxu0 0.0
    %1290 = vmatprep.subr.mxu0 0.0
    %1291 = vmatpush1.msra.mxu0 0.0
    %1292 = vmatprep.subr.mxu0 0.0
    %1293 = vmatpush1.msra.mxu0 0.0
    %1294 = vmatprep.subr.mxu0 0.0
    %1295 = vmatpush1.msra.mxu0 0.0
    %1296 = vmatprep.subr.mxu0 0.0
    %1297 = vmatpush1.msra.mxu0 0.0
    %1298 = vmatprep.subr.mxu0 0.0
    %1299 = vmatpush1.msra.mxu0 0.0
    %1300 = vmatprep.subr.mxu0 0.0
    %1301 = vmatpush1.msra.mxu0 0.0
    %1302 = vmatprep.subr.mxu0 0.0
    %1303 = vmatpush1.msra.mxu0 0.0
    %1304 = vmatprep.subr.mxu0 0.0
    %1305 = vmatpush1.msra.mxu0 0.0
    %1306 = vmatprep.subr.mxu0 0.0
    %1307 = vmatpush1.msra.mxu0 0.0
    %1308 = vmatprep.subr.mxu0 0.0
    %1309 = vmatpush1.msra.mxu0 0.0
    %1310 = vmatprep.subr.mxu0 0.0
    %1311 = vmatpush1.msra.mxu0 0.0
    %1312 = vmatprep.subr.mxu0 0.0
    %1313 = vmatpush1.msra.mxu0 0.0
    %1314 = vmatprep.subr.mxu0 0.0
    %1315 = vmatpush1.msra.mxu0 0.0
    %1316 = vmatprep.subr.mxu0 0.0
    %1317 = vmatpush1.msra.mxu0 0.0
    %1318 = vmatprep.subr.mxu0 0.0
    %1319 = vmatpush1.msra.mxu0 0.0
    %1320 = vmatprep.mubr.f32.mxu0 0.0
    %1321 = vmatmul.mubr.f32.gmra.mrb[0].mxu0 %v1254
    %v1322 = vpop.f32.mrb[0].mxu0
    %v1323 = vadd.f32 %v717, %v1322
    %v1324 = vpop.f32.mrb[0].mxu0
    %v1325 = vadd.f32 %v721, %v1324
    %1326 = vdwg.mxu0
    %1327 = vmatprep.subr.mxu0 0.0
    %1328 = vmatpush1.msra.mxu0 %v663
    %1329 = vmatprep.subr.mxu0 0.0
    %1330 = vmatpush1.msra.mxu0 %v666
    %1331 = vmatprep.subr.mxu0 0.0
    %1332 = vmatpush1.msra.mxu0 %v669
    %1333 = vmatprep.subr.mxu0 0.0
    %1334 = vmatpush1.msra.mxu0 %v672
    %1335 = vmatprep.subr.mxu0 0.0
    %1336 = vmatpush1.msra.mxu0 %v675
    %1337 = vmatprep.subr.mxu0 0.0
    %1338 = vmatpush1.msra.mxu0 %v678
    %1339 = vmatprep.subr.mxu0 0.0
    %1340 = vmatpush1.msra.mxu0 %v681
    %1341 = vmatprep.subr.mxu0 0.0
    %1342 = vmatpush1.msra.mxu0 %v684
    %1343 = vmatprep.subr.mxu0 0.0
    %1344 = vmatpush1.msra.mxu0 %v687
    %1345 = vmatprep.subr.mxu0 0.0
    %1346 = vmatpush1.msra.mxu0 %v690
    %1347 = vmatprep.subr.mxu0 0.0
    %1348 = vmatpush1.msra.mxu0 %v693
    %1349 = vmatprep.subr.mxu0 0.0
    %1350 = vmatpush1.msra.mxu0 %v696
    %1351 = vmatprep.subr.mxu0 0.0
    %1352 = vmatpush1.msra.mxu0 %v699
    %1353 = vmatprep.subr.mxu0 0.0
    %1354 = vmatpush1.msra.mxu0 %v702
    %1355 = vmatprep.subr.mxu0 0.0
    %1356 = vmatpush1.msra.mxu0 %v705
    %1357 = vmatprep.subr.mxu0 0.0
    %1358 = vmatpush1.msra.mxu0 %v708
    %1359 = vmatprep.subr.mxu0 0.0
    %1360 = vmatpush1.msra.mxu0 0.0
    %1361 = vmatprep.subr.mxu0 0.0
    %1362 = vmatpush1.msra.mxu0 0.0
    %1363 = vmatprep.subr.mxu0 0.0
    %1364 = vmatpush1.msra.mxu0 0.0
    %1365 = vmatprep.subr.mxu0 0.0
    %1366 = vmatpush1.msra.mxu0 0.0
    %1367 = vmatprep.subr.mxu0 0.0
    %1368 = vmatpush1.msra.mxu0 0.0
    %1369 = vmatprep.subr.mxu0 0.0
    %1370 = vmatpush1.msra.mxu0 0.0
    %1371 = vmatprep.subr.mxu0 0.0
    %1372 = vmatpush1.msra.mxu0 0.0
    %1373 = vmatprep.subr.mxu0 0.0
    %1374 = vmatpush1.msra.mxu0 0.0
    %1375 = vmatprep.subr.mxu0 0.0
    %1376 = vmatpush1.msra.mxu0 0.0
    %1377 = vmatprep.subr.mxu0 0.0
    %1378 = vmatpush1.msra.mxu0 0.0
    %1379 = vmatprep.subr.mxu0 0.0
    %1380 = vmatpush1.msra.mxu0 0.0
    %1381 = vmatprep.subr.mxu0 0.0
    %1382 = vmatpush1.msra.mxu0 0.0
    %1383 = vmatprep.subr.mxu0 0.0
    %1384 = vmatpush1.msra.mxu0 0.0
    %1385 = vmatprep.subr.mxu0 0.0
    %1386 = vmatpush1.msra.mxu0 0.0
    %1387 = vmatprep.subr.mxu0 0.0
    %1388 = vmatpush1.msra.mxu0 0.0
    %1389 = vmatprep.subr.mxu0 0.0
    %1390 = vmatpush1.msra.mxu0 0.0
    %1391 = vmatprep.mubr.f32.mxu0 0.0
    %1392 = vmatmul.mubr.f32.gmra.mrb[0].mxu0 %v1254
    %v1393 = vpop.f32.mrb[0].mxu0
    %v1394 = vadd.f32 %v725, %v1393
    %v1395 = vpop.f32.mrb[0].mxu0
    %1396 = vdwg.mxu0
    %v1398 = vrot.slane %v1323, 2
    %v1400 = vadd.f32 %v1250, %v1398
    %v1401 = vxor.u32 %v1400, 2147483648
    %v1402 = vmul.f32 %v1401, 1.442695
    %v1403 = vpow.pop %v1402
    %v1404 = vadd.f32 %v1403, 1.0
    %v1405 = vrcp.pop %v1404
    %v1406 = vmul.f32 1.0, %v1405
    %v1408 = vrot.slane %v1325, 2
    %v1410 = vadd.f32 %v1251, %v1408
    %v1411 = vxor.u32 %v1410, 2147483648
    %v1412 = vmul.f32 %v1411, 1.442695
    %v1413 = vpow.pop %v1412
    %v1414 = vadd.f32 %v1413, 1.0
    %v1415 = vrcp.pop %v1414
    %v1416 = vmul.f32 1.0, %v1415
    %v1418 = vrot.slane %v1394, 2
    %v1420 = vmul.f32 %v1406, %v1418
    %v1421 = vadd.f32 %v1252, %v1420
    %v1422 = vtanh.pop %v1421
    %v1423 = vsub.f32 1.0, %v1416
    %v1424 = vmul.f32 %v1423, %v1422
    %v1425 = vrot.slane %v1248, 6
    %v1427 = vmul.f32 %v1416, %v1425
    %v1428 = vadd.f32 %v1424, %v1427
    %1429 = vst [vmem:[#allocation3] sm:$0xc0] %v1428
    %v1430 = vld [vmem:[#allocation2 + $0x18] sm:$0x3]
    %v1431 = vld [vmem:[#allocation2 + $0x20] sm:$0x3]
    %v1432 = vld [vmem:[#allocation2 + $0x28] sm:$0x3]
    %v1434 = vrot.slane %v1428, 6
    %1436 = vmatprep.subr.mxu0 %v662
    %1437 = vmatpush1.msra.mxu0 %v661
    %1438 = vmatprep.subr.mxu0 %v665
    %1439 = vmatpush1.msra.mxu0 %v664
    %1440 = vmatprep.subr.mxu0 %v668
    %1441 = vmatpush1.msra.mxu0 %v667
    %1442 = vmatprep.subr.mxu0 %v671
    %1443 = vmatpush1.msra.mxu0 %v670
    %1444 = vmatprep.subr.mxu0 %v674
    %1445 = vmatpush1.msra.mxu0 %v673
    %1446 = vmatprep.subr.mxu0 %v677
    %1447 = vmatpush1.msra.mxu0 %v676
    %1448 = vmatprep.subr.mxu0 %v680
    %1449 = vmatpush1.msra.mxu0 %v679
    %1450 = vmatprep.subr.mxu0 %v683
    %1451 = vmatpush1.msra.mxu0 %v682
    %1452 = vmatprep.subr.mxu0 %v686
    %1453 = vmatpush1.msra.mxu0 %v685
    %1454 = vmatprep.subr.mxu0 %v689
    %1455 = vmatpush1.msra.mxu0 %v688
    %1456 = vmatprep.subr.mxu0 %v692
    %1457 = vmatpush1.msra.mxu0 %v691
    %1458 = vmatprep.subr.mxu0 %v695
    %1459 = vmatpush1.msra.mxu0 %v694
    %1460 = vmatprep.subr.mxu0 %v698
    %1461 = vmatpush1.msra.mxu0 %v697
    %1462 = vmatprep.subr.mxu0 %v701
    %1463 = vmatpush1.msra.mxu0 %v700
    %1464 = vmatprep.subr.mxu0 %v704
    %1465 = vmatpush1.msra.mxu0 %v703
    %1466 = vmatprep.subr.mxu0 %v707
    %1467 = vmatpush1.msra.mxu0 %v706
    %1468 = vmatprep.subr.mxu0 0.0
    %1469 = vmatpush1.msra.mxu0 0.0
    %1470 = vmatprep.subr.mxu0 0.0
    %1471 = vmatpush1.msra.mxu0 0.0
    %1472 = vmatprep.subr.mxu0 0.0
    %1473 = vmatpush1.msra.mxu0 0.0
    %1474 = vmatprep.subr.mxu0 0.0
    %1475 = vmatpush1.msra.mxu0 0.0
    %1476 = vmatprep.subr.mxu0 0.0
    %1477 = vmatpush1.msra.mxu0 0.0
    %1478 = vmatprep.subr.mxu0 0.0
    %1479 = vmatpush1.msra.mxu0 0.0
    %1480 = vmatprep.subr.mxu0 0.0
    %1481 = vmatpush1.msra.mxu0 0.0
    %1482 = vmatprep.subr.mxu0 0.0
    %1483 = vmatpush1.msra.mxu0 0.0
    %1484 = vmatprep.subr.mxu0 0.0
    %1485 = vmatpush1.msra.mxu0 0.0
    %1486 = vmatprep.subr.mxu0 0.0
    %1487 = vmatpush1.msra.mxu0 0.0
    %1488 = vmatprep.subr.mxu0 0.0
    %1489 = vmatpush1.msra.mxu0 0.0
    %1490 = vmatprep.subr.mxu0 0.0
    %1491 = vmatpush1.msra.mxu0 0.0
    %1492 = vmatprep.subr.mxu0 0.0
    %1493 = vmatpush1.msra.mxu0 0.0
    %1494 = vmatprep.subr.mxu0 0.0
    %1495 = vmatpush1.msra.mxu0 0.0
    %1496 = vmatprep.subr.mxu0 0.0
    %1497 = vmatpush1.msra.mxu0 0.0
    %1498 = vmatprep.subr.mxu0 0.0
    %1499 = vmatpush1.msra.mxu0 0.0
    %1500 = vmatprep.mubr.f32.mxu0 0.0
    %1501 = vmatmul.mubr.f32.gmra.mrb[0].mxu0 %v1434
    %v1502 = vpop.f32.mrb[0].mxu0
    %v1503 = vadd.f32 %v717, %v1502
    %v1504 = vpop.f32.mrb[0].mxu0
    %v1505 = vadd.f32 %v721, %v1504
    %1506 = vdwg.mxu0
    %1507 = vmatprep.subr.mxu0 0.0
    %1508 = vmatpush1.msra.mxu0 %v663
    %1509 = vmatprep.subr.mxu0 0.0
    %1510 = vmatpush1.msra.mxu0 %v666
    %1511 = vmatprep.subr.mxu0 0.0
    %1512 = vmatpush1.msra.mxu0 %v669
    %1513 = vmatprep.subr.mxu0 0.0
    %1514 = vmatpush1.msra.mxu0 %v672
    %1515 = vmatprep.subr.mxu0 0.0
    %1516 = vmatpush1.msra.mxu0 %v675
    %1517 = vmatprep.subr.mxu0 0.0
    %1518 = vmatpush1.msra.mxu0 %v678
    %1519 = vmatprep.subr.mxu0 0.0
    %1520 = vmatpush1.msra.mxu0 %v681
    %1521 = vmatprep.subr.mxu0 0.0
    %1522 = vmatpush1.msra.mxu0 %v684
    %1523 = vmatprep.subr.mxu0 0.0
    %1524 = vmatpush1.msra.mxu0 %v687
    %1525 = vmatprep.subr.mxu0 0.0
    %1526 = vmatpush1.msra.mxu0 %v690
    %1527 = vmatprep.subr.mxu0 0.0
    %1528 = vmatpush1.msra.mxu0 %v693
    %1529 = vmatprep.subr.mxu0 0.0
    %1530 = vmatpush1.msra.mxu0 %v696
    %1531 = vmatprep.subr.mxu0 0.0
    %1532 = vmatpush1.msra.mxu0 %v699
    %1533 = vmatprep.subr.mxu0 0.0
    %1534 = vmatpush1.msra.mxu0 %v702
    %1535 = vmatprep.subr.mxu0 0.0
    %1536 = vmatpush1.msra.mxu0 %v705
    %1537 = vmatprep.subr.mxu0 0.0
    %1538 = vmatpush1.msra.mxu0 %v708
    %1539 = vmatprep.subr.mxu0 0.0
    %1540 = vmatpush1.msra.mxu0 0.0
    %1541 = vmatprep.subr.mxu0 0.0
    %1542 = vmatpush1.msra.mxu0 0.0
    %1543 = vmatprep.subr.mxu0 0.0
    %1544 = vmatpush1.msra.mxu0 0.0
    %1545 = vmatprep.subr.mxu0 0.0
    %1546 = vmatpush1.msra.mxu0 0.0
    %1547 = vmatprep.subr.mxu0 0.0
    %1548 = vmatpush1.msra.mxu0 0.0
    %1549 = vmatprep.subr.mxu0 0.0
    %1550 = vmatpush1.msra.mxu0 0.0
    %1551 = vmatprep.subr.mxu0 0.0
    %1552 = vmatpush1.msra.mxu0 0.0
    %1553 = vmatprep.subr.mxu0 0.0
    %1554 = vmatpush1.msra.mxu0 0.0
    %1555 = vmatprep.subr.mxu0 0.0
    %1556 = vmatpush1.msra.mxu0 0.0
    %1557 = vmatprep.subr.mxu0 0.0
    %1558 = vmatpush1.msra.mxu0 0.0
    %1559 = vmatprep.subr.mxu0 0.0
    %1560 = vmatpush1.msra.mxu0 0.0
    %1561 = vmatprep.subr.mxu0 0.0
    %1562 = vmatpush1.msra.mxu0 0.0
    %1563 = vmatprep.subr.mxu0 0.0
    %1564 = vmatpush1.msra.mxu0 0.0
    %1565 = vmatprep.subr.mxu0 0.0
    %1566 = vmatpush1.msra.mxu0 0.0
    %1567 = vmatprep.subr.mxu0 0.0
    %1568 = vmatpush1.msra.mxu0 0.0
    %1569 = vmatprep.subr.mxu0 0.0
    %1570 = vmatpush1.msra.mxu0 0.0
    %1571 = vmatprep.mubr.f32.mxu0 0.0
    %1572 = vmatmul.mubr.f32.gmra.mrb[0].mxu0 %v1434
    %v1573 = vpop.f32.mrb[0].mxu0
    %v1574 = vadd.f32 %v725, %v1573
    %v1575 = vpop.f32.mrb[0].mxu0
    %1576 = vdwg.mxu0
    %v1577 = vadd.f32 %v1430, %v1503
    %v1578 = vxor.u32 %v1577, 2147483648
    %v1579 = vmul.f32 %v1578, 1.442695
    %v1580 = vpow.pop %v1579
    %v1581 = vadd.f32 %v1580, 1.0
    %v1582 = vrcp.pop %v1581
    %v1583 = vmul.f32 1.0, %v1582
    %v1584 = vadd.f32 %v1431, %v1505
    %v1585 = vxor.u32 %v1584, 2147483648
    %v1586 = vmul.f32 %v1585, 1.442695
    %v1587 = vpow.pop %v1586
    %v1588 = vadd.f32 %v1587, 1.0
    %v1589 = vrcp.pop %v1588
    %v1590 = vmul.f32 1.0, %v1589
    %v1591 = vmul.f32 %v1583, %v1574
    %v1592 = vadd.f32 %v1432, %v1591
    %v1593 = vtanh.pop %v1592
    %v1594 = vsub.f32 1.0, %v1590
    %v1595 = vmul.f32 %v1594, %v1593
    %v1596 = vmul.f32 %v1590, %v1434
    %v1597 = vadd.f32 %v1595, %v1596
    %1598 = vst [vmem:[#allocation3 + $0x8] sm:$0x3] %v1597
    %v1599 = vld [vmem:[#allocation2 + $0x18] sm:$0xc]
    %v1600 = vld [vmem:[#allocation2 + $0x20] sm:$0xc]
    %v1601 = vld [vmem:[#allocation2 + $0x28] sm:$0xc]
    %1602 = vmatprep.subr.mxu0 %v662
    %1603 = vmatpush1.msra.mxu0 %v661
    %1604 = vmatprep.subr.mxu0 %v665
    %1605 = vmatpush1.msra.mxu0 %v664
    %1606 = vmatprep.subr.mxu0 %v668
    %1607 = vmatpush1.msra.mxu0 %v667
    %1608 = vmatprep.subr.mxu0 %v671
    %1609 = vmatpush1.msra.mxu0 %v670
    %1610 = vmatprep.subr.mxu0 %v674
    %1611 = vmatpush1.msra.mxu0 %v673
    %1612 = vmatprep.subr.mxu0 %v677
    %1613 = vmatpush1.msra.mxu0 %v676
    %1614 = vmatprep.subr.mxu0 %v680
    %1615 = vmatpush1.msra.mxu0 %v679
    %1616 = vmatprep.subr.mxu0 %v683
    %1617 = vmatpush1.msra.mxu0 %v682
    %1618 = vmatprep.subr.mxu0 %v686
    %1619 = vmatpush1.msra.mxu0 %v685
    %1620 = vmatprep.subr.mxu0 %v689
    %1621 = vmatpush1.msra.mxu0 %v688
    %1622 = vmatprep.subr.mxu0 %v692
    %1623 = vmatpush1.msra.mxu0 %v691
    %1624 = vmatprep.subr.mxu0 %v695
    %1625 = vmatpush1.msra.mxu0 %v694
    %1626 = vmatprep.subr.mxu0 %v698
    %1627 = vmatpush1.msra.mxu0 %v697
    %1628 = vmatprep.subr.mxu0 %v701
    %1629 = vmatpush1.msra.mxu0 %v700
    %1630 = vmatprep.subr.mxu0 %v704
    %1631 = vmatpush1.msra.mxu0 %v703
    %1632 = vmatprep.subr.mxu0 %v707
    %1633 = vmatpush1.msra.mxu0 %v706
    %1634 = vmatprep.subr.mxu0 0.0
    %1635 = vmatpush1.msra.mxu0 0.0
    %1636 = vmatprep.subr.mxu0 0.0
    %1637 = vmatpush1.msra.mxu0 0.0
    %1638 = vmatprep.subr.mxu0 0.0
    %1639 = vmatpush1.msra.mxu0 0.0
    %1640 = vmatprep.subr.mxu0 0.0
    %1641 = vmatpush1.msra.mxu0 0.0
    %1642 = vmatprep.subr.mxu0 0.0
    %1643 = vmatpush1.msra.mxu0 0.0
    %1644 = vmatprep.subr.mxu0 0.0
    %1645 = vmatpush1.msra.mxu0 0.0
    %1646 = vmatprep.subr.mxu0 0.0
    %1647 = vmatpush1.msra.mxu0 0.0
    %1648 = vmatprep.subr.mxu0 0.0
    %1649 = vmatpush1.msra.mxu0 0.0
    %1650 = vmatprep.subr.mxu0 0.0
    %1651 = vmatpush1.msra.mxu0 0.0
    %1652 = vmatprep.subr.mxu0 0.0
    %1653 = vmatpush1.msra.mxu0 0.0
    %1654 = vmatprep.subr.mxu0 0.0
    %1655 = vmatpush1.msra.mxu0 0.0
    %1656 = vmatprep.subr.mxu0 0.0
    %1657 = vmatpush1.msra.mxu0 0.0
    %1658 = vmatprep.subr.mxu0 0.0
    %1659 = vmatpush1.msra.mxu0 0.0
    %1660 = vmatprep.subr.mxu0 0.0
    %1661 = vmatpush1.msra.mxu0 0.0
    %1662 = vmatprep.subr.mxu0 0.0
    %1663 = vmatpush1.msra.mxu0 0.0
    %1664 = vmatprep.subr.mxu0 0.0
    %1665 = vmatpush1.msra.mxu0 0.0
    %1666 = vmatprep.mubr.f32.mxu0 0.0
    %1667 = vmatmul.mubr.f32.gmra.mrb[0].mxu0 %v1597
    %v1668 = vpop.f32.mrb[0].mxu0
    %v1669 = vadd.f32 %v717, %v1668
    %v1670 = vpop.f32.mrb[0].mxu0
    %v1671 = vadd.f32 %v721, %v1670
    %1672 = vdwg.mxu0
    %1673 = vmatprep.subr.mxu0 0.0
    %1674 = vmatpush1.msra.mxu0 %v663
    %1675 = vmatprep.subr.mxu0 0.0
    %1676 = vmatpush1.msra.mxu0 %v666
    %1677 = vmatprep.subr.mxu0 0.0
    %1678 = vmatpush1.msra.mxu0 %v669
    %1679 = vmatprep.subr.mxu0 0.0
    %1680 = vmatpush1.msra.mxu0 %v672
    %1681 = vmatprep.subr.mxu0 0.0
    %1682 = vmatpush1.msra.mxu0 %v675
    %1683 = vmatprep.subr.mxu0 0.0
    %1684 = vmatpush1.msra.mxu0 %v678
    %1685 = vmatprep.subr.mxu0 0.0
    %1686 = vmatpush1.msra.mxu0 %v681
    %1687 = vmatprep.subr.mxu0 0.0
    %1688 = vmatpush1.msra.mxu0 %v684
    %1689 = vmatprep.subr.mxu0 0.0
    %1690 = vmatpush1.msra.mxu0 %v687
    %1691 = vmatprep.subr.mxu0 0.0
    %1692 = vmatpush1.msra.mxu0 %v690
    %1693 = vmatprep.subr.mxu0 0.0
    %1694 = vmatpush1.msra.mxu0 %v693
    %1695 = vmatprep.subr.mxu0 0.0
    %1696 = vmatpush1.msra.mxu0 %v696
    %1697 = vmatprep.subr.mxu0 0.0
    %1698 = vmatpush1.msra.mxu0 %v699
    %1699 = vmatprep.subr.mxu0 0.0
    %1700 = vmatpush1.msra.mxu0 %v702
    %1701 = vmatprep.subr.mxu0 0.0
    %1702 = vmatpush1.msra.mxu0 %v705
    %1703 = vmatprep.subr.mxu0 0.0
    %1704 = vmatpush1.msra.mxu0 %v708
    %1705 = vmatprep.subr.mxu0 0.0
    %1706 = vmatpush1.msra.mxu0 0.0
    %1707 = vmatprep.subr.mxu0 0.0
    %1708 = vmatpush1.msra.mxu0 0.0
    %1709 = vmatprep.subr.mxu0 0.0
    %1710 = vmatpush1.msra.mxu0 0.0
    %1711 = vmatprep.subr.mxu0 0.0
    %1712 = vmatpush1.msra.mxu0 0.0
    %1713 = vmatprep.subr.mxu0 0.0
    %1714 = vmatpush1.msra.mxu0 0.0
    %1715 = vmatprep.subr.mxu0 0.0
    %1716 = vmatpush1.msra.mxu0 0.0
    %1717 = vmatprep.subr.mxu0 0.0
    %1718 = vmatpush1.msra.mxu0 0.0
    %1719 = vmatprep.subr.mxu0 0.0
    %1720 = vmatpush1.msra.mxu0 0.0
    %1721 = vmatprep.subr.mxu0 0.0
    %1722 = vmatpush1.msra.mxu0 0.0
    %1723 = vmatprep.subr.mxu0 0.0
    %1724 = vmatpush1.msra.mxu0 0.0
    %1725 = vmatprep.subr.mxu0 0.0
    %1726 = vmatpush1.msra.mxu0 0.0
    %1727 = vmatprep.subr.mxu0 0.0
    %1728 = vmatpush1.msra.mxu0 0.0
    %1729 = vmatprep.subr.mxu0 0.0
    %1730 = vmatpush1.msra.mxu0 0.0
    %1731 = vmatprep.subr.mxu0 0.0
    %1732 = vmatpush1.msra.mxu0 0.0
    %1733 = vmatprep.subr.mxu0 0.0
    %1734 = vmatpush1.msra.mxu0 0.0
    %1735 = vmatprep.subr.mxu0 0.0
    %1736 = vmatpush1.msra.mxu0 0.0
    %1737 = vmatprep.mubr.f32.mxu0 0.0
    %1738 = vmatmul.mubr.f32.gmra.mrb[0].mxu0 %v1597
    %v1739 = vpop.f32.mrb[0].mxu0
    %v1740 = vadd.f32 %v725, %v1739
    %v1741 = vpop.f32.mrb[0].mxu0
    %1742 = vdwg.mxu0
    %v1744 = vrot.slane %v1669, 6
    %v1746 = vadd.f32 %v1599, %v1744
    %v1747 = vxor.u32 %v1746, 2147483648
    %v1748 = vmul.f32 %v1747, 1.442695
    %v1749 = vpow.pop %v1748
    %v1750 = vadd.f32 %v1749, 1.0
    %v1751 = vrcp.pop %v1750
    %v1752 = vmul.f32 1.0, %v1751
    %v1754 = vrot.slane %v1671, 6
    %v1756 = vadd.f32 %v1600, %v1754
    %v1757 = vxor.u32 %v1756, 2147483648
    %v1758 = vmul.f32 %v1757, 1.442695
    %v1759 = vpow.pop %v1758
    %v1760 = vadd.f32 %v1759, 1.0
    %v1761 = vrcp.pop %v1760
    %v1762 = vmul.f32 1.0, %v1761
    %v1764 = vrot.slane %v1740, 6
    %v1766 = vmul.f32 %v1752, %v1764
    %v1767 = vadd.f32 %v1601, %v1766
    %v1768 = vtanh.pop %v1767
    %v1769 = vsub.f32 1.0, %v1762
    %v1770 = vmul.f32 %v1769, %v1768
    %v1772 = vrot.slane %v1597, 6
    %v1774 = vmul.f32 %v1762, %v1772
    %v1775 = vadd.f32 %v1770, %v1774
    %1776 = vst [vmem:[#allocation3 + $0x8] sm:$0xc] %v1775
    %v1777 = vld [vmem:[#allocation2 + $0x18] sm:$0x30]
    %v1778 = vld [vmem:[#allocation2 + $0x20] sm:$0x30]
    %v1779 = vld [vmem:[#allocation2 + $0x28] sm:$0x30]
    %v1781 = vrot.slane %v1775, 2
    %1783 = vmatprep.subr.mxu0 %v662
    %1784 = vmatpush1.msra.mxu0 %v661
    %1785 = vmatprep.subr.mxu0 %v665
    %1786 = vmatpush1.msra.mxu0 %v664
    %1787 = vmatprep.subr.mxu0 %v668
    %1788 = vmatpush1.msra.mxu0 %v667
    %1789 = vmatprep.subr.mxu0 %v671
    %1790 = vmatpush1.msra.mxu0 %v670
    %1791 = vmatprep.subr.mxu0 %v674
    %1792 = vmatpush1.msra.mxu0 %v673
    %1793 = vmatprep.subr.mxu0 %v677
    %1794 = vmatpush1.msra.mxu0 %v676
    %1795 = vmatprep.subr.mxu0 %v680
    %1796 = vmatpush1.msra.mxu0 %v679
    %1797 = vmatprep.subr.mxu0 %v683
    %1798 = vmatpush1.msra.mxu0 %v682
    %1799 = vmatprep.subr.mxu0 %v686
    %1800 = vmatpush1.msra.mxu0 %v685
    %1801 = vmatprep.subr.mxu0 %v689
    %1802 = vmatpush1.msra.mxu0 %v688
    %1803 = vmatprep.subr.mxu0 %v692
    %1804 = vmatpush1.msra.mxu0 %v691
    %1805 = vmatprep.subr.mxu0 %v695
    %1806 = vmatpush1.msra.mxu0 %v694
    %1807 = vmatprep.subr.mxu0 %v698
    %1808 = vmatpush1.msra.mxu0 %v697
    %1809 = vmatprep.subr.mxu0 %v701
    %1810 = vmatpush1.msra.mxu0 %v700
    %1811 = vmatprep.subr.mxu0 %v704
    %1812 = vmatpush1.msra.mxu0 %v703
    %1813 = vmatprep.subr.mxu0 %v707
    %1814 = vmatpush1.msra.mxu0 %v706
    %1815 = vmatprep.subr.mxu0 0.0
    %1816 = vmatpush1.msra.mxu0 0.0
    %1817 = vmatprep.subr.mxu0 0.0
    %1818 = vmatpush1.msra.mxu0 0.0
    %1819 = vmatprep.subr.mxu0 0.0
    %1820 = vmatpush1.msra.mxu0 0.0
    %1821 = vmatprep.subr.mxu0 0.0
    %1822 = vmatpush1.msra.mxu0 0.0
    %1823 = vmatprep.subr.mxu0 0.0
    %1824 = vmatpush1.msra.mxu0 0.0
    %1825 = vmatprep.subr.mxu0 0.0
    %1826 = vmatpush1.msra.mxu0 0.0
    %1827 = vmatprep.subr.mxu0 0.0
    %1828 = vmatpush1.msra.mxu0 0.0
    %1829 = vmatprep.subr.mxu0 0.0
    %1830 = vmatpush1.msra.mxu0 0.0
    %1831 = vmatprep.subr.mxu0 0.0
    %1832 = vmatpush1.msra.mxu0 0.0
    %1833 = vmatprep.subr.mxu0 0.0
    %1834 = vmatpush1.msra.mxu0 0.0
    %1835 = vmatprep.subr.mxu0 0.0
    %1836 = vmatpush1.msra.mxu0 0.0
    %1837 = vmatprep.subr.mxu0 0.0
    %1838 = vmatpush1.msra.mxu0 0.0
    %1839 = vmatprep.subr.mxu0 0.0
    %1840 = vmatpush1.msra.mxu0 0.0
    %1841 = vmatprep.subr.mxu0 0.0
    %1842 = vmatpush1.msra.mxu0 0.0
    %1843 = vmatprep.subr.mxu0 0.0
    %1844 = vmatpush1.msra.mxu0 0.0
    %1845 = vmatprep.subr.mxu0 0.0
    %1846 = vmatpush1.msra.mxu0 0.0
    %1847 = vmatprep.mubr.f32.mxu0 0.0
    %1848 = vmatmul.mubr.f32.gmra.mrb[0].mxu0 %v1781
    %v1849 = vpop.f32.mrb[0].mxu0
    %v1850 = vadd.f32 %v717, %v1849
    %v1851 = vpop.f32.mrb[0].mxu0
    %v1852 = vadd.f32 %v721, %v1851
    %1853 = vdwg.mxu0
    %1854 = vmatprep.subr.mxu0 0.0
    %1855 = vmatpush1.msra.mxu0 %v663
    %1856 = vmatprep.subr.mxu0 0.0
    %1857 = vmatpush1.msra.mxu0 %v666
    %1858 = vmatprep.subr.mxu0 0.0
    %1859 = vmatpush1.msra.mxu0 %v669
    %1860 = vmatprep.subr.mxu0 0.0
    %1861 = vmatpush1.msra.mxu0 %v672
    %1862 = vmatprep.subr.mxu0 0.0
    %1863 = vmatpush1.msra.mxu0 %v675
    %1864 = vmatprep.subr.mxu0 0.0
    %1865 = vmatpush1.msra.mxu0 %v678
    %1866 = vmatprep.subr.mxu0 0.0
    %1867 = vmatpush1.msra.mxu0 %v681
    %1868 = vmatprep.subr.mxu0 0.0
    %1869 = vmatpush1.msra.mxu0 %v684
    %1870 = vmatprep.subr.mxu0 0.0
    %1871 = vmatpush1.msra.mxu0 %v687
    %1872 = vmatprep.subr.mxu0 0.0
    %1873 = vmatpush1.msra.mxu0 %v690
    %1874 = vmatprep.subr.mxu0 0.0
    %1875 = vmatpush1.msra.mxu0 %v693
    %1876 = vmatprep.subr.mxu0 0.0
    %1877 = vmatpush1.msra.mxu0 %v696
    %1878 = vmatprep.subr.mxu0 0.0
    %1879 = vmatpush1.msra.mxu0 %v699
    %1880 = vmatprep.subr.mxu0 0.0
    %1881 = vmatpush1.msra.mxu0 %v702
    %1882 = vmatprep.subr.mxu0 0.0
    %1883 = vmatpush1.msra.mxu0 %v705
    %1884 = vmatprep.subr.mxu0 0.0
    %1885 = vmatpush1.msra.mxu0 %v708
    %1886 = vmatprep.subr.mxu0 0.0
    %1887 = vmatpush1.msra.mxu0 0.0
    %1888 = vmatprep.subr.mxu0 0.0
    %1889 = vmatpush1.msra.mxu0 0.0
    %1890 = vmatprep.subr.mxu0 0.0
    %1891 = vmatpush1.msra.mxu0 0.0
    %1892 = vmatprep.subr.mxu0 0.0
    %1893 = vmatpush1.msra.mxu0 0.0
    %1894 = vmatprep.subr.mxu0 0.0
    %1895 = vmatpush1.msra.mxu0 0.0
    %1896 = vmatprep.subr.mxu0 0.0
    %1897 = vmatpush1.msra.mxu0 0.0
    %1898 = vmatprep.subr.mxu0 0.0
    %1899 = vmatpush1.msra.mxu0 0.0
    %1900 = vmatprep.subr.mxu0 0.0
    %1901 = vmatpush1.msra.mxu0 0.0
    %1902 = vmatprep.subr.mxu0 0.0
    %1903 = vmatpush1.msra.mxu0 0.0
    %1904 = vmatprep.subr.mxu0 0.0
    %1905 = vmatpush1.msra.mxu0 0.0
    %1906 = vmatprep.subr.mxu0 0.0
    %1907 = vmatpush1.msra.mxu0 0.0
    %1908 = vmatprep.subr.mxu0 0.0
    %1909 = vmatpush1.msra.mxu0 0.0
    %1910 = vmatprep.subr.mxu0 0.0
    %1911 = vmatpush1.msra.mxu0 0.0
    %1912 = vmatprep.subr.mxu0 0.0
    %1913 = vmatpush1.msra.mxu0 0.0
    %1914 = vmatprep.subr.mxu0 0.0
    %1915 = vmatpush1.msra.mxu0 0.0
    %1916 = vmatprep.subr.mxu0 0.0
    %1917 = vmatpush1.msra.mxu0 0.0
    %1918 = vmatprep.mubr.f32.mxu0 0.0
    %1919 = vmatmul.mubr.f32.gmra.mrb[0].mxu0 %v1781
    %v1920 = vpop.f32.mrb[0].mxu0
    %v1921 = vadd.f32 %v725, %v1920
    %v1922 = vpop.f32.mrb[0].mxu0
    %1923 = vdwg.mxu0
    %v1925 = vrot.slane %v1850, 4
    %v1927 = vadd.f32 %v1777, %v1925
    %v1928 = vxor.u32 %v1927, 2147483648
    %v1929 = vmul.f32 %v1928, 1.442695
    %v1930 = vpow.pop %v1929
    %v1931 = vadd.f32 %v1930, 1.0
    %v1932 = vrcp.pop %v1931
    %v1933 = vmul.f32 1.0, %v1932
    %v1935 = vrot.slane %v1852, 4
    %v1937 = vadd.f32 %v1778, %v1935
    %v1938 = vxor.u32 %v1937, 2147483648
    %v1939 = vmul.f32 %v1938, 1.442695
    %v1940 = vpow.pop %v1939
    %v1941 = vadd.f32 %v1940, 1.0
    %v1942 = vrcp.pop %v1941
    %v1943 = vmul.f32 1.0, %v1942
    %v1945 = vrot.slane %v1921, 4
    %v1947 = vmul.f32 %v1933, %v1945
    %v1948 = vadd.f32 %v1779, %v1947
    %v1949 = vtanh.pop %v1948
    %v1950 = vsub.f32 1.0, %v1943
    %v1951 = vmul.f32 %v1950, %v1949
    %v1952 = vrot.slane %v1775, 6
    %v1954 = vmul.f32 %v1943, %v1952
    %v1955 = vadd.f32 %v1951, %v1954
    %1956 = vst [vmem:[#allocation3 + $0x8] sm:$0x30] %v1955
    %v1957 = vld [vmem:[#allocation2 + $0x18] sm:$0xc0]
    %v1958 = vld [vmem:[#allocation2 + $0x20] sm:$0xc0]
    %v1959 = vld [vmem:[#allocation2 + $0x28] sm:$0xc0]
    %v1961 = vrot.slane %v1955, 4
    %1963 = vmatprep.subr.mxu0 %v662
    %1964 = vmatpush1.msra.mxu0 %v661
    %1965 = vmatprep.subr.mxu0 %v665
    %1966 = vmatpush1.msra.mxu0 %v664
    %1967 = vmatprep.subr.mxu0 %v668
    %1968 = vmatpush1.msra.mxu0 %v667
    %1969 = vmatprep.subr.mxu0 %v671
    %1970 = vmatpush1.msra.mxu0 %v670
    %1971 = vmatprep.subr.mxu0 %v674
    %1972 = vmatpush1.msra.mxu0 %v673
    %1973 = vmatprep.subr.mxu0 %v677
    %1974 = vmatpush1.msra.mxu0 %v676
    %1975 = vmatprep.subr.mxu0 %v680
    %1976 = vmatpush1.msra.mxu0 %v679
    %1977 = vmatprep.subr.mxu0 %v683
    %1978 = vmatpush1.msra.mxu0 %v682
    %1979 = vmatprep.subr.mxu0 %v686
    %1980 = vmatpush1.msra.mxu0 %v685
    %1981 = vmatprep.subr.mxu0 %v689
    %1982 = vmatpush1.msra.mxu0 %v688
    %1983 = vmatprep.subr.mxu0 %v692
    %1984 = vmatpush1.msra.mxu0 %v691
    %1985 = vmatprep.subr.mxu0 %v695
    %1986 = vmatpush1.msra.mxu0 %v694
    %1987 = vmatprep.subr.mxu0 %v698
    %1988 = vmatpush1.msra.mxu0 %v697
    %1989 = vmatprep.subr.mxu0 %v701
    %1990 = vmatpush1.msra.mxu0 %v700
    %1991 = vmatprep.subr.mxu0 %v704
    %1992 = vmatpush1.msra.mxu0 %v703
    %1993 = vmatprep.subr.mxu0 %v707
    %1994 = vmatpush1.msra.mxu0 %v706
    %1995 = vmatprep.subr.mxu0 0.0
    %1996 = vmatpush1.msra.mxu0 0.0
    %1997 = vmatprep.subr.mxu0 0.0
    %1998 = vmatpush1.msra.mxu0 0.0
    %1999 = vmatprep.subr.mxu0 0.0
    %2000 = vmatpush1.msra.mxu0 0.0
    %2001 = vmatprep.subr.mxu0 0.0
    %2002 = vmatpush1.msra.mxu0 0.0
    %2003 = vmatprep.subr.mxu0 0.0
    %2004 = vmatpush1.msra.mxu0 0.0
    %2005 = vmatprep.subr.mxu0 0.0
    %2006 = vmatpush1.msra.mxu0 0.0
    %2007 = vmatprep.subr.mxu0 0.0
    %2008 = vmatpush1.msra.mxu0 0.0
    %2009 = vmatprep.subr.mxu0 0.0
    %2010 = vmatpush1.msra.mxu0 0.0
    %2011 = vmatprep.subr.mxu0 0.0
    %2012 = vmatpush1.msra.mxu0 0.0
    %2013 = vmatprep.subr.mxu0 0.0
    %2014 = vmatpush1.msra.mxu0 0.0
    %2015 = vmatprep.subr.mxu0 0.0
    %2016 = vmatpush1.msra.mxu0 0.0
    %2017 = vmatprep.subr.mxu0 0.0
    %2018 = vmatpush1.msra.mxu0 0.0
    %2019 = vmatprep.subr.mxu0 0.0
    %2020 = vmatpush1.msra.mxu0 0.0
    %2021 = vmatprep.subr.mxu0 0.0
    %2022 = vmatpush1.msra.mxu0 0.0
    %2023 = vmatprep.subr.mxu0 0.0
    %2024 = vmatpush1.msra.mxu0 0.0
    %2025 = vmatprep.subr.mxu0 0.0
    %2026 = vmatpush1.msra.mxu0 0.0
    %2027 = vmatprep.mubr.f32.mxu0 0.0
    %2028 = vmatmul.mubr.f32.gmra.mrb[0].mxu0 %v1961
    %v2029 = vpop.f32.mrb[0].mxu0
    %v2030 = vadd.f32 %v717, %v2029
    %v2031 = vpop.f32.mrb[0].mxu0
    %v2032 = vadd.f32 %v721, %v2031
    %2033 = vdwg.mxu0
    %2034 = vmatprep.subr.mxu0 0.0
    %2035 = vmatpush1.msra.mxu0 %v663
    %2036 = vmatprep.subr.mxu0 0.0
    %2037 = vmatpush1.msra.mxu0 %v666
    %2038 = vmatprep.subr.mxu0 0.0
    %2039 = vmatpush1.msra.mxu0 %v669
    %2040 = vmatprep.subr.mxu0 0.0
    %2041 = vmatpush1.msra.mxu0 %v672
    %2042 = vmatprep.subr.mxu0 0.0
    %2043 = vmatpush1.msra.mxu0 %v675
    %2044 = vmatprep.subr.mxu0 0.0
    %2045 = vmatpush1.msra.mxu0 %v678
    %2046 = vmatprep.subr.mxu0 0.0
    %2047 = vmatpush1.msra.mxu0 %v681
    %2048 = vmatprep.subr.mxu0 0.0
    %2049 = vmatpush1.msra.mxu0 %v684
    %2050 = vmatprep.subr.mxu0 0.0
    %2051 = vmatpush1.msra.mxu0 %v687
    %2052 = vmatprep.subr.mxu0 0.0
    %2053 = vmatpush1.msra.mxu0 %v690
    %2054 = vmatprep.subr.mxu0 0.0
    %2055 = vmatpush1.msra.mxu0 %v693
    %2056 = vmatprep.subr.mxu0 0.0
    %2057 = vmatpush1.msra.mxu0 %v696
    %2058 = vmatprep.subr.mxu0 0.0
    %2059 = vmatpush1.msra.mxu0 %v699
    %2060 = vmatprep.subr.mxu0 0.0
    %2061 = vmatpush1.msra.mxu0 %v702
    %2062 = vmatprep.subr.mxu0 0.0
    %2063 = vmatpush1.msra.mxu0 %v705
    %2064 = vmatprep.subr.mxu0 0.0
    %2065 = vmatpush1.msra.mxu0 %v708
    %2066 = vmatprep.subr.mxu0 0.0
    %2067 = vmatpush1.msra.mxu0 0.0
    %2068 = vmatprep.subr.mxu0 0.0
    %2069 = vmatpush1.msra.mxu0 0.0
    %2070 = vmatprep.subr.mxu0 0.0
    %2071 = vmatpush1.msra.mxu0 0.0
    %2072 = vmatprep.subr.mxu0 0.0
    %2073 = vmatpush1.msra.mxu0 0.0
    %2074 = vmatprep.subr.mxu0 0.0
    %2075 = vmatpush1.msra.mxu0 0.0
    %2076 = vmatprep.subr.mxu0 0.0
    %2077 = vmatpush1.msra.mxu0 0.0
    %2078 = vmatprep.subr.mxu0 0.0
    %2079 = vmatpush1.msra.mxu0 0.0
    %2080 = vmatprep.subr.mxu0 0.0
    %2081 = vmatpush1.msra.mxu0 0.0
    %2082 = vmatprep.subr.mxu0 0.0
    %2083 = vmatpush1.msra.mxu0 0.0
    %2084 = vmatprep.subr.mxu0 0.0
    %2085 = vmatpush1.msra.mxu0 0.0
    %2086 = vmatprep.subr.mxu0 0.0
    %2087 = vmatpush1.msra.mxu0 0.0
    %2088 = vmatprep.subr.mxu0 0.0
    %2089 = vmatpush1.msra.mxu0 0.0
    %2090 = vmatprep.subr.mxu0 0.0
    %2091 = vmatpush1.msra.mxu0 0.0
    %2092 = vmatprep.subr.mxu0 0.0
    %2093 = vmatpush1.msra.mxu0 0.0
    %2094 = vmatprep.subr.mxu0 0.0
    %2095 = vmatpush1.msra.mxu0 0.0
    %2096 = vmatprep.subr.mxu0 0.0
    %2097 = vmatpush1.msra.mxu0 0.0
    %2098 = vmatprep.mubr.f32.mxu0 0.0
    %2099 = vmatmul.mubr.f32.gmra.mrb[0].mxu0 %v1961
    %v2100 = vpop.f32.mrb[0].mxu0
    %v2101 = vadd.f32 %v725, %v2100
    %v2102 = vpop.f32.mrb[0].mxu0
    %2103 = vdwg.mxu0
    %v2105 = vrot.slane %v2030, 2
    %v2107 = vadd.f32 %v1957, %v2105
    %v2108 = vxor.u32 %v2107, 2147483648
    %v2109 = vmul.f32 %v2108, 1.442695
    %v2110 = vpow.pop %v2109
    %v2111 = vadd.f32 %v2110, 1.0
    %v2112 = vrcp.pop %v2111
    %v2113 = vmul.f32 1.0, %v2112
    %v2115 = vrot.slane %v2032, 2
    %v2117 = vadd.f32 %v1958, %v2115
    %v2118 = vxor.u32 %v2117, 2147483648
    %v2119 = vmul.f32 %v2118, 1.442695
    %v2120 = vpow.pop %v2119
    %v2121 = vadd.f32 %v2120, 1.0
    %v2122 = vrcp.pop %v2121
    %v2123 = vmul.f32 1.0, %v2122
    %v2125 = vrot.slane %v2101, 2
    %v2127 = vmul.f32 %v2113, %v2125
    %v2128 = vadd.f32 %v1959, %v2127
    %v2129 = vtanh.pop %v2128
    %v2130 = vsub.f32 1.0, %v2123
    %v2131 = vmul.f32 %v2130, %v2129
    %v2132 = vrot.slane %v1955, 6
    %v2134 = vmul.f32 %v2123, %v2132
    %v2135 = vadd.f32 %v2131, %v2134
    %2136 = vst [vmem:[#allocation3 + $0x8] sm:$0xc0] %v2135
    %v2137 = vld [vmem:[#allocation2 + $0x30] sm:$0x3]
    %v2138 = vld [vmem:[#allocation2 + $0x38] sm:$0x3]
    %v2139 = vld [vmem:[#allocation2 + $0x40] sm:$0x3]
    %v2141 = vrot.slane %v2135, 6
    %2143 = vmatprep.subr.mxu0 %v662
    %2144 = vmatpush1.msra.mxu0 %v661
    %2145 = vmatprep.subr.mxu0 %v665
    %2146 = vmatpush1.msra.mxu0 %v664
    %2147 = vmatprep.subr.mxu0 %v668
    %2148 = vmatpush1.msra.mxu0 %v667
    %2149 = vmatprep.subr.mxu0 %v671
    %2150 = vmatpush1.msra.mxu0 %v670
    %2151 = vmatprep.subr.mxu0 %v674
    %2152 = vmatpush1.msra.mxu0 %v673
    %2153 = vmatprep.subr.mxu0 %v677
    %2154 = vmatpush1.msra.mxu0 %v676
    %2155 = vmatprep.subr.mxu0 %v680
    %2156 = vmatpush1.msra.mxu0 %v679
    %2157 = vmatprep.subr.mxu0 %v683
    %2158 = vmatpush1.msra.mxu0 %v682
    %2159 = vmatprep.subr.mxu0 %v686
    %2160 = vmatpush1.msra.mxu0 %v685
    %2161 = vmatprep.subr.mxu0 %v689
    %2162 = vmatpush1.msra.mxu0 %v688
    %2163 = vmatprep.subr.mxu0 %v692
    %2164 = vmatpush1.msra.mxu0 %v691
    %2165 = vmatprep.subr.mxu0 %v695
    %2166 = vmatpush1.msra.mxu0 %v694
    %2167 = vmatprep.subr.mxu0 %v698
    %2168 = vmatpush1.msra.mxu0 %v697
    %2169 = vmatprep.subr.mxu0 %v701
    %2170 = vmatpush1.msra.mxu0 %v700
    %2171 = vmatprep.subr.mxu0 %v704
    %2172 = vmatpush1.msra.mxu0 %v703
    %2173 = vmatprep.subr.mxu0 %v707
    %2174 = vmatpush1.msra.mxu0 %v706
    %2175 = vmatprep.subr.mxu0 0.0
    %2176 = vmatpush1.msra.mxu0 0.0
    %2177 = vmatprep.subr.mxu0 0.0
    %2178 = vmatpush1.msra.mxu0 0.0
    %2179 = vmatprep.subr.mxu0 0.0
    %2180 = vmatpush1.msra.mxu0 0.0
    %2181 = vmatprep.subr.mxu0 0.0
    %2182 = vmatpush1.msra.mxu0 0.0
    %2183 = vmatprep.subr.mxu0 0.0
    %2184 = vmatpush1.msra.mxu0 0.0
    %2185 = vmatprep.subr.mxu0 0.0
    %2186 = vmatpush1.msra.mxu0 0.0
    %2187 = vmatprep.subr.mxu0 0.0
    %2188 = vmatpush1.msra.mxu0 0.0
    %2189 = vmatprep.subr.mxu0 0.0
    %2190 = vmatpush1.msra.mxu0 0.0
    %2191 = vmatprep.subr.mxu0 0.0
    %2192 = vmatpush1.msra.mxu0 0.0
    %2193 = vmatprep.subr.mxu0 0.0
    %2194 = vmatpush1.msra.mxu0 0.0
    %2195 = vmatprep.subr.mxu0 0.0
    %2196 = vmatpush1.msra.mxu0 0.0
    %2197 = vmatprep.subr.mxu0 0.0
    %2198 = vmatpush1.msra.mxu0 0.0
    %2199 = vmatprep.subr.mxu0 0.0
    %2200 = vmatpush1.msra.mxu0 0.0
    %2201 = vmatprep.subr.mxu0 0.0
    %2202 = vmatpush1.msra.mxu0 0.0
    %2203 = vmatprep.subr.mxu0 0.0
    %2204 = vmatpush1.msra.mxu0 0.0
    %2205 = vmatprep.subr.mxu0 0.0
    %2206 = vmatpush1.msra.mxu0 0.0
    %2207 = vmatprep.mubr.f32.mxu0 0.0
    %2208 = vmatmul.mubr.f32.gmra.mrb[0].mxu0 %v2141
    %v2209 = vpop.f32.mrb[0].mxu0
    %v2210 = vadd.f32 %v717, %v2209
    %v2211 = vpop.f32.mrb[0].mxu0
    %v2212 = vadd.f32 %v721, %v2211
    %2213 = vdwg.mxu0
    %2214 = vmatprep.subr.mxu0 0.0
    %2215 = vmatpush1.msra.mxu0 %v663
    %2216 = vmatprep.subr.mxu0 0.0
    %2217 = vmatpush1.msra.mxu0 %v666
    %2218 = vmatprep.subr.mxu0 0.0
    %2219 = vmatpush1.msra.mxu0 %v669
    %2220 = vmatprep.subr.mxu0 0.0
    %2221 = vmatpush1.msra.mxu0 %v672
    %2222 = vmatprep.subr.mxu0 0.0
    %2223 = vmatpush1.msra.mxu0 %v675
    %2224 = vmatprep.subr.mxu0 0.0
    %2225 = vmatpush1.msra.mxu0 %v678
    %2226 = vmatprep.subr.mxu0 0.0
    %2227 = vmatpush1.msra.mxu0 %v681
    %2228 = vmatprep.subr.mxu0 0.0
    %2229 = vmatpush1.msra.mxu0 %v684
    %2230 = vmatprep.subr.mxu0 0.0
    %2231 = vmatpush1.msra.mxu0 %v687
    %2232 = vmatprep.subr.mxu0 0.0
    %2233 = vmatpush1.msra.mxu0 %v690
    %2234 = vmatprep.subr.mxu0 0.0
    %2235 = vmatpush1.msra.mxu0 %v693
    %2236 = vmatprep.subr.mxu0 0.0
    %2237 = vmatpush1.msra.mxu0 %v696
    %2238 = vmatprep.subr.mxu0 0.0
    %2239 = vmatpush1.msra.mxu0 %v699
    %2240 = vmatprep.subr.mxu0 0.0
    %2241 = vmatpush1.msra.mxu0 %v702
    %2242 = vmatprep.subr.mxu0 0.0
    %2243 = vmatpush1.msra.mxu0 %v705
    %2244 = vmatprep.subr.mxu0 0.0
    %2245 = vmatpush1.msra.mxu0 %v708
    %2246 = vmatprep.subr.mxu0 0.0
    %2247 = vmatpush1.msra.mxu0 0.0
    %2248 = vmatprep.subr.mxu0 0.0
    %2249 = vmatpush1.msra.mxu0 0.0
    %2250 = vmatprep.subr.mxu0 0.0
    %2251 = vmatpush1.msra.mxu0 0.0
    %2252 = vmatprep.subr.mxu0 0.0
    %2253 = vmatpush1.msra.mxu0 0.0
    %2254 = vmatprep.subr.mxu0 0.0
    %2255 = vmatpush1.msra.mxu0 0.0
    %2256 = vmatprep.subr.mxu0 0.0
    %2257 = vmatpush1.msra.mxu0 0.0
    %2258 = vmatprep.subr.mxu0 0.0
    %2259 = vmatpush1.msra.mxu0 0.0
    %2260 = vmatprep.subr.mxu0 0.0
    %2261 = vmatpush1.msra.mxu0 0.0
    %2262 = vmatprep.subr.mxu0 0.0
    %2263 = vmatpush1.msra.mxu0 0.0
    %2264 = vmatprep.subr.mxu0 0.0
    %2265 = vmatpush1.msra.mxu0 0.0
    %2266 = vmatprep.subr.mxu0 0.0
    %2267 = vmatpush1.msra.mxu0 0.0
    %2268 = vmatprep.subr.mxu0 0.0
    %2269 = vmatpush1.msra.mxu0 0.0
    %2270 = vmatprep.subr.mxu0 0.0
    %2271 = vmatpush1.msra.mxu0 0.0
    %2272 = vmatprep.subr.mxu0 0.0
    %2273 = vmatpush1.msra.mxu0 0.0
    %2274 = vmatprep.subr.mxu0 0.0
    %2275 = vmatpush1.msra.mxu0 0.0
    %2276 = vmatprep.subr.mxu0 0.0
    %2277 = vmatpush1.msra.mxu0 0.0
    %2278 = vmatprep.mubr.f32.mxu0 0.0
    %2279 = vmatmul.mubr.f32.gmra.mrb[0].mxu0 %v2141
    %v2280 = vpop.f32.mrb[0].mxu0
    %v2281 = vadd.f32 %v725, %v2280
    %v2282 = vpop.f32.mrb[0].mxu0
    %2283 = vdwg.mxu0
    %v2284 = vadd.f32 %v2137, %v2210
    %v2285 = vxor.u32 %v2284, 2147483648
    %v2286 = vmul.f32 %v2285, 1.442695
    %v2287 = vpow.pop %v2286
    %v2288 = vadd.f32 %v2287, 1.0
    %v2289 = vrcp.pop %v2288
    %v2290 = vmul.f32 1.0, %v2289
    %v2291 = vadd.f32 %v2138, %v2212
    %v2292 = vxor.u32 %v2291, 2147483648
    %v2293 = vmul.f32 %v2292, 1.442695
    %v2294 = vpow.pop %v2293
    %v2295 = vadd.f32 %v2294, 1.0
    %v2296 = vrcp.pop %v2295
    %v2297 = vmul.f32 1.0, %v2296
    %v2298 = vmul.f32 %v2290, %v2281
    %v2299 = vadd.f32 %v2139, %v2298
    %v2300 = vtanh.pop %v2299
    %v2301 = vsub.f32 1.0, %v2297
    %v2302 = vmul.f32 %v2301, %v2300
    %v2303 = vmul.f32 %v2297, %v2141
    %v2304 = vadd.f32 %v2302, %v2303
    %2305 = vst [vmem:[#allocation3 + $0x10] sm:$0x3] %v2304
    %v2306 = vld [vmem:[#allocation2 + $0x30] sm:$0xc]
    %v2307 = vld [vmem:[#allocation2 + $0x38] sm:$0xc]
    %v2308 = vld [vmem:[#allocation2 + $0x40] sm:$0xc]
    %2309 = vmatprep.subr.mxu0 %v662
    %2310 = vmatpush1.msra.mxu0 %v661
    %2311 = vmatprep.subr.mxu0 %v665
    %2312 = vmatpush1.msra.mxu0 %v664
    %2313 = vmatprep.subr.mxu0 %v668
    %2314 = vmatpush1.msra.mxu0 %v667
    %2315 = vmatprep.subr.mxu0 %v671
    %2316 = vmatpush1.msra.mxu0 %v670
    %2317 = vmatprep.subr.mxu0 %v674
    %2318 = vmatpush1.msra.mxu0 %v673
    %2319 = vmatprep.subr.mxu0 %v677
    %2320 = vmatpush1.msra.mxu0 %v676
    %2321 = vmatprep.subr.mxu0 %v680
    %2322 = vmatpush1.msra.mxu0 %v679
    %2323 = vmatprep.subr.mxu0 %v683
    %2324 = vmatpush1.msra.mxu0 %v682
    %2325 = vmatprep.subr.mxu0 %v686
    %2326 = vmatpush1.msra.mxu0 %v685
    %2327 = vmatprep.subr.mxu0 %v689
    %2328 = vmatpush1.msra.mxu0 %v688
    %2329 = vmatprep.subr.mxu0 %v692
    %2330 = vmatpush1.msra.mxu0 %v691
    %2331 = vmatprep.subr.mxu0 %v695
    %2332 = vmatpush1.msra.mxu0 %v694
    %2333 = vmatprep.subr.mxu0 %v698
    %2334 = vmatpush1.msra.mxu0 %v697
    %2335 = vmatprep.subr.mxu0 %v701
    %2336 = vmatpush1.msra.mxu0 %v700
    %2337 = vmatprep.subr.mxu0 %v704
    %2338 = vmatpush1.msra.mxu0 %v703
    %2339 = vmatprep.subr.mxu0 %v707
    %2340 = vmatpush1.msra.mxu0 %v706
    %2341 = vmatprep.subr.mxu0 0.0
    %2342 = vmatpush1.msra.mxu0 0.0
    %2343 = vmatprep.subr.mxu0 0.0
    %2344 = vmatpush1.msra.mxu0 0.0
    %2345 = vmatprep.subr.mxu0 0.0
    %2346 = vmatpush1.msra.mxu0 0.0
    %2347 = vmatprep.subr.mxu0 0.0
    %2348 = vmatpush1.msra.mxu0 0.0
    %2349 = vmatprep.subr.mxu0 0.0
    %2350 = vmatpush1.msra.mxu0 0.0
    %2351 = vmatprep.subr.mxu0 0.0
    %2352 = vmatpush1.msra.mxu0 0.0
    %2353 = vmatprep.subr.mxu0 0.0
    %2354 = vmatpush1.msra.mxu0 0.0
    %2355 = vmatprep.subr.mxu0 0.0
    %2356 = vmatpush1.msra.mxu0 0.0
    %2357 = vmatprep.subr.mxu0 0.0
    %2358 = vmatpush1.msra.mxu0 0.0
    %2359 = vmatprep.subr.mxu0 0.0
    %2360 = vmatpush1.msra.mxu0 0.0
    %2361 = vmatprep.subr.mxu0 0.0
    %2362 = vmatpush1.msra.mxu0 0.0
    %2363 = vmatprep.subr.mxu0 0.0
    %2364 = vmatpush1.msra.mxu0 0.0
    %2365 = vmatprep.subr.mxu0 0.0
    %2366 = vmatpush1.msra.mxu0 0.0
    %2367 = vmatprep.subr.mxu0 0.0
    %2368 = vmatpush1.msra.mxu0 0.0
    %2369 = vmatprep.subr.mxu0 0.0
    %2370 = vmatpush1.msra.mxu0 0.0
    %2371 = vmatprep.subr.mxu0 0.0
    %2372 = vmatpush1.msra.mxu0 0.0
    %2373 = vmatprep.mubr.f32.mxu0 0.0
    %2374 = vmatmul.mubr.f32.gmra.mrb[0].mxu0 %v2304
    %v2375 = vpop.f32.mrb[0].mxu0
    %v2376 = vadd.f32 %v717, %v2375
    %v2377 = vpop.f32.mrb[0].mxu0
    %v2378 = vadd.f32 %v721, %v2377
    %2379 = vdwg.mxu0
    %2380 = vmatprep.subr.mxu0 0.0
    %2381 = vmatpush1.msra.mxu0 %v663
    %2382 = vmatprep.subr.mxu0 0.0
    %2383 = vmatpush1.msra.mxu0 %v666
    %2384 = vmatprep.subr.mxu0 0.0
    %2385 = vmatpush1.msra.mxu0 %v669
    %2386 = vmatprep.subr.mxu0 0.0
    %2387 = vmatpush1.msra.mxu0 %v672
    %2388 = vmatprep.subr.mxu0 0.0
    %2389 = vmatpush1.msra.mxu0 %v675
    %2390 = vmatprep.subr.mxu0 0.0
    %2391 = vmatpush1.msra.mxu0 %v678
    %2392 = vmatprep.subr.mxu0 0.0
    %2393 = vmatpush1.msra.mxu0 %v681
    %2394 = vmatprep.subr.mxu0 0.0
    %2395 = vmatpush1.msra.mxu0 %v684
    %2396 = vmatprep.subr.mxu0 0.0
    %2397 = vmatpush1.msra.mxu0 %v687
    %2398 = vmatprep.subr.mxu0 0.0
    %2399 = vmatpush1.msra.mxu0 %v690
    %2400 = vmatprep.subr.mxu0 0.0
    %2401 = vmatpush1.msra.mxu0 %v693
    %2402 = vmatprep.subr.mxu0 0.0
    %2403 = vmatpush1.msra.mxu0 %v696
    %2404 = vmatprep.subr.mxu0 0.0
    %2405 = vmatpush1.msra.mxu0 %v699
    %2406 = vmatprep.subr.mxu0 0.0
    %2407 = vmatpush1.msra.mxu0 %v702
    %2408 = vmatprep.subr.mxu0 0.0
    %2409 = vmatpush1.msra.mxu0 %v705
    %2410 = vmatprep.subr.mxu0 0.0
    %2411 = vmatpush1.msra.mxu0 %v708
    %2412 = vmatprep.subr.mxu0 0.0
    %2413 = vmatpush1.msra.mxu0 0.0
    %2414 = vmatprep.subr.mxu0 0.0
    %2415 = vmatpush1.msra.mxu0 0.0
    %2416 = vmatprep.subr.mxu0 0.0
    %2417 = vmatpush1.msra.mxu0 0.0
    %2418 = vmatprep.subr.mxu0 0.0
    %2419 = vmatpush1.msra.mxu0 0.0
    %2420 = vmatprep.subr.mxu0 0.0
    %2421 = vmatpush1.msra.mxu0 0.0
    %2422 = vmatprep.subr.mxu0 0.0
    %2423 = vmatpush1.msra.mxu0 0.0
    %2424 = vmatprep.subr.mxu0 0.0
    %2425 = vmatpush1.msra.mxu0 0.0
    %2426 = vmatprep.subr.mxu0 0.0
    %2427 = vmatpush1.msra.mxu0 0.0
    %2428 = vmatprep.subr.mxu0 0.0
    %2429 = vmatpush1.msra.mxu0 0.0
    %2430 = vmatprep.subr.mxu0 0.0
    %2431 = vmatpush1.msra.mxu0 0.0
    %2432 = vmatprep.subr.mxu0 0.0
    %2433 = vmatpush1.msra.mxu0 0.0
    %2434 = vmatprep.subr.mxu0 0.0
    %2435 = vmatpush1.msra.mxu0 0.0
    %2436 = vmatprep.subr.mxu0 0.0
    %2437 = vmatpush1.msra.mxu0 0.0
    %2438 = vmatprep.subr.mxu0 0.0
    %2439 = vmatpush1.msra.mxu0 0.0
    %2440 = vmatprep.subr.mxu0 0.0
    %2441 = vmatpush1.msra.mxu0 0.0
    %2442 = vmatprep.subr.mxu0 0.0
    %2443 = vmatpush1.msra.mxu0 0.0
    %2444 = vmatprep.mubr.f32.mxu0 0.0
    %2445 = vmatmul.mubr.f32.gmra.mrb[0].mxu0 %v2304
    %v2446 = vpop.f32.mrb[0].mxu0
    %v2447 = vadd.f32 %v725, %v2446
    %v2448 = vpop.f32.mrb[0].mxu0
    %2449 = vdwg.mxu0
    %v2451 = vrot.slane %v2376, 6
    %v2453 = vadd.f32 %v2306, %v2451
    %v2454 = vxor.u32 %v2453, 2147483648
    %v2455 = vmul.f32 %v2454, 1.442695
    %v2456 = vpow.pop %v2455
    %v2457 = vadd.f32 %v2456, 1.0
    %v2458 = vrcp.pop %v2457
    %v2459 = vmul.f32 1.0, %v2458
    %v2461 = vrot.slane %v2378, 6
    %v2463 = vadd.f32 %v2307, %v2461
    %v2464 = vxor.u32 %v2463, 2147483648
    %v2465 = vmul.f32 %v2464, 1.442695
    %v2466 = vpow.pop %v2465
    %v2467 = vadd.f32 %v2466, 1.0
    %v2468 = vrcp.pop %v2467
    %v2469 = vmul.f32 1.0, %v2468
    %v2471 = vrot.slane %v2447, 6
    %v2473 = vmul.f32 %v2459, %v2471
    %v2474 = vadd.f32 %v2308, %v2473
    %v2475 = vtanh.pop %v2474
    %v2476 = vsub.f32 1.0, %v2469
    %v2477 = vmul.f32 %v2476, %v2475
    %v2479 = vrot.slane %v2304, 6
    %v2481 = vmul.f32 %v2469, %v2479
    %v2482 = vadd.f32 %v2477, %v2481
    %2483 = vst [vmem:[#allocation3 + $0x10] sm:$0xc] %v2482
    %v2484 = vld [vmem:[#allocation2 + $0x30] sm:$0x30]
    %v2485 = vld [vmem:[#allocation2 + $0x38] sm:$0x30]
    %v2486 = vld [vmem:[#allocation2 + $0x40] sm:$0x30]
    %v2488 = vrot.slane %v2482, 2
    %2490 = vmatprep.subr.mxu0 %v662
    %2491 = vmatpush1.msra.mxu0 %v661
    %2492 = vmatprep.subr.mxu0 %v665
    %2493 = vmatpush1.msra.mxu0 %v664
    %2494 = vmatprep.subr.mxu0 %v668
    %2495 = vmatpush1.msra.mxu0 %v667
    %2496 = vmatprep.subr.mxu0 %v671
    %2497 = vmatpush1.msra.mxu0 %v670
    %2498 = vmatprep.subr.mxu0 %v674
    %2499 = vmatpush1.msra.mxu0 %v673
    %2500 = vmatprep.subr.mxu0 %v677
    %2501 = vmatpush1.msra.mxu0 %v676
    %2502 = vmatprep.subr.mxu0 %v680
    %2503 = vmatpush1.msra.mxu0 %v679
    %2504 = vmatprep.subr.mxu0 %v683
    %2505 = vmatpush1.msra.mxu0 %v682
    %2506 = vmatprep.subr.mxu0 %v686
    %2507 = vmatpush1.msra.mxu0 %v685
    %2508 = vmatprep.subr.mxu0 %v689
    %2509 = vmatpush1.msra.mxu0 %v688
    %2510 = vmatprep.subr.mxu0 %v692
    %2511 = vmatpush1.msra.mxu0 %v691
    %2512 = vmatprep.subr.mxu0 %v695
    %2513 = vmatpush1.msra.mxu0 %v694
    %2514 = vmatprep.subr.mxu0 %v698
    %2515 = vmatpush1.msra.mxu0 %v697
    %2516 = vmatprep.subr.mxu0 %v701
    %2517 = vmatpush1.msra.mxu0 %v700
    %2518 = vmatprep.subr.mxu0 %v704
    %2519 = vmatpush1.msra.mxu0 %v703
    %2520 = vmatprep.subr.mxu0 %v707
    %2521 = vmatpush1.msra.mxu0 %v706
    %2522 = vmatprep.subr.mxu0 0.0
    %2523 = vmatpush1.msra.mxu0 0.0
    %2524 = vmatprep.subr.mxu0 0.0
    %2525 = vmatpush1.msra.mxu0 0.0
    %2526 = vmatprep.subr.mxu0 0.0
    %2527 = vmatpush1.msra.mxu0 0.0
    %2528 = vmatprep.subr.mxu0 0.0
    %2529 = vmatpush1.msra.mxu0 0.0
    %2530 = vmatprep.subr.mxu0 0.0
    %2531 = vmatpush1.msra.mxu0 0.0
    %2532 = vmatprep.subr.mxu0 0.0
    %2533 = vmatpush1.msra.mxu0 0.0
    %2534 = vmatprep.subr.mxu0 0.0
    %2535 = vmatpush1.msra.mxu0 0.0
    %2536 = vmatprep.subr.mxu0 0.0
    %2537 = vmatpush1.msra.mxu0 0.0
    %2538 = vmatprep.subr.mxu0 0.0
    %2539 = vmatpush1.msra.mxu0 0.0
    %2540 = vmatprep.subr.mxu0 0.0
    %2541 = vmatpush1.msra.mxu0 0.0
    %2542 = vmatprep.subr.mxu0 0.0
    %2543 = vmatpush1.msra.mxu0 0.0
    %2544 = vmatprep.subr.mxu0 0.0
    %2545 = vmatpush1.msra.mxu0 0.0
    %2546 = vmatprep.subr.mxu0 0.0
    %2547 = vmatpush1.msra.mxu0 0.0
    %2548 = vmatprep.subr.mxu0 0.0
    %2549 = vmatpush1.msra.mxu0 0.0
    %2550 = vmatprep.subr.mxu0 0.0
    %2551 = vmatpush1.msra.mxu0 0.0
    %2552 = vmatprep.subr.mxu0 0.0
    %2553 = vmatpush1.msra.mxu0 0.0
    %2554 = vmatprep.mubr.f32.mxu0 0.0
    %2555 = vmatmul.mubr.f32.gmra.mrb[0].mxu0 %v2488
    %v2556 = vpop.f32.mrb[0].mxu0
    %v2557 = vadd.f32 %v717, %v2556
    %v2558 = vpop.f32.mrb[0].mxu0
    %v2559 = vadd.f32 %v721, %v2558
    %2560 = vdwg.mxu0
    %2561 = vmatprep.subr.mxu0 0.0
    %2562 = vmatpush1.msra.mxu0 %v663
    %2563 = vmatprep.subr.mxu0 0.0
    %2564 = vmatpush1.msra.mxu0 %v666
    %2565 = vmatprep.subr.mxu0 0.0
    %2566 = vmatpush1.msra.mxu0 %v669
    %2567 = vmatprep.subr.mxu0 0.0
    %2568 = vmatpush1.msra.mxu0 %v672
    %2569 = vmatprep.subr.mxu0 0.0
    %2570 = vmatpush1.msra.mxu0 %v675
    %2571 = vmatprep.subr.mxu0 0.0
    %2572 = vmatpush1.msra.mxu0 %v678
    %2573 = vmatprep.subr.mxu0 0.0
    %2574 = vmatpush1.msra.mxu0 %v681
    %2575 = vmatprep.subr.mxu0 0.0
    %2576 = vmatpush1.msra.mxu0 %v684
    %2577 = vmatprep.subr.mxu0 0.0
    %2578 = vmatpush1.msra.mxu0 %v687
    %2579 = vmatprep.subr.mxu0 0.0
    %2580 = vmatpush1.msra.mxu0 %v690
    %2581 = vmatprep.subr.mxu0 0.0
    %2582 = vmatpush1.msra.mxu0 %v693
    %2583 = vmatprep.subr.mxu0 0.0
    %2584 = vmatpush1.msra.mxu0 %v696
    %2585 = vmatprep.subr.mxu0 0.0
    %2586 = vmatpush1.msra.mxu0 %v699
    %2587 = vmatprep.subr.mxu0 0.0
    %2588 = vmatpush1.msra.mxu0 %v702
    %2589 = vmatprep.subr.mxu0 0.0
    %2590 = vmatpush1.msra.mxu0 %v705
    %2591 = vmatprep.subr.mxu0 0.0
    %2592 = vmatpush1.msra.mxu0 %v708
    %2593 = vmatprep.subr.mxu0 0.0
    %2594 = vmatpush1.msra.mxu0 0.0
    %2595 = vmatprep.subr.mxu0 0.0
    %2596 = vmatpush1.msra.mxu0 0.0
    %2597 = vmatprep.subr.mxu0 0.0
    %2598 = vmatpush1.msra.mxu0 0.0
    %2599 = vmatprep.subr.mxu0 0.0
    %2600 = vmatpush1.msra.mxu0 0.0
    %2601 = vmatprep.subr.mxu0 0.0
    %2602 = vmatpush1.msra.mxu0 0.0
    %2603 = vmatprep.subr.mxu0 0.0
    %2604 = vmatpush1.msra.mxu0 0.0
    %2605 = vmatprep.subr.mxu0 0.0
    %2606 = vmatpush1.msra.mxu0 0.0
    %2607 = vmatprep.subr.mxu0 0.0
    %2608 = vmatpush1.msra.mxu0 0.0
    %2609 = vmatprep.subr.mxu0 0.0
    %2610 = vmatpush1.msra.mxu0 0.0
    %2611 = vmatprep.subr.mxu0 0.0
    %2612 = vmatpush1.msra.mxu0 0.0
    %2613 = vmatprep.subr.mxu0 0.0
    %2614 = vmatpush1.msra.mxu0 0.0
    %2615 = vmatprep.subr.mxu0 0.0
    %2616 = vmatpush1.msra.mxu0 0.0
    %2617 = vmatprep.subr.mxu0 0.0
    %2618 = vmatpush1.msra.mxu0 0.0
    %2619 = vmatprep.subr.mxu0 0.0
    %2620 = vmatpush1.msra.mxu0 0.0
    %2621 = vmatprep.subr.mxu0 0.0
    %2622 = vmatpush1.msra.mxu0 0.0
    %2623 = vmatprep.subr.mxu0 0.0
    %2624 = vmatpush1.msra.mxu0 0.0
    %2625 = vmatprep.mubr.f32.mxu0 0.0
    %2626 = vmatmul.mubr.f32.gmra.mrb[0].mxu0 %v2488
    %v2627 = vpop.f32.mrb[0].mxu0
    %v2628 = vadd.f32 %v725, %v2627
    %v2629 = vpop.f32.mrb[0].mxu0
    %2630 = vdwg.mxu0
    %v2632 = vrot.slane %v2557, 4
    %v2634 = vadd.f32 %v2484, %v2632
    %v2635 = vxor.u32 %v2634, 2147483648
    %v2636 = vmul.f32 %v2635, 1.442695
    %v2637 = vpow.pop %v2636
    %v2638 = vadd.f32 %v2637, 1.0
    %v2639 = vrcp.pop %v2638
    %v2640 = vmul.f32 1.0, %v2639
    %v2642 = vrot.slane %v2559, 4
    %v2644 = vadd.f32 %v2485, %v2642
    %v2645 = vxor.u32 %v2644, 2147483648
    %v2646 = vmul.f32 %v2645, 1.442695
    %v2647 = vpow.pop %v2646
    %v2648 = vadd.f32 %v2647, 1.0
    %v2649 = vrcp.pop %v2648
    %v2650 = vmul.f32 1.0, %v2649
    %v2652 = vrot.slane %v2628, 4
    %v2654 = vmul.f32 %v2640, %v2652
    %v2655 = vadd.f32 %v2486, %v2654
    %v2656 = vtanh.pop %v2655
    %v2657 = vsub.f32 1.0, %v2650
    %v2658 = vmul.f32 %v2657, %v2656
    %v2659 = vrot.slane %v2482, 6
    %v2661 = vmul.f32 %v2650, %v2659
    %v2662 = vadd.f32 %v2658, %v2661
    %2663 = vst [vmem:[#allocation3 + $0x10] sm:$0x30] %v2662
    %v2664 = vld [vmem:[#allocation2 + $0x30] sm:$0xc0]
    %v2665 = vld [vmem:[#allocation2 + $0x38] sm:$0xc0]
    %v2666 = vld [vmem:[#allocation2 + $0x40] sm:$0xc0]
    %v2668 = vrot.slane %v2662, 4
    %2670 = vmatprep.subr.mxu0 %v662
    %2671 = vmatpush1.msra.mxu0 %v661
    %2672 = vmatprep.subr.mxu0 %v665
    %2673 = vmatpush1.msra.mxu0 %v664
    %2674 = vmatprep.subr.mxu0 %v668
    %2675 = vmatpush1.msra.mxu0 %v667
    %2676 = vmatprep.subr.mxu0 %v671
    %2677 = vmatpush1.msra.mxu0 %v670
    %2678 = vmatprep.subr.mxu0 %v674
    %2679 = vmatpush1.msra.mxu0 %v673
    %2680 = vmatprep.subr.mxu0 %v677
    %2681 = vmatpush1.msra.mxu0 %v676
    %2682 = vmatprep.subr.mxu0 %v680
    %2683 = vmatpush1.msra.mxu0 %v679
    %2684 = vmatprep.subr.mxu0 %v683
    %2685 = vmatpush1.msra.mxu0 %v682
    %2686 = vmatprep.subr.mxu0 %v686
    %2687 = vmatpush1.msra.mxu0 %v685
    %2688 = vmatprep.subr.mxu0 %v689
    %2689 = vmatpush1.msra.mxu0 %v688
    %2690 = vmatprep.subr.mxu0 %v692
    %2691 = vmatpush1.msra.mxu0 %v691
    %2692 = vmatprep.subr.mxu0 %v695
    %2693 = vmatpush1.msra.mxu0 %v694
    %2694 = vmatprep.subr.mxu0 %v698
    %2695 = vmatpush1.msra.mxu0 %v697
    %2696 = vmatprep.subr.mxu0 %v701
    %2697 = vmatpush1.msra.mxu0 %v700
    %2698 = vmatprep.subr.mxu0 %v704
    %2699 = vmatpush1.msra.mxu0 %v703
    %2700 = vmatprep.subr.mxu0 %v707
    %2701 = vmatpush1.msra.mxu0 %v706
    %2702 = vmatprep.subr.mxu0 0.0
    %2703 = vmatpush1.msra.mxu0 0.0
    %2704 = vmatprep.subr.mxu0 0.0
    %2705 = vmatpush1.msra.mxu0 0.0
    %2706 = vmatprep.subr.mxu0 0.0
    %2707 = vmatpush1.msra.mxu0 0.0
    %2708 = vmatprep.subr.mxu0 0.0
    %2709 = vmatpush1.msra.mxu0 0.0
    %2710 = vmatprep.subr.mxu0 0.0
    %2711 = vmatpush1.msra.mxu0 0.0
    %2712 = vmatprep.subr.mxu0 0.0
    %2713 = vmatpush1.msra.mxu0 0.0
    %2714 = vmatprep.subr.mxu0 0.0
    %2715 = vmatpush1.msra.mxu0 0.0
    %2716 = vmatprep.subr.mxu0 0.0
    %2717 = vmatpush1.msra.mxu0 0.0
    %2718 = vmatprep.subr.mxu0 0.0
    %2719 = vmatpush1.msra.mxu0 0.0
    %2720 = vmatprep.subr.mxu0 0.0
    %2721 = vmatpush1.msra.mxu0 0.0
    %2722 = vmatprep.subr.mxu0 0.0
    %2723 = vmatpush1.msra.mxu0 0.0
    %2724 = vmatprep.subr.mxu0 0.0
    %2725 = vmatpush1.msra.mxu0 0.0
    %2726 = vmatprep.subr.mxu0 0.0
    %2727 = vmatpush1.msra.mxu0 0.0
    %2728 = vmatprep.subr.mxu0 0.0
    %2729 = vmatpush1.msra.mxu0 0.0
    %2730 = vmatprep.subr.mxu0 0.0
    %2731 = vmatpush1.msra.mxu0 0.0
    %2732 = vmatprep.subr.mxu0 0.0
    %2733 = vmatpush1.msra.mxu0 0.0
    %2734 = vmatprep.mubr.f32.mxu0 0.0
    %2735 = vmatmul.mubr.f32.gmra.mrb[0].mxu0 %v2668
    %v2736 = vpop.f32.mrb[0].mxu0
    %v2737 = vadd.f32 %v717, %v2736
    %v2738 = vpop.f32.mrb[0].mxu0
    %v2739 = vadd.f32 %v721, %v2738
    %2740 = vdwg.mxu0
    %2741 = vmatprep.subr.mxu0 0.0
    %2742 = vmatpush1.msra.mxu0 %v663
    %2743 = vmatprep.subr.mxu0 0.0
    %2744 = vmatpush1.msra.mxu0 %v666
    %2745 = vmatprep.subr.mxu0 0.0
    %2746 = vmatpush1.msra.mxu0 %v669
    %2747 = vmatprep.subr.mxu0 0.0
    %2748 = vmatpush1.msra.mxu0 %v672
    %2749 = vmatprep.subr.mxu0 0.0
    %2750 = vmatpush1.msra.mxu0 %v675
    %2751 = vmatprep.subr.mxu0 0.0
    %2752 = vmatpush1.msra.mxu0 %v678
    %2753 = vmatprep.subr.mxu0 0.0
    %2754 = vmatpush1.msra.mxu0 %v681
    %2755 = vmatprep.subr.mxu0 0.0
    %2756 = vmatpush1.msra.mxu0 %v684
    %2757 = vmatprep.subr.mxu0 0.0
    %2758 = vmatpush1.msra.mxu0 %v687
    %2759 = vmatprep.subr.mxu0 0.0
    %2760 = vmatpush1.msra.mxu0 %v690
    %2761 = vmatprep.subr.mxu0 0.0
    %2762 = vmatpush1.msra.mxu0 %v693
    %2763 = vmatprep.subr.mxu0 0.0
    %2764 = vmatpush1.msra.mxu0 %v696
    %2765 = vmatprep.subr.mxu0 0.0
    %2766 = vmatpush1.msra.mxu0 %v699
    %2767 = vmatprep.subr.mxu0 0.0
    %2768 = vmatpush1.msra.mxu0 %v702
    %2769 = vmatprep.subr.mxu0 0.0
    %2770 = vmatpush1.msra.mxu0 %v705
    %2771 = vmatprep.subr.mxu0 0.0
    %2772 = vmatpush1.msra.mxu0 %v708
    %2773 = vmatprep.subr.mxu0 0.0
    %2774 = vmatpush1.msra.mxu0 0.0
    %2775 = vmatprep.subr.mxu0 0.0
    %2776 = vmatpush1.msra.mxu0 0.0
    %2777 = vmatprep.subr.mxu0 0.0
    %2778 = vmatpush1.msra.mxu0 0.0
    %2779 = vmatprep.subr.mxu0 0.0
    %2780 = vmatpush1.msra.mxu0 0.0
    %2781 = vmatprep.subr.mxu0 0.0
    %2782 = vmatpush1.msra.mxu0 0.0
    %2783 = vmatprep.subr.mxu0 0.0
    %2784 = vmatpush1.msra.mxu0 0.0
    %2785 = vmatprep.subr.mxu0 0.0
    %2786 = vmatpush1.msra.mxu0 0.0
    %2787 = vmatprep.subr.mxu0 0.0
    %2788 = vmatpush1.msra.mxu0 0.0
    %2789 = vmatprep.subr.mxu0 0.0
    %2790 = vmatpush1.msra.mxu0 0.0
    %2791 = vmatprep.subr.mxu0 0.0
    %2792 = vmatpush1.msra.mxu0 0.0
    %2793 = vmatprep.subr.mxu0 0.0
    %2794 = vmatpush1.msra.mxu0 0.0
    %2795 = vmatprep.subr.mxu0 0.0
    %2796 = vmatpush1.msra.mxu0 0.0
    %2797 = vmatprep.subr.mxu0 0.0
    %2798 = vmatpush1.msra.mxu0 0.0
    %2799 = vmatprep.subr.mxu0 0.0
    %2800 = vmatpush1.msra.mxu0 0.0
    %2801 = vmatprep.subr.mxu0 0.0
    %2802 = vmatpush1.msra.mxu0 0.0
    %2803 = vmatprep.subr.mxu0 0.0
    %2804 = vmatpush1.msra.mxu0 0.0
    %2805 = vmatprep.mubr.f32.mxu0 0.0
    %2806 = vmatmul.mubr.f32.gmra.mrb[0].mxu0 %v2668
    %v2807 = vpop.f32.mrb[0].mxu0
    %v2808 = vadd.f32 %v725, %v2807
    %v2809 = vpop.f32.mrb[0].mxu0
    %2810 = vdwg.mxu0
    %v2812 = vrot.slane %v2737, 2
    %v2814 = vadd.f32 %v2664, %v2812
    %v2815 = vxor.u32 %v2814, 2147483648
    %v2816 = vmul.f32 %v2815, 1.442695
    %v2817 = vpow.pop %v2816
    %v2818 = vadd.f32 %v2817, 1.0
    %v2819 = vrcp.pop %v2818
    %v2820 = vmul.f32 1.0, %v2819
    %v2822 = vrot.slane %v2739, 2
    %v2824 = vadd.f32 %v2665, %v2822
    %v2825 = vxor.u32 %v2824, 2147483648
    %v2826 = vmul.f32 %v2825, 1.442695
    %v2827 = vpow.pop %v2826
    %v2828 = vadd.f32 %v2827, 1.0
    %v2829 = vrcp.pop %v2828
    %v2830 = vmul.f32 1.0, %v2829
    %v2832 = vrot.slane %v2808, 2
    %v2834 = vmul.f32 %v2820, %v2832
    %v2835 = vadd.f32 %v2666, %v2834
    %v2836 = vtanh.pop %v2835
    %v2837 = vsub.f32 1.0, %v2830
    %v2838 = vmul.f32 %v2837, %v2836
    %v2839 = vrot.slane %v2662, 6
    %v2841 = vmul.f32 %v2830, %v2839
    %v2842 = vadd.f32 %v2838, %v2841
    %2843 = vst [vmem:[#allocation3 + $0x10] sm:$0xc0] %v2842
    %v2844 = vld [vmem:[#allocation2 + $0x48] sm:$0x3]
    %v2845 = vld [vmem:[#allocation2 + $0x50] sm:$0x3]
    %v2846 = vld [vmem:[#allocation2 + $0x58] sm:$0x3]
    %v2848 = vrot.slane %v2842, 6
    %2850 = vmatprep.subr.mxu0 %v662
    %2851 = vmatpush1.msra.mxu0 %v661
    %2852 = vmatprep.subr.mxu0 %v665
    %2853 = vmatpush1.msra.mxu0 %v664
    %2854 = vmatprep.subr.mxu0 %v668
    %2855 = vmatpush1.msra.mxu0 %v667
    %2856 = vmatprep.subr.mxu0 %v671
    %2857 = vmatpush1.msra.mxu0 %v670
    %2858 = vmatprep.subr.mxu0 %v674
    %2859 = vmatpush1.msra.mxu0 %v673
    %2860 = vmatprep.subr.mxu0 %v677
    %2861 = vmatpush1.msra.mxu0 %v676
    %2862 = vmatprep.subr.mxu0 %v680
    %2863 = vmatpush1.msra.mxu0 %v679
    %2864 = vmatprep.subr.mxu0 %v683
    %2865 = vmatpush1.msra.mxu0 %v682
    %2866 = vmatprep.subr.mxu0 %v686
    %2867 = vmatpush1.msra.mxu0 %v685
    %2868 = vmatprep.subr.mxu0 %v689
    %2869 = vmatpush1.msra.mxu0 %v688
    %2870 = vmatprep.subr.mxu0 %v692
    %2871 = vmatpush1.msra.mxu0 %v691
    %2872 = vmatprep.subr.mxu0 %v695
    %2873 = vmatpush1.msra.mxu0 %v694
    %2874 = vmatprep.subr.mxu0 %v698
    %2875 = vmatpush1.msra.mxu0 %v697
    %2876 = vmatprep.subr.mxu0 %v701
    %2877 = vmatpush1.msra.mxu0 %v700
    %2878 = vmatprep.subr.mxu0 %v704
    %2879 = vmatpush1.msra.mxu0 %v703
    %2880 = vmatprep.subr.mxu0 %v707
    %2881 = vmatpush1.msra.mxu0 %v706
    %2882 = vmatprep.subr.mxu0 0.0
    %2883 = vmatpush1.msra.mxu0 0.0
    %2884 = vmatprep.subr.mxu0 0.0
    %2885 = vmatpush1.msra.mxu0 0.0
    %2886 = vmatprep.subr.mxu0 0.0
    %2887 = vmatpush1.msra.mxu0 0.0
    %2888 = vmatprep.subr.mxu0 0.0
    %2889 = vmatpush1.msra.mxu0 0.0
    %2890 = vmatprep.subr.mxu0 0.0
    %2891 = vmatpush1.msra.mxu0 0.0
    %2892 = vmatprep.subr.mxu0 0.0
    %2893 = vmatpush1.msra.mxu0 0.0
    %2894 = vmatprep.subr.mxu0 0.0
    %2895 = vmatpush1.msra.mxu0 0.0
    %2896 = vmatprep.subr.mxu0 0.0
    %2897 = vmatpush1.msra.mxu0 0.0
    %2898 = vmatprep.subr.mxu0 0.0
    %2899 = vmatpush1.msra.mxu0 0.0
    %2900 = vmatprep.subr.mxu0 0.0
    %2901 = vmatpush1.msra.mxu0 0.0
    %2902 = vmatprep.subr.mxu0 0.0
    %2903 = vmatpush1.msra.mxu0 0.0
    %2904 = vmatprep.subr.mxu0 0.0
    %2905 = vmatpush1.msra.mxu0 0.0
    %2906 = vmatprep.subr.mxu0 0.0
    %2907 = vmatpush1.msra.mxu0 0.0
    %2908 = vmatprep.subr.mxu0 0.0
    %2909 = vmatpush1.msra.mxu0 0.0
    %2910 = vmatprep.subr.mxu0 0.0
    %2911 = vmatpush1.msra.mxu0 0.0
    %2912 = vmatprep.subr.mxu0 0.0
    %2913 = vmatpush1.msra.mxu0 0.0
    %2914 = vmatprep.mubr.f32.mxu0 0.0
    %2915 = vmatmul.mubr.f32.gmra.mrb[0].mxu0 %v2848
    %v2916 = vpop.f32.mrb[0].mxu0
    %v2917 = vadd.f32 %v717, %v2916
    %v2918 = vpop.f32.mrb[0].mxu0
    %v2919 = vadd.f32 %v721, %v2918
    %2920 = vdwg.mxu0
    %2921 = vmatprep.subr.mxu0 0.0
    %2922 = vmatpush1.msra.mxu0 %v663
    %2923 = vmatprep.subr.mxu0 0.0
    %2924 = vmatpush1.msra.mxu0 %v666
    %2925 = vmatprep.subr.mxu0 0.0
    %2926 = vmatpush1.msra.mxu0 %v669
    %2927 = vmatprep.subr.mxu0 0.0
    %2928 = vmatpush1.msra.mxu0 %v672
    %2929 = vmatprep.subr.mxu0 0.0
    %2930 = vmatpush1.msra.mxu0 %v675
    %2931 = vmatprep.subr.mxu0 0.0
    %2932 = vmatpush1.msra.mxu0 %v678
    %2933 = vmatprep.subr.mxu0 0.0
    %2934 = vmatpush1.msra.mxu0 %v681
    %2935 = vmatprep.subr.mxu0 0.0
    %2936 = vmatpush1.msra.mxu0 %v684
    %2937 = vmatprep.subr.mxu0 0.0
    %2938 = vmatpush1.msra.mxu0 %v687
    %2939 = vmatprep.subr.mxu0 0.0
    %2940 = vmatpush1.msra.mxu0 %v690
    %2941 = vmatprep.subr.mxu0 0.0
    %2942 = vmatpush1.msra.mxu0 %v693
    %2943 = vmatprep.subr.mxu0 0.0
    %2944 = vmatpush1.msra.mxu0 %v696
    %2945 = vmatprep.subr.mxu0 0.0
    %2946 = vmatpush1.msra.mxu0 %v699
    %2947 = vmatprep.subr.mxu0 0.0
    %2948 = vmatpush1.msra.mxu0 %v702
    %2949 = vmatprep.subr.mxu0 0.0
    %2950 = vmatpush1.msra.mxu0 %v705
    %2951 = vmatprep.subr.mxu0 0.0
    %2952 = vmatpush1.msra.mxu0 %v708
    %2953 = vmatprep.subr.mxu0 0.0
    %2954 = vmatpush1.msra.mxu0 0.0
    %2955 = vmatprep.subr.mxu0 0.0
    %2956 = vmatpush1.msra.mxu0 0.0
    %2957 = vmatprep.subr.mxu0 0.0
    %2958 = vmatpush1.msra.mxu0 0.0
    %2959 = vmatprep.subr.mxu0 0.0
    %2960 = vmatpush1.msra.mxu0 0.0
    %2961 = vmatprep.subr.mxu0 0.0
    %2962 = vmatpush1.msra.mxu0 0.0
    %2963 = vmatprep.subr.mxu0 0.0
    %2964 = vmatpush1.msra.mxu0 0.0
    %2965 = vmatprep.subr.mxu0 0.0
    %2966 = vmatpush1.msra.mxu0 0.0
    %2967 = vmatprep.subr.mxu0 0.0
    %2968 = vmatpush1.msra.mxu0 0.0
    %2969 = vmatprep.subr.mxu0 0.0
    %2970 = vmatpush1.msra.mxu0 0.0
    %2971 = vmatprep.subr.mxu0 0.0
    %2972 = vmatpush1.msra.mxu0 0.0
    %2973 = vmatprep.subr.mxu0 0.0
    %2974 = vmatpush1.msra.mxu0 0.0
    %2975 = vmatprep.subr.mxu0 0.0
    %2976 = vmatpush1.msra.mxu0 0.0
    %2977 = vmatprep.subr.mxu0 0.0
    %2978 = vmatpush1.msra.mxu0 0.0
    %2979 = vmatprep.subr.mxu0 0.0
    %2980 = vmatpush1.msra.mxu0 0.0
    %2981 = vmatprep.subr.mxu0 0.0
    %2982 = vmatpush1.msra.mxu0 0.0
    %2983 = vmatprep.subr.mxu0 0.0
    %2984 = vmatpush1.msra.mxu0 0.0
    %2985 = vmatprep.mubr.f32.mxu0 0.0
    %2986 = vmatmul.mubr.f32.gmra.mrb[0].mxu0 %v2848
    %v2987 = vpop.f32.mrb[0].mxu0
    %v2988 = vadd.f32 %v725, %v2987
    %v2989 = vpop.f32.mrb[0].mxu0
    %2990 = vdwg.mxu0
    %v2991 = vadd.f32 %v2844, %v2917
    %v2992 = vxor.u32 %v2991, 2147483648
    %v2993 = vmul.f32 %v2992, 1.442695
    %v2994 = vpow.pop %v2993
    %v2995 = vadd.f32 %v2994, 1.0
    %v2996 = vrcp.pop %v2995
    %v2997 = vmul.f32 1.0, %v2996
    %v2998 = vadd.f32 %v2845, %v2919
    %v2999 = vxor.u32 %v2998, 2147483648
    %v3000 = vmul.f32 %v2999, 1.442695
    %v3001 = vpow.pop %v3000
    %v3002 = vadd.f32 %v3001, 1.0
    %v3003 = vrcp.pop %v3002
    %v3004 = vmul.f32 1.0, %v3003
    %v3005 = vmul.f32 %v2997, %v2988
    %v3006 = vadd.f32 %v2846, %v3005
    %v3007 = vtanh.pop %v3006
    %v3008 = vsub.f32 1.0, %v3004
    %v3009 = vmul.f32 %v3008, %v3007
    %v3010 = vmul.f32 %v3004, %v2848
    %v3011 = vadd.f32 %v3009, %v3010
    %3012 = vst [vmem:[#allocation3 + $0x18] sm:$0x3] %v3011
    %v3013 = vld [vmem:[#allocation2 + $0x48] sm:$0xc]
    %v3014 = vld [vmem:[#allocation2 + $0x50] sm:$0xc]
    %v3015 = vld [vmem:[#allocation2 + $0x58] sm:$0xc]
    %3016 = vmatprep.subr.mxu0 %v662
    %3017 = vmatpush1.msra.mxu0 %v661
    %3018 = vmatprep.subr.mxu0 %v665
    %3019 = vmatpush1.msra.mxu0 %v664
    %3020 = vmatprep.subr.mxu0 %v668
    %3021 = vmatpush1.msra.mxu0 %v667
    %3022 = vmatprep.subr.mxu0 %v671
    %3023 = vmatpush1.msra.mxu0 %v670
    %3024 = vmatprep.subr.mxu0 %v674
    %3025 = vmatpush1.msra.mxu0 %v673
    %3026 = vmatprep.subr.mxu0 %v677
    %3027 = vmatpush1.msra.mxu0 %v676
    %3028 = vmatprep.subr.mxu0 %v680
    %3029 = vmatpush1.msra.mxu0 %v679
    %3030 = vmatprep.subr.mxu0 %v683
    %3031 = vmatpush1.msra.mxu0 %v682
    %3032 = vmatprep.subr.mxu0 %v686
    %3033 = vmatpush1.msra.mxu0 %v685
    %3034 = vmatprep.subr.mxu0 %v689
    %3035 = vmatpush1.msra.mxu0 %v688
    %3036 = vmatprep.subr.mxu0 %v692
    %3037 = vmatpush1.msra.mxu0 %v691
    %3038 = vmatprep.subr.mxu0 %v695
    %3039 = vmatpush1.msra.mxu0 %v694
    %3040 = vmatprep.subr.mxu0 %v698
    %3041 = vmatpush1.msra.mxu0 %v697
    %3042 = vmatprep.subr.mxu0 %v701
    %3043 = vmatpush1.msra.mxu0 %v700
    %3044 = vmatprep.subr.mxu0 %v704
    %3045 = vmatpush1.msra.mxu0 %v703
    %3046 = vmatprep.subr.mxu0 %v707
    %3047 = vmatpush1.msra.mxu0 %v706
    %3048 = vmatprep.subr.mxu0 0.0
    %3049 = vmatpush1.msra.mxu0 0.0
    %3050 = vmatprep.subr.mxu0 0.0
    %3051 = vmatpush1.msra.mxu0 0.0
    %3052 = vmatprep.subr.mxu0 0.0
    %3053 = vmatpush1.msra.mxu0 0.0
    %3054 = vmatprep.subr.mxu0 0.0
    %3055 = vmatpush1.msra.mxu0 0.0
    %3056 = vmatprep.subr.mxu0 0.0
    %3057 = vmatpush1.msra.mxu0 0.0
    %3058 = vmatprep.subr.mxu0 0.0
    %3059 = vmatpush1.msra.mxu0 0.0
    %3060 = vmatprep.subr.mxu0 0.0
    %3061 = vmatpush1.msra.mxu0 0.0
    %3062 = vmatprep.subr.mxu0 0.0
    %3063 = vmatpush1.msra.mxu0 0.0
    %3064 = vmatprep.subr.mxu0 0.0
    %3065 = vmatpush1.msra.mxu0 0.0
    %3066 = vmatprep.subr.mxu0 0.0
    %3067 = vmatpush1.msra.mxu0 0.0
    %3068 = vmatprep.subr.mxu0 0.0
    %3069 = vmatpush1.msra.mxu0 0.0
    %3070 = vmatprep.subr.mxu0 0.0
    %3071 = vmatpush1.msra.mxu0 0.0
    %3072 = vmatprep.subr.mxu0 0.0
    %3073 = vmatpush1.msra.mxu0 0.0
    %3074 = vmatprep.subr.mxu0 0.0
    %3075 = vmatpush1.msra.mxu0 0.0
    %3076 = vmatprep.subr.mxu0 0.0
    %3077 = vmatpush1.msra.mxu0 0.0
    %3078 = vmatprep.subr.mxu0 0.0
    %3079 = vmatpush1.msra.mxu0 0.0
    %3080 = vmatprep.mubr.f32.mxu0 0.0
    %3081 = vmatmul.mubr.f32.gmra.mrb[0].mxu0 %v3011
    %v3082 = vpop.f32.mrb[0].mxu0
    %v3083 = vadd.f32 %v717, %v3082
    %v3084 = vpop.f32.mrb[0].mxu0
    %v3085 = vadd.f32 %v721, %v3084
    %3086 = vdwg.mxu0
    %3087 = vmatprep.subr.mxu0 0.0
    %3088 = vmatpush1.msra.mxu0 %v663
    %3089 = vmatprep.subr.mxu0 0.0
    %3090 = vmatpush1.msra.mxu0 %v666
    %3091 = vmatprep.subr.mxu0 0.0
    %3092 = vmatpush1.msra.mxu0 %v669
    %3093 = vmatprep.subr.mxu0 0.0
    %3094 = vmatpush1.msra.mxu0 %v672
    %3095 = vmatprep.subr.mxu0 0.0
    %3096 = vmatpush1.msra.mxu0 %v675
    %3097 = vmatprep.subr.mxu0 0.0
    %3098 = vmatpush1.msra.mxu0 %v678
    %3099 = vmatprep.subr.mxu0 0.0
    %3100 = vmatpush1.msra.mxu0 %v681
    %3101 = vmatprep.subr.mxu0 0.0
    %3102 = vmatpush1.msra.mxu0 %v684
    %3103 = vmatprep.subr.mxu0 0.0
    %3104 = vmatpush1.msra.mxu0 %v687
    %3105 = vmatprep.subr.mxu0 0.0
    %3106 = vmatpush1.msra.mxu0 %v690
    %3107 = vmatprep.subr.mxu0 0.0
    %3108 = vmatpush1.msra.mxu0 %v693
    %3109 = vmatprep.subr.mxu0 0.0
    %3110 = vmatpush1.msra.mxu0 %v696
    %3111 = vmatprep.subr.mxu0 0.0
    %3112 = vmatpush1.msra.mxu0 %v699
    %3113 = vmatprep.subr.mxu0 0.0
    %3114 = vmatpush1.msra.mxu0 %v702
    %3115 = vmatprep.subr.mxu0 0.0
    %3116 = vmatpush1.msra.mxu0 %v705
    %3117 = vmatprep.subr.mxu0 0.0
    %3118 = vmatpush1.msra.mxu0 %v708
    %3119 = vmatprep.subr.mxu0 0.0
    %3120 = vmatpush1.msra.mxu0 0.0
    %3121 = vmatprep.subr.mxu0 0.0
    %3122 = vmatpush1.msra.mxu0 0.0
    %3123 = vmatprep.subr.mxu0 0.0
    %3124 = vmatpush1.msra.mxu0 0.0
    %3125 = vmatprep.subr.mxu0 0.0
    %3126 = vmatpush1.msra.mxu0 0.0
    %3127 = vmatprep.subr.mxu0 0.0
    %3128 = vmatpush1.msra.mxu0 0.0
    %3129 = vmatprep.subr.mxu0 0.0
    %3130 = vmatpush1.msra.mxu0 0.0
    %3131 = vmatprep.subr.mxu0 0.0
    %3132 = vmatpush1.msra.mxu0 0.0
    %3133 = vmatprep.subr.mxu0 0.0
    %3134 = vmatpush1.msra.mxu0 0.0
    %3135 = vmatprep.subr.mxu0 0.0
    %3136 = vmatpush1.msra.mxu0 0.0
    %3137 = vmatprep.subr.mxu0 0.0
    %3138 = vmatpush1.msra.mxu0 0.0
    %3139 = vmatprep.subr.mxu0 0.0
    %3140 = vmatpush1.msra.mxu0 0.0
    %3141 = vmatprep.subr.mxu0 0.0
    %3142 = vmatpush1.msra.mxu0 0.0
    %3143 = vmatprep.subr.mxu0 0.0
    %3144 = vmatpush1.msra.mxu0 0.0
    %3145 = vmatprep.subr.mxu0 0.0
    %3146 = vmatpush1.msra.mxu0 0.0
    %3147 = vmatprep.subr.mxu0 0.0
    %3148 = vmatpush1.msra.mxu0 0.0
    %3149 = vmatprep.subr.mxu0 0.0
    %3150 = vmatpush1.msra.mxu0 0.0
    %3151 = vmatprep.mubr.f32.mxu0 0.0
    %3152 = vmatmul.mubr.f32.gmra.mrb[0].mxu0 %v3011
    %v3153 = vpop.f32.mrb[0].mxu0
    %v3154 = vadd.f32 %v725, %v3153
    %v3155 = vpop.f32.mrb[0].mxu0
    %3156 = vdwg.mxu0
    %v3158 = vrot.slane %v3083, 6
    %v3160 = vadd.f32 %v3013, %v3158
    %v3161 = vxor.u32 %v3160, 2147483648
    %v3162 = vmul.f32 %v3161, 1.442695
    %v3163 = vpow.pop %v3162
    %v3164 = vadd.f32 %v3163, 1.0
    %v3165 = vrcp.pop %v3164
    %v3166 = vmul.f32 1.0, %v3165
    %v3168 = vrot.slane %v3085, 6
    %v3170 = vadd.f32 %v3014, %v3168
    %v3171 = vxor.u32 %v3170, 2147483648
    %v3172 = vmul.f32 %v3171, 1.442695
    %v3173 = vpow.pop %v3172
    %v3174 = vadd.f32 %v3173, 1.0
    %v3175 = vrcp.pop %v3174
    %v3176 = vmul.f32 1.0, %v3175
    %v3178 = vrot.slane %v3154, 6
    %v3180 = vmul.f32 %v3166, %v3178
    %v3181 = vadd.f32 %v3015, %v3180
    %v3182 = vtanh.pop %v3181
    %v3183 = vsub.f32 1.0, %v3176
    %v3184 = vmul.f32 %v3183, %v3182
    %v3186 = vrot.slane %v3011, 6
    %v3188 = vmul.f32 %v3176, %v3186
    %v3189 = vadd.f32 %v3184, %v3188
    %3190 = vst [vmem:[#allocation3 + $0x18] sm:$0xc] %v3189
    %v3191 = vld [vmem:[#allocation2 + $0x48] sm:$0x30]
    %v3192 = vld [vmem:[#allocation2 + $0x50] sm:$0x30]
    %v3193 = vld [vmem:[#allocation2 + $0x58] sm:$0x30]
    %v3195 = vrot.slane %v3189, 2
    %3197 = vmatprep.subr.mxu0 %v662
    %3198 = vmatpush1.msra.mxu0 %v661
    %3199 = vmatprep.subr.mxu0 %v665
    %3200 = vmatpush1.msra.mxu0 %v664
    %3201 = vmatprep.subr.mxu0 %v668
    %3202 = vmatpush1.msra.mxu0 %v667
    %3203 = vmatprep.subr.mxu0 %v671
    %3204 = vmatpush1.msra.mxu0 %v670
    %3205 = vmatprep.subr.mxu0 %v674
    %3206 = vmatpush1.msra.mxu0 %v673
    %3207 = vmatprep.subr.mxu0 %v677
    %3208 = vmatpush1.msra.mxu0 %v676
    %3209 = vmatprep.subr.mxu0 %v680
    %3210 = vmatpush1.msra.mxu0 %v679
    %3211 = vmatprep.subr.mxu0 %v683
    %3212 = vmatpush1.msra.mxu0 %v682
    %3213 = vmatprep.subr.mxu0 %v686
    %3214 = vmatpush1.msra.mxu0 %v685
    %3215 = vmatprep.subr.mxu0 %v689
    %3216 = vmatpush1.msra.mxu0 %v688
    %3217 = vmatprep.subr.mxu0 %v692
    %3218 = vmatpush1.msra.mxu0 %v691
    %3219 = vmatprep.subr.mxu0 %v695
    %3220 = vmatpush1.msra.mxu0 %v694
    %3221 = vmatprep.subr.mxu0 %v698
    %3222 = vmatpush1.msra.mxu0 %v697
    %3223 = vmatprep.subr.mxu0 %v701
    %3224 = vmatpush1.msra.mxu0 %v700
    %3225 = vmatprep.subr.mxu0 %v704
    %3226 = vmatpush1.msra.mxu0 %v703
    %3227 = vmatprep.subr.mxu0 %v707
    %3228 = vmatpush1.msra.mxu0 %v706
    %3229 = vmatprep.subr.mxu0 0.0
    %3230 = vmatpush1.msra.mxu0 0.0
    %3231 = vmatprep.subr.mxu0 0.0
    %3232 = vmatpush1.msra.mxu0 0.0
    %3233 = vmatprep.subr.mxu0 0.0
    %3234 = vmatpush1.msra.mxu0 0.0
    %3235 = vmatprep.subr.mxu0 0.0
    %3236 = vmatpush1.msra.mxu0 0.0
    %3237 = vmatprep.subr.mxu0 0.0
    %3238 = vmatpush1.msra.mxu0 0.0
    %3239 = vmatprep.subr.mxu0 0.0
    %3240 = vmatpush1.msra.mxu0 0.0
    %3241 = vmatprep.subr.mxu0 0.0
    %3242 = vmatpush1.msra.mxu0 0.0
    %3243 = vmatprep.subr.mxu0 0.0
    %3244 = vmatpush1.msra.mxu0 0.0
    %3245 = vmatprep.subr.mxu0 0.0
    %3246 = vmatpush1.msra.mxu0 0.0
    %3247 = vmatprep.subr.mxu0 0.0
    %3248 = vmatpush1.msra.mxu0 0.0
    %3249 = vmatprep.subr.mxu0 0.0
    %3250 = vmatpush1.msra.mxu0 0.0
    %3251 = vmatprep.subr.mxu0 0.0
    %3252 = vmatpush1.msra.mxu0 0.0
    %3253 = vmatprep.subr.mxu0 0.0
    %3254 = vmatpush1.msra.mxu0 0.0
    %3255 = vmatprep.subr.mxu0 0.0
    %3256 = vmatpush1.msra.mxu0 0.0
    %3257 = vmatprep.subr.mxu0 0.0
    %3258 = vmatpush1.msra.mxu0 0.0
    %3259 = vmatprep.subr.mxu0 0.0
    %3260 = vmatpush1.msra.mxu0 0.0
    %3261 = vmatprep.mubr.f32.mxu0 0.0
    %3262 = vmatmul.mubr.f32.gmra.mrb[0].mxu0 %v3195
    %v3263 = vpop.f32.mrb[0].mxu0
    %v3264 = vadd.f32 %v717, %v3263
    %v3265 = vpop.f32.mrb[0].mxu0
    %v3266 = vadd.f32 %v721, %v3265
    %3267 = vdwg.mxu0
    %3268 = vmatprep.subr.mxu0 0.0
    %3269 = vmatpush1.msra.mxu0 %v663
    %3270 = vmatprep.subr.mxu0 0.0
    %3271 = vmatpush1.msra.mxu0 %v666
    %3272 = vmatprep.subr.mxu0 0.0
    %3273 = vmatpush1.msra.mxu0 %v669
    %3274 = vmatprep.subr.mxu0 0.0
    %3275 = vmatpush1.msra.mxu0 %v672
    %3276 = vmatprep.subr.mxu0 0.0
    %3277 = vmatpush1.msra.mxu0 %v675
    %3278 = vmatprep.subr.mxu0 0.0
    %3279 = vmatpush1.msra.mxu0 %v678
    %3280 = vmatprep.subr.mxu0 0.0
    %3281 = vmatpush1.msra.mxu0 %v681
    %3282 = vmatprep.subr.mxu0 0.0
    %3283 = vmatpush1.msra.mxu0 %v684
    %3284 = vmatprep.subr.mxu0 0.0
    %3285 = vmatpush1.msra.mxu0 %v687
    %3286 = vmatprep.subr.mxu0 0.0
    %3287 = vmatpush1.msra.mxu0 %v690
    %3288 = vmatprep.subr.mxu0 0.0
    %3289 = vmatpush1.msra.mxu0 %v693
    %3290 = vmatprep.subr.mxu0 0.0
    %3291 = vmatpush1.msra.mxu0 %v696
    %3292 = vmatprep.subr.mxu0 0.0
    %3293 = vmatpush1.msra.mxu0 %v699
    %3294 = vmatprep.subr.mxu0 0.0
    %3295 = vmatpush1.msra.mxu0 %v702
    %3296 = vmatprep.subr.mxu0 0.0
    %3297 = vmatpush1.msra.mxu0 %v705
    %3298 = vmatprep.subr.mxu0 0.0
    %3299 = vmatpush1.msra.mxu0 %v708
    %3300 = vmatprep.subr.mxu0 0.0
    %3301 = vmatpush1.msra.mxu0 0.0
    %3302 = vmatprep.subr.mxu0 0.0
    %3303 = vmatpush1.msra.mxu0 0.0
    %3304 = vmatprep.subr.mxu0 0.0
    %3305 = vmatpush1.msra.mxu0 0.0
    %3306 = vmatprep.subr.mxu0 0.0
    %3307 = vmatpush1.msra.mxu0 0.0
    %3308 = vmatprep.subr.mxu0 0.0
    %3309 = vmatpush1.msra.mxu0 0.0
    %3310 = vmatprep.subr.mxu0 0.0
    %3311 = vmatpush1.msra.mxu0 0.0
    %3312 = vmatprep.subr.mxu0 0.0
    %3313 = vmatpush1.msra.mxu0 0.0
    %3314 = vmatprep.subr.mxu0 0.0
    %3315 = vmatpush1.msra.mxu0 0.0
    %3316 = vmatprep.subr.mxu0 0.0
    %3317 = vmatpush1.msra.mxu0 0.0
    %3318 = vmatprep.subr.mxu0 0.0
    %3319 = vmatpush1.msra.mxu0 0.0
    %3320 = vmatprep.subr.mxu0 0.0
    %3321 = vmatpush1.msra.mxu0 0.0
    %3322 = vmatprep.subr.mxu0 0.0
    %3323 = vmatpush1.msra.mxu0 0.0
    %3324 = vmatprep.subr.mxu0 0.0
    %3325 = vmatpush1.msra.mxu0 0.0
    %3326 = vmatprep.subr.mxu0 0.0
    %3327 = vmatpush1.msra.mxu0 0.0
    %3328 = vmatprep.subr.mxu0 0.0
    %3329 = vmatpush1.msra.mxu0 0.0
    %3330 = vmatprep.subr.mxu0 0.0
    %3331 = vmatpush1.msra.mxu0 0.0
    %3332 = vmatprep.mubr.f32.mxu0 0.0
    %3333 = vmatmul.mubr.f32.gmra.mrb[0].mxu0 %v3195
    %v3334 = vpop.f32.mrb[0].mxu0
    %v3335 = vadd.f32 %v725, %v3334
    %v3336 = vpop.f32.mrb[0].mxu0
    %3337 = vdwg.mxu0
    %v3339 = vrot.slane %v3264, 4
    %v3341 = vadd.f32 %v3191, %v3339
    %v3342 = vxor.u32 %v3341, 2147483648
    %v3343 = vmul.f32 %v3342, 1.442695
    %v3344 = vpow.pop %v3343
    %v3345 = vadd.f32 %v3344, 1.0
    %v3346 = vrcp.pop %v3345
    %v3347 = vmul.f32 1.0, %v3346
    %v3349 = vrot.slane %v3266, 4
    %v3351 = vadd.f32 %v3192, %v3349
    %v3352 = vxor.u32 %v3351, 2147483648
    %v3353 = vmul.f32 %v3352, 1.442695
    %v3354 = vpow.pop %v3353
    %v3355 = vadd.f32 %v3354, 1.0
    %v3356 = vrcp.pop %v3355
    %v3357 = vmul.f32 1.0, %v3356
    %v3359 = vrot.slane %v3335, 4
    %v3361 = vmul.f32 %v3347, %v3359
    %v3362 = vadd.f32 %v3193, %v3361
    %v3363 = vtanh.pop %v3362
    %v3364 = vsub.f32 1.0, %v3357
    %v3365 = vmul.f32 %v3364, %v3363
    %v3366 = vrot.slane %v3189, 6
    %v3368 = vmul.f32 %v3357, %v3366
    %v3369 = vadd.f32 %v3365, %v3368
    %3370 = vst [vmem:[#allocation3 + $0x18] sm:$0x30] %v3369
    %v3371 = vld [vmem:[#allocation2 + $0x48] sm:$0xc0]
    %v3372 = vld [vmem:[#allocation2 + $0x50] sm:$0xc0]
    %v3373 = vld [vmem:[#allocation2 + $0x58] sm:$0xc0]
    %v3375 = vrot.slane %v3369, 4
    %3377 = vmatprep.subr.mxu0 %v662
    %3378 = vmatpush1.msra.mxu0 %v661
    %3379 = vmatprep.subr.mxu0 %v665
    %3380 = vmatpush1.msra.mxu0 %v664
    %3381 = vmatprep.subr.mxu0 %v668
    %3382 = vmatpush1.msra.mxu0 %v667
    %3383 = vmatprep.subr.mxu0 %v671
    %3384 = vmatpush1.msra.mxu0 %v670
    %3385 = vmatprep.subr.mxu0 %v674
    %3386 = vmatpush1.msra.mxu0 %v673
    %3387 = vmatprep.subr.mxu0 %v677
    %3388 = vmatpush1.msra.mxu0 %v676
    %3389 = vmatprep.subr.mxu0 %v680
    %3390 = vmatpush1.msra.mxu0 %v679
    %3391 = vmatprep.subr.mxu0 %v683
    %3392 = vmatpush1.msra.mxu0 %v682
    %3393 = vmatprep.subr.mxu0 %v686
    %3394 = vmatpush1.msra.mxu0 %v685
    %3395 = vmatprep.subr.mxu0 %v689
    %3396 = vmatpush1.msra.mxu0 %v688
    %3397 = vmatprep.subr.mxu0 %v692
    %3398 = vmatpush1.msra.mxu0 %v691
    %3399 = vmatprep.subr.mxu0 %v695
    %3400 = vmatpush1.msra.mxu0 %v694
    %3401 = vmatprep.subr.mxu0 %v698
    %3402 = vmatpush1.msra.mxu0 %v697
    %3403 = vmatprep.subr.mxu0 %v701
    %3404 = vmatpush1.msra.mxu0 %v700
    %3405 = vmatprep.subr.mxu0 %v704
    %3406 = vmatpush1.msra.mxu0 %v703
    %3407 = vmatprep.subr.mxu0 %v707
    %3408 = vmatpush1.msra.mxu0 %v706
    %3409 = vmatprep.subr.mxu0 0.0
    %3410 = vmatpush1.msra.mxu0 0.0
    %3411 = vmatprep.subr.mxu0 0.0
    %3412 = vmatpush1.msra.mxu0 0.0
    %3413 = vmatprep.subr.mxu0 0.0
    %3414 = vmatpush1.msra.mxu0 0.0
    %3415 = vmatprep.subr.mxu0 0.0
    %3416 = vmatpush1.msra.mxu0 0.0
    %3417 = vmatprep.subr.mxu0 0.0
    %3418 = vmatpush1.msra.mxu0 0.0
    %3419 = vmatprep.subr.mxu0 0.0
    %3420 = vmatpush1.msra.mxu0 0.0
    %3421 = vmatprep.subr.mxu0 0.0
    %3422 = vmatpush1.msra.mxu0 0.0
    %3423 = vmatprep.subr.mxu0 0.0
    %3424 = vmatpush1.msra.mxu0 0.0
    %3425 = vmatprep.subr.mxu0 0.0
    %3426 = vmatpush1.msra.mxu0 0.0
    %3427 = vmatprep.subr.mxu0 0.0
    %3428 = vmatpush1.msra.mxu0 0.0
    %3429 = vmatprep.subr.mxu0 0.0
    %3430 = vmatpush1.msra.mxu0 0.0
    %3431 = vmatprep.subr.mxu0 0.0
    %3432 = vmatpush1.msra.mxu0 0.0
    %3433 = vmatprep.subr.mxu0 0.0
    %3434 = vmatpush1.msra.mxu0 0.0
    %3435 = vmatprep.subr.mxu0 0.0
    %3436 = vmatpush1.msra.mxu0 0.0
    %3437 = vmatprep.subr.mxu0 0.0
    %3438 = vmatpush1.msra.mxu0 0.0
    %3439 = vmatprep.subr.mxu0 0.0
    %3440 = vmatpush1.msra.mxu0 0.0
    %3441 = vmatprep.mubr.f32.mxu0 0.0
    %3442 = vmatmul.mubr.f32.gmra.mrb[0].mxu0 %v3375
    %v3443 = vpop.f32.mrb[0].mxu0
    %v3444 = vadd.f32 %v717, %v3443
    %v3445 = vpop.f32.mrb[0].mxu0
    %v3446 = vadd.f32 %v721, %v3445
    %3447 = vdwg.mxu0
    %3448 = vmatprep.subr.mxu0 0.0
    %3449 = vmatpush1.msra.mxu0 %v663
    %3450 = vmatprep.subr.mxu0 0.0
    %3451 = vmatpush1.msra.mxu0 %v666
    %3452 = vmatprep.subr.mxu0 0.0
    %3453 = vmatpush1.msra.mxu0 %v669
    %3454 = vmatprep.subr.mxu0 0.0
    %3455 = vmatpush1.msra.mxu0 %v672
    %3456 = vmatprep.subr.mxu0 0.0
    %3457 = vmatpush1.msra.mxu0 %v675
    %3458 = vmatprep.subr.mxu0 0.0
    %3459 = vmatpush1.msra.mxu0 %v678
    %3460 = vmatprep.subr.mxu0 0.0
    %3461 = vmatpush1.msra.mxu0 %v681
    %3462 = vmatprep.subr.mxu0 0.0
    %3463 = vmatpush1.msra.mxu0 %v684
    %3464 = vmatprep.subr.mxu0 0.0
    %3465 = vmatpush1.msra.mxu0 %v687
    %3466 = vmatprep.subr.mxu0 0.0
    %3467 = vmatpush1.msra.mxu0 %v690
    %3468 = vmatprep.subr.mxu0 0.0
    %3469 = vmatpush1.msra.mxu0 %v693
    %3470 = vmatprep.subr.mxu0 0.0
    %3471 = vmatpush1.msra.mxu0 %v696
    %3472 = vmatprep.subr.mxu0 0.0
    %3473 = vmatpush1.msra.mxu0 %v699
    %3474 = vmatprep.subr.mxu0 0.0
    %3475 = vmatpush1.msra.mxu0 %v702
    %3476 = vmatprep.subr.mxu0 0.0
    %3477 = vmatpush1.msra.mxu0 %v705
    %3478 = vmatprep.subr.mxu0 0.0
    %3479 = vmatpush1.msra.mxu0 %v708
    %3480 = vmatprep.subr.mxu0 0.0
    %3481 = vmatpush1.msra.mxu0 0.0
    %3482 = vmatprep.subr.mxu0 0.0
    %3483 = vmatpush1.msra.mxu0 0.0
    %3484 = vmatprep.subr.mxu0 0.0
    %3485 = vmatpush1.msra.mxu0 0.0
    %3486 = vmatprep.subr.mxu0 0.0
    %3487 = vmatpush1.msra.mxu0 0.0
    %3488 = vmatprep.subr.mxu0 0.0
    %3489 = vmatpush1.msra.mxu0 0.0
    %3490 = vmatprep.subr.mxu0 0.0
    %3491 = vmatpush1.msra.mxu0 0.0
    %3492 = vmatprep.subr.mxu0 0.0
    %3493 = vmatpush1.msra.mxu0 0.0
    %3494 = vmatprep.subr.mxu0 0.0
    %3495 = vmatpush1.msra.mxu0 0.0
    %3496 = vmatprep.subr.mxu0 0.0
    %3497 = vmatpush1.msra.mxu0 0.0
    %3498 = vmatprep.subr.mxu0 0.0
    %3499 = vmatpush1.msra.mxu0 0.0
    %3500 = vmatprep.subr.mxu0 0.0
    %3501 = vmatpush1.msra.mxu0 0.0
    %3502 = vmatprep.subr.mxu0 0.0
    %3503 = vmatpush1.msra.mxu0 0.0
    %3504 = vmatprep.subr.mxu0 0.0
    %3505 = vmatpush1.msra.mxu0 0.0
    %3506 = vmatprep.subr.mxu0 0.0
    %3507 = vmatpush1.msra.mxu0 0.0
    %3508 = vmatprep.subr.mxu0 0.0
    %3509 = vmatpush1.msra.mxu0 0.0
    %3510 = vmatprep.subr.mxu0 0.0
    %3511 = vmatpush1.msra.mxu0 0.0
    %3512 = vmatprep.mubr.f32.mxu0 0.0
    %3513 = vmatmul.mubr.f32.gmra.mrb[0].mxu0 %v3375
    %v3514 = vpop.f32.mrb[0].mxu0
    %v3515 = vadd.f32 %v725, %v3514
    %v3516 = vpop.f32.mrb[0].mxu0
    %3517 = vdwg.mxu0
    %v3519 = vrot.slane %v3444, 2
    %v3521 = vadd.f32 %v3371, %v3519
    %v3522 = vxor.u32 %v3521, 2147483648
    %v3523 = vmul.f32 %v3522, 1.442695
    %v3524 = vpow.pop %v3523
    %v3525 = vadd.f32 %v3524, 1.0
    %v3526 = vrcp.pop %v3525
    %v3527 = vmul.f32 1.0, %v3526
    %v3529 = vrot.slane %v3446, 2
    %v3531 = vadd.f32 %v3372, %v3529
    %v3532 = vxor.u32 %v3531, 2147483648
    %v3533 = vmul.f32 %v3532, 1.442695
    %v3534 = vpow.pop %v3533
    %v3535 = vadd.f32 %v3534, 1.0
    %v3536 = vrcp.pop %v3535
    %v3537 = vmul.f32 1.0, %v3536
    %v3539 = vrot.slane %v3515, 2
    %v3541 = vmul.f32 %v3527, %v3539
    %v3542 = vadd.f32 %v3373, %v3541
    %v3543 = vtanh.pop %v3542
    %v3544 = vsub.f32 1.0, %v3537
    %v3545 = vmul.f32 %v3544, %v3543
    %v3546 = vrot.slane %v3369, 6
    %v3548 = vmul.f32 %v3537, %v3546
    %v3549 = vadd.f32 %v3545, %v3548
    %3550 = vst [vmem:[#allocation3 + $0x18] sm:$0xc0] %v3549
    %v3551 = vld [vmem:[#allocation3] sm:$0xff]
    %v3552 = vld [vmem:[#allocation3 + $0x8] sm:$0xff]
    %v3553 = vld [vmem:[#allocation3 + $0x10] sm:$0xff]
    %v3554 = vld [vmem:[#allocation3 + $0x18] sm:$0xff]
    %v3555 = vld [vmem:[#allocation3 + $0x20] sm:$0x3]
    %3556 = vst [vmem:[%s4] sm:$0xff] %v3551
    %3557 = vst [vmem:[%s4 + $0x8] sm:$0xff] %v3552
    %3558 = vst [vmem:[%s4 + $0x10] sm:$0xff] %v3553
    %3559 = vst [vmem:[%s4 + $0x18] sm:$0xff] %v3554
    %3560 = vst [vmem:[%s4 + $0x20] sm:$0x3] %v3555
    %v3561 = vld [vmem:[#allocation3] sm:$0xff]
    %v3562 = vld [vmem:[#allocation3 + $0x8] sm:$0xff]
    %v3563 = vld [vmem:[#allocation3 + $0x10] sm:$0xff]
    %v3564 = vld [vmem:[#allocation3 + $0x18] sm:$0xff]
    %v3565 = vld [vmem:[#allocation3 + $0x20] sm:$0x3]
    %v3566 = vld [vmem:[#allocation4 + $0x180] sm:$0xff]
    %v3567 = vld [vmem:[#allocation4 + $0x188] sm:$0xff]
    %v3568 = vld [vmem:[#allocation4 + $0x190] sm:$0xff]
    %v3569 = vld [vmem:[#allocation4 + $0x198] sm:$0xff]
    %v3570 = vld [vmem:[#allocation4 + $0x1a0] sm:$0xff]
    %v3571 = vld [vmem:[#allocation4 + $0x1a8] sm:$0xff]
    %v3572 = vld [vmem:[#allocation4 + $0x1b0] sm:$0xff]
    %v3573 = vld [vmem:[#allocation4 + $0x1b8] sm:$0xff]
    %v3574 = vld [vmem:[#allocation4 + $0x1c0] sm:$0xff]
    %v3575 = vld [vmem:[#allocation4 + $0x1c8] sm:$0xff]
    %v3576 = vld [vmem:[#allocation4 + $0x1d0] sm:$0xff]
    %v3577 = vld [vmem:[#allocation4 + $0x1d8] sm:$0xff]
    %v3578 = vld [vmem:[#allocation4 + $0x1e0] sm:$0xff]
    %v3579 = vld [vmem:[#allocation4 + $0x1e8] sm:$0xff]
    %v3580 = vld [vmem:[#allocation4 + $0x1f0] sm:$0xff]
    %v3581 = vld [vmem:[#allocation4 + $0x1f8] sm:$0xff]
    %v3582 = vld [vmem:[%s3 + $0x5] sm:$0x1]
    %v3583 = vlaneseq
    %v3584 = vshrl.u32 %v3583, 7
    %v3585 = vsub.s32 0, %v3584
    %v3586 = vrot.slane %v3582, %v3585
    %3587 = vmatprep.subr.mxu0 0.0
    %3588 = vmatpush1.msra.mxu0 %v3566
    %3589 = vmatprep.subr.mxu0 0.0
    %3590 = vmatpush1.msra.mxu0 %v3567
    %3591 = vmatprep.subr.mxu0 0.0
    %3592 = vmatpush1.msra.mxu0 %v3568
    %3593 = vmatprep.subr.mxu0 0.0
    %3594 = vmatpush1.msra.mxu0 %v3569
    %3595 = vmatprep.subr.mxu0 0.0
    %3596 = vmatpush1.msra.mxu0 %v3570
    %3597 = vmatprep.subr.mxu0 0.0
    %3598 = vmatpush1.msra.mxu0 %v3571
    %3599 = vmatprep.subr.mxu0 0.0
    %3600 = vmatpush1.msra.mxu0 %v3572
    %3601 = vmatprep.subr.mxu0 0.0
    %3602 = vmatpush1.msra.mxu0 %v3573
    %3603 = vmatprep.subr.mxu0 0.0
    %3604 = vmatpush1.msra.mxu0 %v3574
    %3605 = vmatprep.subr.mxu0 0.0
    %3606 = vmatpush1.msra.mxu0 %v3575
    %3607 = vmatprep.subr.mxu0 0.0
    %3608 = vmatpush1.msra.mxu0 %v3576
    %3609 = vmatprep.subr.mxu0 0.0
    %3610 = vmatpush1.msra.mxu0 %v3577
    %3611 = vmatprep.subr.mxu0 0.0
    %3612 = vmatpush1.msra.mxu0 %v3578
    %3613 = vmatprep.subr.mxu0 0.0
    %3614 = vmatpush1.msra.mxu0 %v3579
    %3615 = vmatprep.subr.mxu0 0.0
    %3616 = vmatpush1.msra.mxu0 %v3580
    %3617 = vmatprep.subr.mxu0 0.0
    %3618 = vmatpush1.msra.mxu0 %v3581
    %3619 = vmatprep.subr.mxu0 0.0
    %3620 = vmatpush1.msra.mxu0 0.0
    %3621 = vmatprep.subr.mxu0 0.0
    %3622 = vmatpush1.msra.mxu0 0.0
    %3623 = vmatprep.subr.mxu0 0.0
    %3624 = vmatpush1.msra.mxu0 0.0
    %3625 = vmatprep.subr.mxu0 0.0
    %3626 = vmatpush1.msra.mxu0 0.0
    %3627 = vmatprep.subr.mxu0 0.0
    %3628 = vmatpush1.msra.mxu0 0.0
    %3629 = vmatprep.subr.mxu0 0.0
    %3630 = vmatpush1.msra.mxu0 0.0
    %3631 = vmatprep.subr.mxu0 0.0
    %3632 = vmatpush1.msra.mxu0 0.0
    %3633 = vmatprep.subr.mxu0 0.0
    %3634 = vmatpush1.msra.mxu0 0.0
    %3635 = vmatprep.subr.mxu0 0.0
    %3636 = vmatpush1.msra.mxu0 0.0
    %3637 = vmatprep.subr.mxu0 0.0
    %3638 = vmatpush1.msra.mxu0 0.0
    %3639 = vmatprep.subr.mxu0 0.0
    %3640 = vmatpush1.msra.mxu0 0.0
    %3641 = vmatprep.subr.mxu0 0.0
    %3642 = vmatpush1.msra.mxu0 0.0
    %3643 = vmatprep.subr.mxu0 0.0
    %3644 = vmatpush1.msra.mxu0 0.0
    %3645 = vmatprep.subr.mxu0 0.0
    %3646 = vmatpush1.msra.mxu0 0.0
    %3647 = vmatprep.subr.mxu0 0.0
    %3648 = vmatpush1.msra.mxu0 0.0
    %3649 = vmatprep.subr.mxu0 0.0
    %3650 = vmatpush1.msra.mxu0 0.0
    %3651 = vmatprep.mubr.f32.mxu0 0.0
    %3652 = vmatmul.mubr.f32.gmra.mrb[0].mxu0 %v3561
    %v3653 = vpop.f32.mrb[0].mxu0
    %v3654 = vadd.f32 %v3586, %v3653
    %v3655 = vpop.f32.mrb[0].mxu0
    %3656 = vmatprep.mubr.f32.mxu0 0.0
    %3657 = vmatmul.mubr.f32.gmra.mrb[0].mxu0 %v3562
    %v3658 = vpop.f32.mrb[0].mxu0
    %v3659 = vadd.f32 %v3586, %v3658
    %v3660 = vpop.f32.mrb[0].mxu0
    %3661 = vmatprep.mubr.f32.mxu0 0.0
    %3662 = vmatmul.mubr.f32.gmra.mrb[0].mxu0 %v3563
    %v3663 = vpop.f32.mrb[0].mxu0
    %v3664 = vadd.f32 %v3586, %v3663
    %v3665 = vpop.f32.mrb[0].mxu0
    %3666 = vmatprep.mubr.f32.mxu0 0.0
    %3667 = vmatmul.mubr.f32.gmra.mrb[0].mxu0 %v3564
    %v3668 = vpop.f32.mrb[0].mxu0
    %v3669 = vadd.f32 %v3586, %v3668
    %v3670 = vpop.f32.mrb[0].mxu0
    %3671 = vmatprep.mubr.f32.mxu0 0.0
    %3672 = vmatmul.mubr.f32.gmra.mrb[0].mxu0 %v3565
    %v3673 = vpop.f32.mrb[0].mxu0
    %v3674 = vadd.f32 %v3586, %v3673
    %v3675 = vpop.f32.mrb[0].mxu0
    %3676 = vdwg.mxu0
    %v3677 = vmax.f32 %v3654, 0.0
    %v3678 = vmax.f32 %v3659, 0.0
    %v3679 = vmax.f32 %v3664, 0.0
    %v3680 = vmax.f32 %v3669, 0.0
    %v3681 = vmax.f32 %v3674, 0.0
    %v3683 = vrot.slane %v3677, 2
    %v3685 = vadd.f32 %v3677, %v3683
    %v3686 = vrot.slane %v3677, 4
    %v3688 = vadd.f32 %v3685, %v3686
    %v3689 = vrot.slane %v3677, 6
    %v3691 = vadd.f32 %v3688, %v3689
    %v3692 = vadd.f32 %v3691, %v3678
    %v3694 = vrot.slane %v3678, 2
    %v3696 = vadd.f32 %v3692, %v3694
    %v3697 = vrot.slane %v3678, 4
    %v3699 = vadd.f32 %v3696, %v3697
    %v3700 = vrot.slane %v3678, 6
    %v3702 = vadd.f32 %v3699, %v3700
    %v3703 = vadd.f32 %v3702, %v3679
    %v3705 = vrot.slane %v3679, 2
    %v3707 = vadd.f32 %v3703, %v3705
    %v3708 = vrot.slane %v3679, 4
    %v3710 = vadd.f32 %v3707, %v3708
    %v3711 = vrot.slane %v3679, 6
    %v3713 = vadd.f32 %v3710, %v3711
    %v3714 = vadd.f32 %v3713, %v3680
    %v3716 = vrot.slane %v3680, 2
    %v3718 = vadd.f32 %v3714, %v3716
    %v3719 = vrot.slane %v3680, 4
    %v3721 = vadd.f32 %v3718, %v3719
    %v3722 = vrot.slane %v3680, 6
    %v3724 = vadd.f32 %v3721, %v3722
    %v3725 = vmul.f32 %v3724, 0.0625
    %v3727 = vrot.slane %v3725, 6
    %vm3729 = vcmask 1041408
    %v3730 = vsel %vm3729, %v3681, %v3727
    %v3731 = vld [vmem:[#allocation4 + $0x200] sm:$0xff]
    %v3732 = vld [vmem:[#allocation4 + $0x208] sm:$0xff]
    %v3733 = vld [vmem:[#allocation4 + $0x210] sm:$0xff]
    %v3734 = vld [vmem:[#allocation4 + $0x218] sm:$0xff]
    %v3735 = vld [vmem:[#allocation4 + $0x220] sm:$0xff]
    %v3736 = vld [vmem:[#allocation4 + $0x228] sm:$0xff]
    %v3737 = vld [vmem:[#allocation4 + $0x230] sm:$0xff]
    %v3738 = vld [vmem:[#allocation4 + $0x238] sm:$0xff]
    %v3739 = vld [vmem:[#allocation4 + $0x240] sm:$0xff]
    %v3740 = vld [vmem:[#allocation4 + $0x248] sm:$0xff]
    %v3741 = vld [vmem:[#allocation4 + $0x250] sm:$0xff]
    %v3742 = vld [vmem:[#allocation4 + $0x258] sm:$0xff]
    %v3743 = vld [vmem:[#allocation4 + $0x260] sm:$0xff]
    %v3744 = vld [vmem:[#allocation4 + $0x268] sm:$0xff]
    %v3745 = vld [vmem:[#allocation4 + $0x270] sm:$0xff]
    %v3746 = vld [vmem:[#allocation4 + $0x278] sm:$0xff]
    %v3747 = vld [vmem:[%s3 + $0x6] sm:$0x1]
    %v3748 = vlaneseq
    %v3749 = vshrl.u32 %v3748, 7
    %v3750 = vsub.s32 0, %v3749
    %v3751 = vrot.slane %v3747, %v3750
    %3752 = vmatprep.subr.mxu0 0.0
    %3753 = vmatpush1.msra.mxu0 %v3731
    %3754 = vmatprep.subr.mxu0 0.0
    %3755 = vmatpush1.msra.mxu0 %v3732
    %3756 = vmatprep.subr.mxu0 0.0
    %3757 = vmatpush1.msra.mxu0 %v3733
    %3758 = vmatprep.subr.mxu0 0.0
    %3759 = vmatpush1.msra.mxu0 %v3734
    %3760 = vmatprep.subr.mxu0 0.0
    %3761 = vmatpush1.msra.mxu0 %v3735
    %3762 = vmatprep.subr.mxu0 0.0
    %3763 = vmatpush1.msra.mxu0 %v3736
    %3764 = vmatprep.subr.mxu0 0.0
    %3765 = vmatpush1.msra.mxu0 %v3737
    %3766 = vmatprep.subr.mxu0 0.0
    %3767 = vmatpush1.msra.mxu0 %v3738
    %3768 = vmatprep.subr.mxu0 0.0
    %3769 = vmatpush1.msra.mxu0 %v3739
    %3770 = vmatprep.subr.mxu0 0.0
    %3771 = vmatpush1.msra.mxu0 %v3740
    %3772 = vmatprep.subr.mxu0 0.0
    %3773 = vmatpush1.msra.mxu0 %v3741
    %3774 = vmatprep.subr.mxu0 0.0
    %3775 = vmatpush1.msra.mxu0 %v3742
    %3776 = vmatprep.subr.mxu0 0.0
    %3777 = vmatpush1.msra.mxu0 %v3743
    %3778 = vmatprep.subr.mxu0 0.0
    %3779 = vmatpush1.msra.mxu0 %v3744
    %3780 = vmatprep.subr.mxu0 0.0
    %3781 = vmatpush1.msra.mxu0 %v3745
    %3782 = vmatprep.subr.mxu0 0.0
    %3783 = vmatpush1.msra.mxu0 %v3746
    %3784 = vmatprep.subr.mxu0 0.0
    %3785 = vmatpush1.msra.mxu0 0.0
    %3786 = vmatprep.subr.mxu0 0.0
    %3787 = vmatpush1.msra.mxu0 0.0
    %3788 = vmatprep.subr.mxu0 0.0
    %3789 = vmatpush1.msra.mxu0 0.0
    %3790 = vmatprep.subr.mxu0 0.0
    %3791 = vmatpush1.msra.mxu0 0.0
    %3792 = vmatprep.subr.mxu0 0.0
    %3793 = vmatpush1.msra.mxu0 0.0
    %3794 = vmatprep.subr.mxu0 0.0
    %3795 = vmatpush1.msra.mxu0 0.0
    %3796 = vmatprep.subr.mxu0 0.0
    %3797 = vmatpush1.msra.mxu0 0.0
    %3798 = vmatprep.subr.mxu0 0.0
    %3799 = vmatpush1.msra.mxu0 0.0
    %3800 = vmatprep.subr.mxu0 0.0
    %3801 = vmatpush1.msra.mxu0 0.0
    %3802 = vmatprep.subr.mxu0 0.0
    %3803 = vmatpush1.msra.mxu0 0.0
    %3804 = vmatprep.subr.mxu0 0.0
    %3805 = vmatpush1.msra.mxu0 0.0
    %3806 = vmatprep.subr.mxu0 0.0
    %3807 = vmatpush1.msra.mxu0 0.0
    %3808 = vmatprep.subr.mxu0 0.0
    %3809 = vmatpush1.msra.mxu0 0.0
    %3810 = vmatprep.subr.mxu0 0.0
    %3811 = vmatpush1.msra.mxu0 0.0
    %3812 = vmatprep.subr.mxu0 0.0
    %3813 = vmatpush1.msra.mxu0 0.0
    %3814 = vmatprep.subr.mxu0 0.0
    %3815 = vmatpush1.msra.mxu0 0.0
    %3816 = vmatprep.mubr.f32.mxu0 0.0
    %3817 = vmatmul.mubr.f32.gmra.mrb[0].mxu0 %v3730
    %v3818 = vpop.f32.mrb[0].mxu0
    %v3819 = vadd.f32 %v3751, %v3818
    %v3820 = vpop.f32.mrb[0].mxu0
    %3821 = vdwg.mxu0
    %v3822 = vld [vmem:[#allocation4 + $0x280] sm:$0xff]
    %v3823 = vld [vmem:[#allocation4 + $0x288] sm:$0xff]
    %v3824 = vld [vmem:[#allocation4 + $0x290] sm:$0xff]
    %v3825 = vld [vmem:[#allocation4 + $0x298] sm:$0xff]
    %v3826 = vld [vmem:[#allocation4 + $0x2a0] sm:$0xff]
    %v3827 = vld [vmem:[#allocation4 + $0x2a8] sm:$0xff]
    %v3828 = vld [vmem:[#allocation4 + $0x2b0] sm:$0xff]
    %v3829 = vld [vmem:[#allocation4 + $0x2b8] sm:$0xff]
    %v3830 = vld [vmem:[#allocation4 + $0x2c0] sm:$0xff]
    %v3831 = vld [vmem:[#allocation4 + $0x2c8] sm:$0xff]
    %v3832 = vld [vmem:[#allocation4 + $0x2d0] sm:$0xff]
    %v3833 = vld [vmem:[#allocation4 + $0x2d8] sm:$0xff]
    %v3834 = vld [vmem:[#allocation4 + $0x2e0] sm:$0xff]
    %v3835 = vld [vmem:[#allocation4 + $0x2e8] sm:$0xff]
    %v3836 = vld [vmem:[#allocation4 + $0x2f0] sm:$0xff]
    %v3837 = vld [vmem:[#allocation4 + $0x2f8] sm:$0xff]
    %v3838 = vld [vmem:[%s3 + $0x7] sm:$0x1]
    %v3839 = vlaneseq
    %v3840 = vshrl.u32 %v3839, 7
    %v3841 = vsub.s32 0, %v3840
    %v3842 = vrot.slane %v3838, %v3841
    %3843 = vmatprep.subr.mxu0 0.0
    %3844 = vmatpush1.msra.mxu0 %v3822
    %3845 = vmatprep.subr.mxu0 0.0
    %3846 = vmatpush1.msra.mxu0 %v3823
    %3847 = vmatprep.subr.mxu0 0.0
    %3848 = vmatpush1.msra.mxu0 %v3824
    %3849 = vmatprep.subr.mxu0 0.0
    %3850 = vmatpush1.msra.mxu0 %v3825
    %3851 = vmatprep.subr.mxu0 0.0
    %3852 = vmatpush1.msra.mxu0 %v3826
    %3853 = vmatprep.subr.mxu0 0.0
    %3854 = vmatpush1.msra.mxu0 %v3827
    %3855 = vmatprep.subr.mxu0 0.0
    %3856 = vmatpush1.msra.mxu0 %v3828
    %3857 = vmatprep.subr.mxu0 0.0
    %3858 = vmatpush1.msra.mxu0 %v3829
    %3859 = vmatprep.subr.mxu0 0.0
    %3860 = vmatpush1.msra.mxu0 %v3830
    %3861 = vmatprep.subr.mxu0 0.0
    %3862 = vmatpush1.msra.mxu0 %v3831
    %3863 = vmatprep.subr.mxu0 0.0
    %3864 = vmatpush1.msra.mxu0 %v3832
    %3865 = vmatprep.subr.mxu0 0.0
    %3866 = vmatpush1.msra.mxu0 %v3833
    %3867 = vmatprep.subr.mxu0 0.0
    %3868 = vmatpush1.msra.mxu0 %v3834
    %3869 = vmatprep.subr.mxu0 0.0
    %3870 = vmatpush1.msra.mxu0 %v3835
    %3871 = vmatprep.subr.mxu0 0.0
    %3872 = vmatpush1.msra.mxu0 %v3836
    %3873 = vmatprep.subr.mxu0 0.0
    %3874 = vmatpush1.msra.mxu0 %v3837
    %3875 = vmatprep.subr.mxu0 0.0
    %3876 = vmatpush1.msra.mxu0 0.0
    %3877 = vmatprep.subr.mxu0 0.0
    %3878 = vmatpush1.msra.mxu0 0.0
    %3879 = vmatprep.subr.mxu0 0.0
    %3880 = vmatpush1.msra.mxu0 0.0
    %3881 = vmatprep.subr.mxu0 0.0
    %3882 = vmatpush1.msra.mxu0 0.0
    %3883 = vmatprep.subr.mxu0 0.0
    %3884 = vmatpush1.msra.mxu0 0.0
    %3885 = vmatprep.subr.mxu0 0.0
    %3886 = vmatpush1.msra.mxu0 0.0
    %3887 = vmatprep.subr.mxu0 0.0
    %3888 = vmatpush1.msra.mxu0 0.0
    %3889 = vmatprep.subr.mxu0 0.0
    %3890 = vmatpush1.msra.mxu0 0.0
    %3891 = vmatprep.subr.mxu0 0.0
    %3892 = vmatpush1.msra.mxu0 0.0
    %3893 = vmatprep.subr.mxu0 0.0
    %3894 = vmatpush1.msra.mxu0 0.0
    %3895 = vmatprep.subr.mxu0 0.0
    %3896 = vmatpush1.msra.mxu0 0.0
    %3897 = vmatprep.subr.mxu0 0.0
    %3898 = vmatpush1.msra.mxu0 0.0
    %3899 = vmatprep.subr.mxu0 0.0
    %3900 = vmatpush1.msra.mxu0 0.0
    %3901 = vmatprep.subr.mxu0 0.0
    %3902 = vmatpush1.msra.mxu0 0.0
    %3903 = vmatprep.subr.mxu0 0.0
    %3904 = vmatpush1.msra.mxu0 0.0
    %3905 = vmatprep.subr.mxu0 0.0
    %3906 = vmatpush1.msra.mxu0 0.0
    %3907 = vmatprep.mubr.f32.mxu0 0.0
    %3908 = vmatmul.mubr.f32.gmra.mrb[0].mxu0 %v3730
    %v3909 = vpop.f32.mrb[0].mxu0
    %v3910 = vadd.f32 %v3842, %v3909
    %v3911 = vpop.f32.mrb[0].mxu0
    %3912 = vdwg.mxu0
    %v3914 = vrot.slane %v3910, 4
    %vm3916 = vcmask 1043456
    %v3917 = vsel %vm3916, %v3819, %v3914
    %3918 = vst [vmem:[%s5] sm:$0xff] %v3917
    // Predicated region
    $region26: #{rnn_encoder_forward.3} parent=1 // pred_check
      _
    $region27: #{rnn_encoder_forward.3} parent=1 // pred_check_branch
      %3920 = sbr.rel (0) target = $region29
    $region28: #{rnn_encoder_forward.3} parent=1 // pred_region
      _
    $region29: #{rnn_encoder_forward.3} parent=1 // pred_fallthru
      _
    // Predicated region
    $region30: #{rnn_encoder_forward.3} parent=1 // pred_check
      _
    $region31: #{rnn_encoder_forward.3} parent=1 // pred_check_branch
      %3922 = sbr.rel (0) target = $region33
    $region32: #{rnn_encoder_forward.3} parent=1 // pred_region
      _
    $region33: #{rnn_encoder_forward.3} parent=1 // pred_fallthru
      _
    // Predicated region
    $region34: #{rnn_encoder_forward.3} parent=1 // pred_check
      _
    $region35: #{rnn_encoder_forward.3} parent=1 // pred_check_branch
      %3924 = sbr.rel (0) target = $region37
    $region36: #{rnn_encoder_forward.3} parent=1 // pred_region
      _
    $region37: #{rnn_encoder_forward.3} parent=1 // pred_fallthru
      _
    // Predicated region
    $region38: #{rnn_encoder_forward.3} parent=1 // pred_check
      _
    $region39: #{rnn_encoder_forward.3} parent=1 // pred_check_branch
      %3926 = sbr.rel (0) target = $region41
    $region40: #{rnn_encoder_forward.3} parent=1 // pred_region
      _
    $region41: #{rnn_encoder_forward.3} parent=1 // pred_fallthru
      _
    %3927 = vsyncpa [#allocation5], 1
    %3928 = vsyncpa [#allocation7], 1

</llo_original>
